<compile_context>
chip_gen: v5e
topology: v5e:2x2
jax: 0.10.0
libtpu: 0.0.40
codegen_flags: <defaults>
</compile_context>

<pallas_src>
import functools

import jax
import jax.numpy as jnp
from jax.experimental import pallas as pl
from jax.experimental.pallas import tpu as pltpu

NEG_SLOPE = 0.2
BN_EPS = 1e-5
DRIB_DILATIONS = (8, 4, 2)


def _const_map(ndim):
    return lambda b: (0,) * ndim


# --------------------------------------------------------------------------
# Pallas kernels
# --------------------------------------------------------------------------
def _encoder_stage_kernel(*refs, n_layers, enc_ks, stride, drib_k, dils,
                          neg_slope):
    """One full EncoderBlock for one batch element.

    refs = (x_ph, enc_w, enc_scale, enc_shift,
            [w1, s1, t1, w2, s2, t2, w4, s4, t4] * n_layers,
            o_ref)
    x_ph: (1, stride, Lps, Cin) bf16  -- polyphase, pre-padded input
    enc_w: (enc_ks, Cin, Cout) bf16; enc_scale/shift: (1, Cout) f32
    o_ref: (1, L_out, Cout) bf16
    """
    x_ref, ew_ref, es_ref, et_ref = refs[:4]
    drib_refs = refs[4:4 + 9 * n_layers]
    o_ref = refs[4 + 9 * n_layers]

    L_out, cout = o_ref.shape[1], o_ref.shape[2]
    oc = cout // 4

    def lrelu(v):
        return jnp.where(v >= 0, v, neg_slope * v)

    # ---- strided Conv1d + folded BN + LeakyReLU (polyphase taps) ----------
    acc = jnp.zeros((L_out, cout), jnp.float32)
    for k in range(enc_ks):
        r, q = k % stride, k // stride
        acc = acc + jnp.dot(x_ref[0, r, q:q + L_out, :], ew_ref[k],
                            preferred_element_type=jnp.float32)
    h = lrelu(acc * es_ref[...] + et_ref[...])          # (L_out, cout) f32

    # ---- DilatedResidualInceptionBlock(s), fully resident in VMEM ---------
    for layer in range(n_layers):
        w1, s1, t1, w2, s2, t2, w4, s4, t4 = drib_refs[9 * layer:9 * layer + 9]
        h_bf = h.astype(jnp.bfloat16)
        branches = []
        for i, dil in enumerate(dils):
            # 1x1 reduce conv + BN + LeakyReLU
            b = lrelu(jnp.dot(h_bf, w1[i], preferred_element_type=jnp.float32)
                      * s1[i] + t1[i])                  # (L_out, oc) f32
            # dilated conv, 'same' padding built in-register, + BN
            total = dil * (drib_k - 1)
            pad_l, pad_r = total // 2, total - total // 2
            pieces = []
            if pad_l:
                pieces.append(jnp.zeros((pad_l, oc), jnp.float32))
            pieces.append(b)
            if pad_r:
                pieces.append(jnp.zeros((pad_r, oc), jnp.float32))
            bp = pieces[0] if len(pieces) == 1 else jnp.concatenate(pieces, axis=0)
            accb = jnp.zeros((L_out, oc), jnp.float32)
            for k in range(drib_k):
                tap = bp[k * dil:k * dil + L_out, :].astype(jnp.bfloat16)
                accb = accb + jnp.dot(tap, w2[i, k],
                                      preferred_element_type=jnp.float32)
            branches.append(accb * s2[i] + t2[i])
        # simple 1x1 branch + BN
        branches.append(jnp.dot(h_bf, w4[...], preferred_element_type=jnp.float32)
                        * s4[...] + t4[...])
        # channel concat + residual + LeakyReLU (no HBM round trip)
        h = lrelu(jnp.concatenate(branches, axis=-1) + h)

    o_ref[0] = h.astype(o_ref.dtype)


def _fc_head_kernel(x_ref, w1_ref, s1_ref, t1_ref, w2_ref, s2_ref, t2_ref,
                    wl_ref, bl_ref, o_ref, *, neg_slope):
    """Fused Linear+BN+LeakyReLU x2 + logits Linear (whole batch at once)."""
    def lrelu(v):
        return jnp.where(v >= 0, v, neg_slope * v)

    h = jnp.dot(x_ref[...], w1_ref[...], preferred_element_type=jnp.float32)
    h = lrelu(h * s1_ref[...] + t1_ref[...])
    h = jnp.dot(h.astype(jnp.bfloat16), w2_ref[...],
                preferred_element_type=jnp.float32)
    h = lrelu(h * s2_ref[...] + t2_ref[...])
    o = jnp.dot(h.astype(jnp.bfloat16), wl_ref[...],
                preferred_element_type=jnp.float32) + bl_ref[...]
    o_ref[...] = o.astype(o_ref.dtype)


# --------------------------------------------------------------------------
# BatchNorm folding (eval mode)
# --------------------------------------------------------------------------
def fold_bn(bias, bn, eps=BN_EPS):
    scale = bn['gamma'] / jnp.sqrt(bn['var'] + eps)
    shift = (bias - bn['mean']) * scale + bn['beta']
    return scale, shift


# --------------------------------------------------------------------------
# Wrappers around pallas_call
# --------------------------------------------------------------------------
def encoder_stage(x, ep, *, drib_k, neg_slope=NEG_SLOPE):
    """One EncoderBlock: strided conv + BN + LReLU + `layers` DRIB blocks.

    x: (B, L, Cin) (any float dtype, cast to bf16 inside).
    Returns (B, L_out, Cout) bf16."""
    B, L, Cin = x.shape
    ks, stride, pad = ep['ks'], ep['stride'], ep['pad']
    Cout = ep['conv']['w'].shape[-1]
    oc = Cout // 4

    # Pad ONCE per stage, then de-interleave into `stride` phases so that
    # every in-kernel tap read is a contiguous static slice.
    Lp = L + 2 * pad
    L_out = (Lp - ks) // stride + 1
    extra = (-Lp) % stride
    x_pad = jnp.pad(x, ((0, 0), (pad, pad + extra), (0, 0)))
    Lps = (Lp + extra) // stride
    x_ph = x_pad.reshape(B, Lps, stride, Cin).transpose(0, 2, 1, 3)
    x_ph = x_ph.astype(jnp.bfloat16)                    # (B, stride, Lps, Cin)

    ew = ep['conv']['w'].astype(jnp.bfloat16)           # (ks, Cin, Cout)
    es, et = fold_bn(ep['conv']['b'], ep['bn'])
    es, et = es.reshape(1, Cout), et.reshape(1, Cout)

    drib_arrays, drib_specs = [], []
    for dp in ep['dribs']:
        s1, t1 = fold_bn(dp['b1'], dp['bn1'])           # (3, oc)
        s2, t2 = fold_bn(dp['b2'], dp['bn2'])           # (3, oc)
        s4, t4 = fold_bn(dp['b4'], dp['bn4'])           # (oc,)
        arrs = [dp['w1'].astype(jnp.bfloat16),
                s1.reshape(3, 1, oc), t1.reshape(3, 1, oc),
                dp['w2'].astype(jnp.bfloat16),
                s2.reshape(3, 1, oc), t2.reshape(3, 1, oc),
                dp['w4'].astype(jnp.bfloat16),
                s4.reshape(1, oc), t4.reshape(1, oc)]
        drib_arrays += arrs
        drib_specs += [pl.BlockSpec(a.shape, _const_map(a.ndim)) for a in arrs]

    kernel = functools.partial(
        _encoder_stage_kernel, n_layers=len(ep['dribs']), enc_ks=ks,
        stride=stride, drib_k=drib_k, dils=DRIB_DILATIONS, neg_slope=neg_slope)

    return pl.pallas_call(
        kernel,
        out_shape=jax.ShapeDtypeStruct((B, L_out, Cout), jnp.bfloat16),
        grid=(B,),
        in_specs=[
            pl.BlockSpec((1, stride, Lps, Cin), lambda b: (b, 0, 0, 0)),
            pl.BlockSpec(ew.shape, _const_map(3)),
            pl.BlockSpec((1, Cout), _const_map(2)),
            pl.BlockSpec((1, Cout), _const_map(2)),
        ] + drib_specs,
        out_specs=pl.BlockSpec((1, L_out, Cout), lambda b: (b, 0, 0)),
        compiler_params=pltpu.CompilerParams(dimension_semantics=("parallel",)),
    )(x_ph, ew, es, et, *drib_arrays)


def fc_head(x_flat, fp, *, neg_slope=NEG_SLOPE):
    """Flattened features -> fc (Linear+BN+LReLU x2) -> logits Linear."""
    B, F = x_flat.shape
    nclass = fp['logits']['w'].shape[-1]
    s1, t1 = fold_bn(fp['fc1']['b'], fp['bn1'])
    s2, t2 = fold_bn(fp['fc2']['b'], fp['bn2'])
    return pl.pallas_call(
        functools.partial(_fc_head_kernel, neg_slope=neg_slope),
        out_shape=jax.ShapeDtypeStruct((B, nclass), jnp.float32),
    )(x_flat.astype(jnp.bfloat16),
      fp['fc1']['w'].astype(jnp.bfloat16), s1.reshape(1, F), t1.reshape(1, F),
      fp['fc2']['w'].astype(jnp.bfloat16), s2.reshape(1, F), t2.reshape(1, F),
      fp['logits']['w'].astype(jnp.bfloat16), fp['logits']['b'].reshape(1, nclass))


# --------------------------------------------------------------------------
# Parameter construction (deterministic, synthetic)
# --------------------------------------------------------------------------
def init_conv(key, cin, cout, k):
    kw, kb = jax.random.split(key)
    std = (2.0 / (cin * k)) ** 0.5
    return {'w': std * jax.random.normal(kw, (k, cin, cout), jnp.float32),
            'b': 0.01 * jax.random.normal(kb, (cout,), jnp.float32)}


def init_linear(key, fin, fout):
    kw, kb = jax.random.split(key)
    std = (2.0 / fin) ** 0.5
    return {'w': std * jax.random.normal(kw, (fin, fout), jnp.float32),
            'b': 0.01 * jax.random.normal(kb, (fout,), jnp.float32)}


def init_bn(shape):
    return {'gamma': jnp.ones(shape, jnp.float32),
            'beta': jnp.zeros(shape, jnp.float32),
            'mean': jnp.zeros(shape, jnp.float32),
            'var': jnp.ones(shape, jnp.float32)}


def init_drib(key, c, kernel_size):
    oc = c // 4
    ks = jax.random.split(key, 6)

    def w(k, shape, fan):
        return ((2.0 / fan) ** 0.5) * jax.random.normal(k, shape, jnp.float32)

    return {
        # three dilated branches (dilation 8, 4, 2), stacked along axis 0
        'w1': w(ks[0], (3, c, oc), c),
        'b1': 0.01 * jax.random.normal(ks[1], (3, oc), jnp.float32),
        'bn1': init_bn((3, oc)),
        'w2': w(ks[2], (3, kernel_size, oc, oc), oc * kernel_size),
        'b2': 0.01 * jax.random.normal(ks[3], (3, oc), jnp.float32),
        'bn2': init_bn((3, oc)),
        # simple 1x1 branch
        'w4': w(ks[4], (c, oc), c),
        'b4': 0.01 * jax.random.normal(ks[5], (oc,), jnp.float32),
        'bn4': init_bn((oc,)),
    }


def build_params(key, *, nclass=5, in_size=32, in_chans=1, max_channels=512,
                 depth=3, kernel_size=4, layers=1, sampling_factor=2):
    keys = iter(jax.random.split(key, 128))
    nk = lambda: next(keys)

    # ----- encoder schedule (sampling_method='conv_stride') -----
    sched = [(in_chans, 4, 1)]                      # first block: out_chans=4, sf=1
    oc = 4
    for _ in range(depth - 1):
        ic, oc = (oc, oc * 2) if oc * 2 <= max_channels else (oc, oc)
        sched.append((ic, oc, sampling_factor))

    encoders = []
    for ic, oc_, sf in sched:
        diff = kernel_size - sf
        if diff % 2 == 0:
            ks, pad = kernel_size, diff // 2
        else:
            ks, pad = kernel_size + 1, (kernel_size + 1 - sf) // 2
        assert oc_ % 4 == 0, "DRIB residual requires channels divisible by 4"
        encoders.append({
            'conv': init_conv(nk(), ic, oc_, ks), 'bn': init_bn((oc_,)),
            'ks': ks, 'stride': sf, 'pad': pad,
            'dribs': [init_drib(nk(), oc_, kernel_size) for _ in range(layers)],
        })

    out_size = in_size // sampling_factor ** (depth - 1)
    assert out_size > 0
    feat = oc * out_size
    fc = {'fc1': init_linear(nk(), feat, feat), 'bn1': init_bn((feat,)),
          'fc2': init_linear(nk(), feat, feat), 'bn2': init_bn((feat,)),
          'logits': init_linear(nk(), feat, nclass)}
    return {'encoders': encoders, 'fc': fc, 'kernel_size': kernel_size}


# --------------------------------------------------------------------------
# Model forward (matches ResIncNet.forward)
# --------------------------------------------------------------------------
def resincnet_forward(params, x_ncl):
    drib_k = params['kernel_size']
    x = jnp.transpose(x_ncl, (0, 2, 1)).astype(jnp.bfloat16)   # NCL -> NLC
    for ep in params['encoders']:
        x = encoder_stage(x, ep, drib_k=drib_k)
    # nn.Flatten(start_dim=1) on the PyTorch (B, C, L) layout => channel-major
    B, L, C = x.shape
    x_flat = jnp.transpose(x, (0, 2, 1)).reshape(B, C * L)
    return fc_head(x_flat, params['fc'])                        # (B, nclass) f32


# --------------------------------------------------------------------------
if __name__ == "__main__":
    key = jax.random.PRNGKey(0)
    pkey, xkey = jax.random.split(key)

    # Small config consistent with the module: nclass=5, in_size=32, in_chans=1,
    # max_channels=512, depth=3, kernel_size=4, layers=1, sampling_factor=2.
    NCLASS, IN_SIZE, DEPTH, SF = 5, 32, 3, 2
    params = build_params(pkey, nclass=NCLASS, in_size=IN_SIZE, in_chans=1,
                          max_channels=512, depth=DEPTH, kernel_size=4,
                          layers=1, sampling_factor=SF)

    # PyTorch-style input (B, C, L) = (2, 1, 32); L divisible by 2^(depth-1).
    x = jax.random.normal(xkey, (2, 1, IN_SIZE), jnp.float32)

    fwd = jax.jit(lambda inp: resincnet_forward(params, inp))
    out = fwd(x)
    jax.block_until_ready(out)
    assert out.shape == (2, NCLASS), out.shape
    assert jnp.all(jnp.isfinite(out))
    print("KERNEL_OK")
</pallas_src>

<mosaic_0001>
module attributes {stable_mosaic.version = 11 : i64} {
  func.func @_encoder_stage_kernel(%arg0: i32, %arg1: memref<1x1x36x1xbf16, #tpu.memory_space<vmem>>, %arg2: memref<5x1x4xbf16, #tpu.memory_space<vmem>>, %arg3: memref<1x4xf32, #tpu.memory_space<vmem>>, %arg4: memref<1x4xf32, #tpu.memory_space<vmem>>, %arg5: memref<3x4x1xbf16, #tpu.memory_space<vmem>>, %arg6: memref<3x1x1xf32, #tpu.memory_space<vmem>>, %arg7: memref<3x1x1xf32, #tpu.memory_space<vmem>>, %arg8: memref<3x4x1x1xbf16, #tpu.memory_space<vmem>>, %arg9: memref<3x1x1xf32, #tpu.memory_space<vmem>>, %arg10: memref<3x1x1xf32, #tpu.memory_space<vmem>>, %arg11: memref<4x1xbf16, #tpu.memory_space<vmem>>, %arg12: memref<1x1xf32, #tpu.memory_space<vmem>>, %arg13: memref<1x1xf32, #tpu.memory_space<vmem>>, %arg14: memref<1x32x4xbf16, #tpu.memory_space<vmem>>) attributes {dimension_semantics = [#tpu.dimension_semantics<parallel>], iteration_bounds = array<i64: 2>, scalar_prefetch = 0 : i64, scratch_operands = 0 : i64, tpu.core_type = #tpu.core_type<tc>, window_params = [{transform_indices = @transform_0, window_bounds = array<i64: 1, 1, 36, 1>}, {pipeline_mode = #tpu.pipeline_mode<synchronous>, transform_indices = @transform_1, window_bounds = array<i64: 5, 1, 4>}, {pipeline_mode = #tpu.pipeline_mode<synchronous>, transform_indices = @transform_2, window_bounds = array<i64: 1, 4>}, {pipeline_mode = #tpu.pipeline_mode<synchronous>, transform_indices = @transform_3, window_bounds = array<i64: 1, 4>}, {pipeline_mode = #tpu.pipeline_mode<synchronous>, transform_indices = @transform_4, window_bounds = array<i64: 3, 4, 1>}, {pipeline_mode = #tpu.pipeline_mode<synchronous>, transform_indices = @transform_5, window_bounds = array<i64: 3, 1, 1>}, {pipeline_mode = #tpu.pipeline_mode<synchronous>, transform_indices = @transform_6, window_bounds = array<i64: 3, 1, 1>}, {pipeline_mode = #tpu.pipeline_mode<synchronous>, transform_indices = @transform_7, window_bounds = array<i64: 3, 4, 1, 1>}, {pipeline_mode = #tpu.pipeline_mode<synchronous>, transform_indices = @transform_8, window_bounds = array<i64: 3, 1, 1>}, {pipeline_mode = #tpu.pipeline_mode<synchronous>, transform_indices = @transform_9, window_bounds = array<i64: 3, 1, 1>}, {pipeline_mode = #tpu.pipeline_mode<synchronous>, transform_indices = @transform_10, window_bounds = array<i64: 4, 1>}, {pipeline_mode = #tpu.pipeline_mode<synchronous>, transform_indices = @transform_11, window_bounds = array<i64: 1, 1>}, {pipeline_mode = #tpu.pipeline_mode<synchronous>, transform_indices = @transform_12, window_bounds = array<i64: 1, 1>}, {transform_indices = @transform_13, window_bounds = array<i64: 1, 32, 4>}]} {
    %cst = arith.constant 0.000000e+00 : f32
    %0 = vector.broadcast %cst : f32 to vector<32x4xf32>
    %c0 = arith.constant 0 : index
    %c0_0 = arith.constant 0 : index
    %c0_1 = arith.constant 0 : index
    %c0_2 = arith.constant 0 : index
    %1 = vector.load %arg1[%c0, %c0_0, %c0_1, %c0_2] : memref<1x1x36x1xbf16, #tpu.memory_space<vmem>>, vector<1x1x32x1xbf16>
    %2 = vector.shape_cast %1 : vector<1x1x32x1xbf16> to vector<32x1xbf16>
    %c0_3 = arith.constant 0 : index
    %c0_4 = arith.constant 0 : index
    %c0_5 = arith.constant 0 : index
    %3 = vector.load %arg2[%c0_3, %c0_4, %c0_5] : memref<5x1x4xbf16, #tpu.memory_space<vmem>>, vector<1x1x4xbf16>
    %4 = vector.shape_cast %3 : vector<1x1x4xbf16> to vector<1x4xbf16>
    %cst_6 = arith.constant dense<0.000000e+00> : vector<32x4xf32>
    %5 = tpu.matmul %2, %4, %cst_6 {dimension_numbers = #tpu.dot_dimension_numbers<[1], [0], [0], [1], [0, 0, 1, 1], [], []>} : vector<32x1xbf16>, vector<1x4xbf16>, vector<32x4xf32> -> vector<32x4xf32>
    %6 = arith.addf %0, %5 : vector<32x4xf32>
    %c0_7 = arith.constant 0 : index
    %c0_8 = arith.constant 0 : index
    %c1 = arith.constant 1 : index
    %c0_9 = arith.constant 0 : index
    %7 = vector.load %arg1[%c0_7, %c0_8, %c1, %c0_9] : memref<1x1x36x1xbf16, #tpu.memory_space<vmem>>, vector<1x1x32x1xbf16>
    %8 = vector.shape_cast %7 : vector<1x1x32x1xbf16> to vector<32x1xbf16>
    %c1_10 = arith.constant 1 : index
    %c0_11 = arith.constant 0 : index
    %c0_12 = arith.constant 0 : index
    %9 = vector.load %arg2[%c1_10, %c0_11, %c0_12] : memref<5x1x4xbf16, #tpu.memory_space<vmem>>, vector<1x1x4xbf16>
    %10 = vector.shape_cast %9 : vector<1x1x4xbf16> to vector<1x4xbf16>
    %cst_13 = arith.constant dense<0.000000e+00> : vector<32x4xf32>
    %11 = tpu.matmul %8, %10, %cst_13 {dimension_numbers = #tpu.dot_dimension_numbers<[1], [0], [0], [1], [0, 0, 1, 1], [], []>} : vector<32x1xbf16>, vector<1x4xbf16>, vector<32x4xf32> -> vector<32x4xf32>
    %12 = arith.addf %6, %11 : vector<32x4xf32>
    %c0_14 = arith.constant 0 : index
    %c0_15 = arith.constant 0 : index
    %c2 = arith.constant 2 : index
    %c0_16 = arith.constant 0 : index
    %13 = vector.load %arg1[%c0_14, %c0_15, %c2, %c0_16] : memref<1x1x36x1xbf16, #tpu.memory_space<vmem>>, vector<1x1x32x1xbf16>
    %14 = vector.shape_cast %13 : vector<1x1x32x1xbf16> to vector<32x1xbf16>
    %c2_17 = arith.constant 2 : index
    %c0_18 = arith.constant 0 : index
    %c0_19 = arith.constant 0 : index
    %15 = vector.load %arg2[%c2_17, %c0_18, %c0_19] : memref<5x1x4xbf16, #tpu.memory_space<vmem>>, vector<1x1x4xbf16>
    %16 = vector.shape_cast %15 : vector<1x1x4xbf16> to vector<1x4xbf16>
    %cst_20 = arith.constant dense<0.000000e+00> : vector<32x4xf32>
    %17 = tpu.matmul %14, %16, %cst_20 {dimension_numbers = #tpu.dot_dimension_numbers<[1], [0], [0], [1], [0, 0, 1, 1], [], []>} : vector<32x1xbf16>, vector<1x4xbf16>, vector<32x4xf32> -> vector<32x4xf32>
    %18 = arith.addf %12, %17 : vector<32x4xf32>
    %c0_21 = arith.constant 0 : index
    %c0_22 = arith.constant 0 : index
    %c3 = arith.constant 3 : index
    %c0_23 = arith.constant 0 : index
    %19 = vector.load %arg1[%c0_21, %c0_22, %c3, %c0_23] : memref<1x1x36x1xbf16, #tpu.memory_space<vmem>>, vector<1x1x32x1xbf16>
    %20 = vector.shape_cast %19 : vector<1x1x32x1xbf16> to vector<32x1xbf16>
    %c3_24 = arith.constant 3 : index
    %c0_25 = arith.constant 0 : index
    %c0_26 = arith.constant 0 : index
    %21 = vector.load %arg2[%c3_24, %c0_25, %c0_26] : memref<5x1x4xbf16, #tpu.memory_space<vmem>>, vector<1x1x4xbf16>
    %22 = vector.shape_cast %21 : vector<1x1x4xbf16> to vector<1x4xbf16>
    %cst_27 = arith.constant dense<0.000000e+00> : vector<32x4xf32>
    %23 = tpu.matmul %20, %22, %cst_27 {dimension_numbers = #tpu.dot_dimension_numbers<[1], [0], [0], [1], [0, 0, 1, 1], [], []>} : vector<32x1xbf16>, vector<1x4xbf16>, vector<32x4xf32> -> vector<32x4xf32>
    %24 = arith.addf %18, %23 : vector<32x4xf32>
    %c0_28 = arith.constant 0 : index
    %c0_29 = arith.constant 0 : index
    %c4 = arith.constant 4 : index
    %c0_30 = arith.constant 0 : index
    %25 = vector.load %arg1[%c0_28, %c0_29, %c4, %c0_30] : memref<1x1x36x1xbf16, #tpu.memory_space<vmem>>, vector<1x1x32x1xbf16>
    %26 = vector.shape_cast %25 : vector<1x1x32x1xbf16> to vector<32x1xbf16>
    %c4_31 = arith.constant 4 : index
    %c0_32 = arith.constant 0 : index
    %c0_33 = arith.constant 0 : index
    %27 = vector.load %arg2[%c4_31, %c0_32, %c0_33] : memref<5x1x4xbf16, #tpu.memory_space<vmem>>, vector<1x1x4xbf16>
    %28 = vector.shape_cast %27 : vector<1x1x4xbf16> to vector<1x4xbf16>
    %cst_34 = arith.constant dense<0.000000e+00> : vector<32x4xf32>
    %29 = tpu.matmul %26, %28, %cst_34 {dimension_numbers = #tpu.dot_dimension_numbers<[1], [0], [0], [1], [0, 0, 1, 1], [], []>} : vector<32x1xbf16>, vector<1x4xbf16>, vector<32x4xf32> -> vector<32x4xf32>
    %30 = arith.addf %24, %29 : vector<32x4xf32>
    %c0_35 = arith.constant 0 : index
    %c0_36 = arith.constant 0 : index
    %31 = vector.load %arg3[%c0_35, %c0_36] : memref<1x4xf32, #tpu.memory_space<vmem>>, vector<1x4xf32>
    %32 = vector.broadcast %31 : vector<1x4xf32> to vector<32x4xf32>
    %33 = arith.mulf %30, %32 : vector<32x4xf32>
    %c0_37 = arith.constant 0 : index
    %c0_38 = arith.constant 0 : index
    %34 = vector.load %arg4[%c0_37, %c0_38] : memref<1x4xf32, #tpu.memory_space<vmem>>, vector<1x4xf32>
    %35 = vector.broadcast %34 : vector<1x4xf32> to vector<32x4xf32>
    %36 = arith.addf %33, %35 : vector<32x4xf32>
    %cst_39 = arith.constant 0.000000e+00 : f32
    %37 = vector.broadcast %cst_39 : f32 to vector<32x4xf32>
    %38 = arith.cmpf oge, %36, %37 : vector<32x4xf32>
    %cst_40 = arith.constant 2.000000e-01 : f32
    %39 = vector.broadcast %cst_40 : f32 to vector<32x4xf32>
    %40 = arith.mulf %39, %36 : vector<32x4xf32>
    %41 = arith.select %38, %36, %40 : vector<32x4xi1>, vector<32x4xf32>
    %42 = arith.truncf %41 : vector<32x4xf32> to vector<32x4xbf16>
    %c0_41 = arith.constant 0 : index
    %c0_42 = arith.constant 0 : index
    %c0_43 = arith.constant 0 : index
    %43 = vector.load %arg5[%c0_41, %c0_42, %c0_43] : memref<3x4x1xbf16, #tpu.memory_space<vmem>>, vector<1x4x1xbf16>
    %44 = vector.shape_cast %43 : vector<1x4x1xbf16> to vector<4x1xbf16>
    %cst_44 = arith.constant dense<0.000000e+00> : vector<32x1xf32>
    %45 = tpu.matmul %42, %44, %cst_44 {dimension_numbers = #tpu.dot_dimension_numbers<[1], [0], [0], [1], [0, 0, 1, 1], [], []>} : vector<32x4xbf16>, vector<4x1xbf16>, vector<32x1xf32> -> vector<32x1xf32>
    %c0_45 = arith.constant 0 : index
    %c0_46 = arith.constant 0 : index
    %c0_47 = arith.constant 0 : index
    %46 = vector.load %arg6[%c0_45, %c0_46, %c0_47] : memref<3x1x1xf32, #tpu.memory_space<vmem>>, vector<1x1x1xf32>
    %47 = vector.shape_cast %46 : vector<1x1x1xf32> to vector<1x1xf32>
    %48 = vector.broadcast %47 : vector<1x1xf32> to vector<32x1xf32>
    %49 = arith.mulf %45, %48 : vector<32x1xf32>
    %c0_48 = arith.constant 0 : index
    %c0_49 = arith.constant 0 : index
    %c0_50 = arith.constant 0 : index
    %50 = vector.load %arg7[%c0_48, %c0_49, %c0_50] : memref<3x1x1xf32, #tpu.memory_space<vmem>>, vector<1x1x1xf32>
    %51 = vector.shape_cast %50 : vector<1x1x1xf32> to vector<1x1xf32>
    %52 = vector.broadcast %51 : vector<1x1xf32> to vector<32x1xf32>
    %53 = arith.addf %49, %52 : vector<32x1xf32>
    %cst_51 = arith.constant 0.000000e+00 : f32
    %54 = vector.broadcast %cst_51 : f32 to vector<32x1xf32>
    %55 = arith.cmpf oge, %53, %54 : vector<32x1xf32>
    %cst_52 = arith.constant 2.000000e-01 : f32
    %56 = vector.broadcast %cst_52 : f32 to vector<32x1xf32>
    %57 = arith.mulf %56, %53 : vector<32x1xf32>
    %58 = arith.select %55, %53, %57 : vector<32x1xi1>, vector<32x1xf32>
    %cst_53 = arith.constant 0.000000e+00 : f32
    %59 = vector.broadcast %cst_53 : f32 to vector<12x1xf32>
    %cst_54 = arith.constant 0.000000e+00 : f32
    %60 = vector.broadcast %cst_54 : f32 to vector<12x1xf32>
    %61 = tpu.concatenate %59, %58, %60 in 0 : vector<12x1xf32>, vector<32x1xf32>, vector<12x1xf32> -> vector<56x1xf32>
    %cst_55 = arith.constant 0.000000e+00 : f32
    %62 = vector.broadcast %cst_55 : f32 to vector<32x1xf32>
    %63 = vector.extract_strided_slice %61 {offsets = [0, 0], sizes = [32, 1], strides = [1, 1]} : vector<56x1xf32> to vector<32x1xf32>
    %64 = arith.truncf %63 : vector<32x1xf32> to vector<32x1xbf16>
    %c0_56 = arith.constant 0 : index
    %c0_57 = arith.constant 0 : index
    %c0_58 = arith.constant 0 : index
    %c0_59 = arith.constant 0 : index
    %65 = vector.load %arg8[%c0_56, %c0_57, %c0_58, %c0_59] : memref<3x4x1x1xbf16, #tpu.memory_space<vmem>>, vector<1x1x1x1xbf16>
    %66 = vector.shape_cast %65 : vector<1x1x1x1xbf16> to vector<1x1xbf16>
    %cst_60 = arith.constant dense<0.000000e+00> : vector<32x1xf32>
    %67 = tpu.matmul %64, %66, %cst_60 {dimension_numbers = #tpu.dot_dimension_numbers<[1], [0], [0], [1], [0, 0, 1, 1], [], []>} : vector<32x1xbf16>, vector<1x1xbf16>, vector<32x1xf32> -> vector<32x1xf32>
    %68 = arith.addf %62, %67 : vector<32x1xf32>
    %69 = vector.extract_strided_slice %61 {offsets = [8, 0], sizes = [32, 1], strides = [1, 1]} : vector<56x1xf32> to vector<32x1xf32>
    %70 = arith.truncf %69 : vector<32x1xf32> to vector<32x1xbf16>
    %c0_61 = arith.constant 0 : index
    %c1_62 = arith.constant 1 : index
    %c0_63 = arith.constant 0 : index
    %c0_64 = arith.constant 0 : index
    %71 = vector.load %arg8[%c0_61, %c1_62, %c0_63, %c0_64] : memref<3x4x1x1xbf16, #tpu.memory_space<vmem>>, vector<1x1x1x1xbf16>
    %72 = vector.shape_cast %71 : vector<1x1x1x1xbf16> to vector<1x1xbf16>
    %cst_65 = arith.constant dense<0.000000e+00> : vector<32x1xf32>
    %73 = tpu.matmul %70, %72, %cst_65 {dimension_numbers = #tpu.dot_dimension_numbers<[1], [0], [0], [1], [0, 0, 1, 1], [], []>} : vector<32x1xbf16>, vector<1x1xbf16>, vector<32x1xf32> -> vector<32x1xf32>
    %74 = arith.addf %68, %73 : vector<32x1xf32>
    %75 = vector.extract_strided_slice %61 {offsets = [16, 0], sizes = [32, 1], strides = [1, 1]} : vector<56x1xf32> to vector<32x1xf32>
    %76 = arith.truncf %75 : vector<32x1xf32> to vector<32x1xbf16>
    %c0_66 = arith.constant 0 : index
    %c2_67 = arith.constant 2 : index
    %c0_68 = arith.constant 0 : index
    %c0_69 = arith.constant 0 : index
    %77 = vector.load %arg8[%c0_66, %c2_67, %c0_68, %c0_69] : memref<3x4x1x1xbf16, #tpu.memory_space<vmem>>, vector<1x1x1x1xbf16>
    %78 = vector.shape_cast %77 : vector<1x1x1x1xbf16> to vector<1x1xbf16>
    %cst_70 = arith.constant dense<0.000000e+00> : vector<32x1xf32>
    %79 = tpu.matmul %76, %78, %cst_70 {dimension_numbers = #tpu.dot_dimension_numbers<[1], [0], [0], [1], [0, 0, 1, 1], [], []>} : vector<32x1xbf16>, vector<1x1xbf16>, vector<32x1xf32> -> vector<32x1xf32>
    %80 = arith.addf %74, %79 : vector<32x1xf32>
    %81 = vector.extract_strided_slice %61 {offsets = [24, 0], sizes = [32, 1], strides = [1, 1]} : vector<56x1xf32> to vector<32x1xf32>
    %82 = arith.truncf %81 : vector<32x1xf32> to vector<32x1xbf16>
    %c0_71 = arith.constant 0 : index
    %c3_72 = arith.constant 3 : index
    %c0_73 = arith.constant 0 : index
    %c0_74 = arith.constant 0 : index
    %83 = vector.load %arg8[%c0_71, %c3_72, %c0_73, %c0_74] : memref<3x4x1x1xbf16, #tpu.memory_space<vmem>>, vector<1x1x1x1xbf16>
    %84 = vector.shape_cast %83 : vector<1x1x1x1xbf16> to vector<1x1xbf16>
    %cst_75 = arith.constant dense<0.000000e+00> : vector<32x1xf32>
    %85 = tpu.matmul %82, %84, %cst_75 {dimension_numbers = #tpu.dot_dimension_numbers<[1], [0], [0], [1], [0, 0, 1, 1], [], []>} : vector<32x1xbf16>, vector<1x1xbf16>, vector<32x1xf32> -> vector<32x1xf32>
    %86 = arith.addf %80, %85 : vector<32x1xf32>
    %c0_76 = arith.constant 0 : index
    %c0_77 = arith.constant 0 : index
    %c0_78 = arith.constant 0 : index
    %87 = vector.load %arg9[%c0_76, %c0_77, %c0_78] : memref<3x1x1xf32, #tpu.memory_space<vmem>>, vector<1x1x1xf32>
    %88 = vector.shape_cast %87 : vector<1x1x1xf32> to vector<1x1xf32>
    %89 = vector.broadcast %88 : vector<1x1xf32> to vector<32x1xf32>
    %90 = arith.mulf %86, %89 : vector<32x1xf32>
    %c0_79 = arith.constant 0 : index
    %c0_80 = arith.constant 0 : index
    %c0_81 = arith.constant 0 : index
    %91 = vector.load %arg10[%c0_79, %c0_80, %c0_81] : memref<3x1x1xf32, #tpu.memory_space<vmem>>, vector<1x1x1xf32>
    %92 = vector.shape_cast %91 : vector<1x1x1xf32> to vector<1x1xf32>
    %93 = vector.broadcast %92 : vector<1x1xf32> to vector<32x1xf32>
    %94 = arith.addf %90, %93 : vector<32x1xf32>
    %c1_82 = arith.constant 1 : index
    %c0_83 = arith.constant 0 : index
    %c0_84 = arith.constant 0 : index
    %95 = vector.load %arg5[%c1_82, %c0_83, %c0_84] : memref<3x4x1xbf16, #tpu.memory_space<vmem>>, vector<1x4x1xbf16>
    %96 = vector.shape_cast %95 : vector<1x4x1xbf16> to vector<4x1xbf16>
    %cst_85 = arith.constant dense<0.000000e+00> : vector<32x1xf32>
    %97 = tpu.matmul %42, %96, %cst_85 {dimension_numbers = #tpu.dot_dimension_numbers<[1], [0], [0], [1], [0, 0, 1, 1], [], []>} : vector<32x4xbf16>, vector<4x1xbf16>, vector<32x1xf32> -> vector<32x1xf32>
    %c1_86 = arith.constant 1 : index
    %c0_87 = arith.constant 0 : index
    %c0_88 = arith.constant 0 : index
    %98 = vector.load %arg6[%c1_86, %c0_87, %c0_88] : memref<3x1x1xf32, #tpu.memory_space<vmem>>, vector<1x1x1xf32>
    %99 = vector.shape_cast %98 : vector<1x1x1xf32> to vector<1x1xf32>
    %100 = vector.broadcast %99 : vector<1x1xf32> to vector<32x1xf32>
    %101 = arith.mulf %97, %100 : vector<32x1xf32>
    %c1_89 = arith.constant 1 : index
    %c0_90 = arith.constant 0 : index
    %c0_91 = arith.constant 0 : index
    %102 = vector.load %arg7[%c1_89, %c0_90, %c0_91] : memref<3x1x1xf32, #tpu.memory_space<vmem>>, vector<1x1x1xf32>
    %103 = vector.shape_cast %102 : vector<1x1x1xf32> to vector<1x1xf32>
    %104 = vector.broadcast %103 : vector<1x1xf32> to vector<32x1xf32>
    %105 = arith.addf %101, %104 : vector<32x1xf32>
    %cst_92 = arith.constant 0.000000e+00 : f32
    %106 = vector.broadcast %cst_92 : f32 to vector<32x1xf32>
    %107 = arith.cmpf oge, %105, %106 : vector<32x1xf32>
    %cst_93 = arith.constant 2.000000e-01 : f32
    %108 = vector.broadcast %cst_93 : f32 to vector<32x1xf32>
    %109 = arith.mulf %108, %105 : vector<32x1xf32>
    %110 = arith.select %107, %105, %109 : vector<32x1xi1>, vector<32x1xf32>
    %cst_94 = arith.constant 0.000000e+00 : f32
    %111 = vector.broadcast %cst_94 : f32 to vector<6x1xf32>
    %cst_95 = arith.constant 0.000000e+00 : f32
    %112 = vector.broadcast %cst_95 : f32 to vector<6x1xf32>
    %113 = tpu.concatenate %111, %110, %112 in 0 : vector<6x1xf32>, vector<32x1xf32>, vector<6x1xf32> -> vector<44x1xf32>
    %cst_96 = arith.constant 0.000000e+00 : f32
    %114 = vector.broadcast %cst_96 : f32 to vector<32x1xf32>
    %115 = vector.extract_strided_slice %113 {offsets = [0, 0], sizes = [32, 1], strides = [1, 1]} : vector<44x1xf32> to vector<32x1xf32>
    %116 = arith.truncf %115 : vector<32x1xf32> to vector<32x1xbf16>
    %c1_97 = arith.constant 1 : index
    %c0_98 = arith.constant 0 : index
    %c0_99 = arith.constant 0 : index
    %c0_100 = arith.constant 0 : index
    %117 = vector.load %arg8[%c1_97, %c0_98, %c0_99, %c0_100] : memref<3x4x1x1xbf16, #tpu.memory_space<vmem>>, vector<1x1x1x1xbf16>
    %118 = vector.shape_cast %117 : vector<1x1x1x1xbf16> to vector<1x1xbf16>
    %cst_101 = arith.constant dense<0.000000e+00> : vector<32x1xf32>
    %119 = tpu.matmul %116, %118, %cst_101 {dimension_numbers = #tpu.dot_dimension_numbers<[1], [0], [0], [1], [0, 0, 1, 1], [], []>} : vector<32x1xbf16>, vector<1x1xbf16>, vector<32x1xf32> -> vector<32x1xf32>
    %120 = arith.addf %114, %119 : vector<32x1xf32>
    %121 = vector.extract_strided_slice %113 {offsets = [4, 0], sizes = [32, 1], strides = [1, 1]} : vector<44x1xf32> to vector<32x1xf32>
    %122 = arith.truncf %121 : vector<32x1xf32> to vector<32x1xbf16>
    %c1_102 = arith.constant 1 : index
    %c1_103 = arith.constant 1 : index
    %c0_104 = arith.constant 0 : index
    %c0_105 = arith.constant 0 : index
    %123 = vector.load %arg8[%c1_102, %c1_103, %c0_104, %c0_105] : memref<3x4x1x1xbf16, #tpu.memory_space<vmem>>, vector<1x1x1x1xbf16>
    %124 = vector.shape_cast %123 : vector<1x1x1x1xbf16> to vector<1x1xbf16>
    %cst_106 = arith.constant dense<0.000000e+00> : vector<32x1xf32>
    %125 = tpu.matmul %122, %124, %cst_106 {dimension_numbers = #tpu.dot_dimension_numbers<[1], [0], [0], [1], [0, 0, 1, 1], [], []>} : vector<32x1xbf16>, vector<1x1xbf16>, vector<32x1xf32> -> vector<32x1xf32>
    %126 = arith.addf %120, %125 : vector<32x1xf32>
    %127 = vector.extract_strided_slice %113 {offsets = [8, 0], sizes = [32, 1], strides = [1, 1]} : vector<44x1xf32> to vector<32x1xf32>
    %128 = arith.truncf %127 : vector<32x1xf32> to vector<32x1xbf16>
    %c1_107 = arith.constant 1 : index
    %c2_108 = arith.constant 2 : index
    %c0_109 = arith.constant 0 : index
    %c0_110 = arith.constant 0 : index
    %129 = vector.load %arg8[%c1_107, %c2_108, %c0_109, %c0_110] : memref<3x4x1x1xbf16, #tpu.memory_space<vmem>>, vector<1x1x1x1xbf16>
    %130 = vector.shape_cast %129 : vector<1x1x1x1xbf16> to vector<1x1xbf16>
    %cst_111 = arith.constant dense<0.000000e+00> : vector<32x1xf32>
    %131 = tpu.matmul %128, %130, %cst_111 {dimension_numbers = #tpu.dot_dimension_numbers<[1], [0], [0], [1], [0, 0, 1, 1], [], []>} : vector<32x1xbf16>, vector<1x1xbf16>, vector<32x1xf32> -> vector<32x1xf32>
    %132 = arith.addf %126, %131 : vector<32x1xf32>
    %133 = vector.extract_strided_slice %113 {offsets = [12, 0], sizes = [32, 1], strides = [1, 1]} : vector<44x1xf32> to vector<32x1xf32>
    %134 = arith.truncf %133 : vector<32x1xf32> to vector<32x1xbf16>
    %c1_112 = arith.constant 1 : index
    %c3_113 = arith.constant 3 : index
    %c0_114 = arith.constant 0 : index
    %c0_115 = arith.constant 0 : index
    %135 = vector.load %arg8[%c1_112, %c3_113, %c0_114, %c0_115] : memref<3x4x1x1xbf16, #tpu.memory_space<vmem>>, vector<1x1x1x1xbf16>
    %136 = vector.shape_cast %135 : vector<1x1x1x1xbf16> to vector<1x1xbf16>
    %cst_116 = arith.constant dense<0.000000e+00> : vector<32x1xf32>
    %137 = tpu.matmul %134, %136, %cst_116 {dimension_numbers = #tpu.dot_dimension_numbers<[1], [0], [0], [1], [0, 0, 1, 1], [], []>} : vector<32x1xbf16>, vector<1x1xbf16>, vector<32x1xf32> -> vector<32x1xf32>
    %138 = arith.addf %132, %137 : vector<32x1xf32>
    %c1_117 = arith.constant 1 : index
    %c0_118 = arith.constant 0 : index
    %c0_119 = arith.constant 0 : index
    %139 = vector.load %arg9[%c1_117, %c0_118, %c0_119] : memref<3x1x1xf32, #tpu.memory_space<vmem>>, vector<1x1x1xf32>
    %140 = vector.shape_cast %139 : vector<1x1x1xf32> to vector<1x1xf32>
    %141 = vector.broadcast %140 : vector<1x1xf32> to vector<32x1xf32>
    %142 = arith.mulf %138, %141 : vector<32x1xf32>
    %c1_120 = arith.constant 1 : index
    %c0_121 = arith.constant 0 : index
    %c0_122 = arith.constant 0 : index
    %143 = vector.load %arg10[%c1_120, %c0_121, %c0_122] : memref<3x1x1xf32, #tpu.memory_space<vmem>>, vector<1x1x1xf32>
    %144 = vector.shape_cast %143 : vector<1x1x1xf32> to vector<1x1xf32>
    %145 = vector.broadcast %144 : vector<1x1xf32> to vector<32x1xf32>
    %146 = arith.addf %142, %145 : vector<32x1xf32>
    %c2_123 = arith.constant 2 : index
    %c0_124 = arith.constant 0 : index
    %c0_125 = arith.constant 0 : index
    %147 = vector.load %arg5[%c2_123, %c0_124, %c0_125] : memref<3x4x1xbf16, #tpu.memory_space<vmem>>, vector<1x4x1xbf16>
    %148 = vector.shape_cast %147 : vector<1x4x1xbf16> to vector<4x1xbf16>
    %cst_126 = arith.constant dense<0.000000e+00> : vector<32x1xf32>
    %149 = tpu.matmul %42, %148, %cst_126 {dimension_numbers = #tpu.dot_dimension_numbers<[1], [0], [0], [1], [0, 0, 1, 1], [], []>} : vector<32x4xbf16>, vector<4x1xbf16>, vector<32x1xf32> -> vector<32x1xf32>
    %c2_127 = arith.constant 2 : index
    %c0_128 = arith.constant 0 : index
    %c0_129 = arith.constant 0 : index
    %150 = vector.load %arg6[%c2_127, %c0_128, %c0_129] : memref<3x1x1xf32, #tpu.memory_space<vmem>>, vector<1x1x1xf32>
    %151 = vector.shape_cast %150 : vector<1x1x1xf32> to vector<1x1xf32>
    %152 = vector.broadcast %151 : vector<1x1xf32> to vector<32x1xf32>
    %153 = arith.mulf %149, %152 : vector<32x1xf32>
    %c2_130 = arith.constant 2 : index
    %c0_131 = arith.constant 0 : index
    %c0_132 = arith.constant 0 : index
    %154 = vector.load %arg7[%c2_130, %c0_131, %c0_132] : memref<3x1x1xf32, #tpu.memory_space<vmem>>, vector<1x1x1xf32>
    %155 = vector.shape_cast %154 : vector<1x1x1xf32> to vector<1x1xf32>
    %156 = vector.broadcast %155 : vector<1x1xf32> to vector<32x1xf32>
    %157 = arith.addf %153, %156 : vector<32x1xf32>
    %cst_133 = arith.constant 0.000000e+00 : f32
    %158 = vector.broadcast %cst_133 : f32 to vector<32x1xf32>
    %159 = arith.cmpf oge, %157, %158 : vector<32x1xf32>
    %cst_134 = arith.constant 2.000000e-01 : f32
    %160 = vector.broadcast %cst_134 : f32 to vector<32x1xf32>
    %161 = arith.mulf %160, %157 : vector<32x1xf32>
    %162 = arith.select %159, %157, %161 : vector<32x1xi1>, vector<32x1xf32>
    %cst_135 = arith.constant 0.000000e+00 : f32
    %163 = vector.broadcast %cst_135 : f32 to vector<3x1xf32>
    %cst_136 = arith.constant 0.000000e+00 : f32
    %164 = vector.broadcast %cst_136 : f32 to vector<3x1xf32>
    %165 = tpu.concatenate %163, %162, %164 in 0 : vector<3x1xf32>, vector<32x1xf32>, vector<3x1xf32> -> vector<38x1xf32>
    %cst_137 = arith.constant 0.000000e+00 : f32
    %166 = vector.broadcast %cst_137 : f32 to vector<32x1xf32>
    %167 = vector.extract_strided_slice %165 {offsets = [0, 0], sizes = [32, 1], strides = [1, 1]} : vector<38x1xf32> to vector<32x1xf32>
    %168 = arith.truncf %167 : vector<32x1xf32> to vector<32x1xbf16>
    %c2_138 = arith.constant 2 : index
    %c0_139 = arith.constant 0 : index
    %c0_140 = arith.constant 0 : index
    %c0_141 = arith.constant 0 : index
    %169 = vector.load %arg8[%c2_138, %c0_139, %c0_140, %c0_141] : memref<3x4x1x1xbf16, #tpu.memory_space<vmem>>, vector<1x1x1x1xbf16>
    %170 = vector.shape_cast %169 : vector<1x1x1x1xbf16> to vector<1x1xbf16>
    %cst_142 = arith.constant dense<0.000000e+00> : vector<32x1xf32>
    %171 = tpu.matmul %168, %170, %cst_142 {dimension_numbers = #tpu.dot_dimension_numbers<[1], [0], [0], [1], [0, 0, 1, 1], [], []>} : vector<32x1xbf16>, vector<1x1xbf16>, vector<32x1xf32> -> vector<32x1xf32>
    %172 = arith.addf %166, %171 : vector<32x1xf32>
    %173 = vector.extract_strided_slice %165 {offsets = [2, 0], sizes = [32, 1], strides = [1, 1]} : vector<38x1xf32> to vector<32x1xf32>
    %174 = arith.truncf %173 : vector<32x1xf32> to vector<32x1xbf16>
    %c2_143 = arith.constant 2 : index
    %c1_144 = arith.constant 1 : index
    %c0_145 = arith.constant 0 : index
    %c0_146 = arith.constant 0 : index
    %175 = vector.load %arg8[%c2_143, %c1_144, %c0_145, %c0_146] : memref<3x4x1x1xbf16, #tpu.memory_space<vmem>>, vector<1x1x1x1xbf16>
    %176 = vector.shape_cast %175 : vector<1x1x1x1xbf16> to vector<1x1xbf16>
    %cst_147 = arith.constant dense<0.000000e+00> : vector<32x1xf32>
    %177 = tpu.matmul %174, %176, %cst_147 {dimension_numbers = #tpu.dot_dimension_numbers<[1], [0], [0], [1], [0, 0, 1, 1], [], []>} : vector<32x1xbf16>, vector<1x1xbf16>, vector<32x1xf32> -> vector<32x1xf32>
    %178 = arith.addf %172, %177 : vector<32x1xf32>
    %179 = vector.extract_strided_slice %165 {offsets = [4, 0], sizes = [32, 1], strides = [1, 1]} : vector<38x1xf32> to vector<32x1xf32>
    %180 = arith.truncf %179 : vector<32x1xf32> to vector<32x1xbf16>
    %c2_148 = arith.constant 2 : index
    %c2_149 = arith.constant 2 : index
    %c0_150 = arith.constant 0 : index
    %c0_151 = arith.constant 0 : index
    %181 = vector.load %arg8[%c2_148, %c2_149, %c0_150, %c0_151] : memref<3x4x1x1xbf16, #tpu.memory_space<vmem>>, vector<1x1x1x1xbf16>
    %182 = vector.shape_cast %181 : vector<1x1x1x1xbf16> to vector<1x1xbf16>
    %cst_152 = arith.constant dense<0.000000e+00> : vector<32x1xf32>
    %183 = tpu.matmul %180, %182, %cst_152 {dimension_numbers = #tpu.dot_dimension_numbers<[1], [0], [0], [1], [0, 0, 1, 1], [], []>} : vector<32x1xbf16>, vector<1x1xbf16>, vector<32x1xf32> -> vector<32x1xf32>
    %184 = arith.addf %178, %183 : vector<32x1xf32>
    %185 = vector.extract_strided_slice %165 {offsets = [6, 0], sizes = [32, 1], strides = [1, 1]} : vector<38x1xf32> to vector<32x1xf32>
    %186 = arith.truncf %185 : vector<32x1xf32> to vector<32x1xbf16>
    %c2_153 = arith.constant 2 : index
    %c3_154 = arith.constant 3 : index
    %c0_155 = arith.constant 0 : index
    %c0_156 = arith.constant 0 : index
    %187 = vector.load %arg8[%c2_153, %c3_154, %c0_155, %c0_156] : memref<3x4x1x1xbf16, #tpu.memory_space<vmem>>, vector<1x1x1x1xbf16>
    %188 = vector.shape_cast %187 : vector<1x1x1x1xbf16> to vector<1x1xbf16>
    %cst_157 = arith.constant dense<0.000000e+00> : vector<32x1xf32>
    %189 = tpu.matmul %186, %188, %cst_157 {dimension_numbers = #tpu.dot_dimension_numbers<[1], [0], [0], [1], [0, 0, 1, 1], [], []>} : vector<32x1xbf16>, vector<1x1xbf16>, vector<32x1xf32> -> vector<32x1xf32>
    %190 = arith.addf %184, %189 : vector<32x1xf32>
    %c2_158 = arith.constant 2 : index
    %c0_159 = arith.constant 0 : index
    %c0_160 = arith.constant 0 : index
    %191 = vector.load %arg9[%c2_158, %c0_159, %c0_160] : memref<3x1x1xf32, #tpu.memory_space<vmem>>, vector<1x1x1xf32>
    %192 = vector.shape_cast %191 : vector<1x1x1xf32> to vector<1x1xf32>
    %193 = vector.broadcast %192 : vector<1x1xf32> to vector<32x1xf32>
    %194 = arith.mulf %190, %193 : vector<32x1xf32>
    %c2_161 = arith.constant 2 : index
    %c0_162 = arith.constant 0 : index
    %c0_163 = arith.constant 0 : index
    %195 = vector.load %arg10[%c2_161, %c0_162, %c0_163] : memref<3x1x1xf32, #tpu.memory_space<vmem>>, vector<1x1x1xf32>
    %196 = vector.shape_cast %195 : vector<1x1x1xf32> to vector<1x1xf32>
    %197 = vector.broadcast %196 : vector<1x1xf32> to vector<32x1xf32>
    %198 = arith.addf %194, %197 : vector<32x1xf32>
    %c0_164 = arith.constant 0 : index
    %c0_165 = arith.constant 0 : index
    %199 = vector.load %arg11[%c0_164, %c0_165] : memref<4x1xbf16, #tpu.memory_space<vmem>>, vector<4x1xbf16>
    %cst_166 = arith.constant dense<0.000000e+00> : vector<32x1xf32>
    %200 = tpu.matmul %42, %199, %cst_166 {dimension_numbers = #tpu.dot_dimension_numbers<[1], [0], [0], [1], [0, 0, 1, 1], [], []>} : vector<32x4xbf16>, vector<4x1xbf16>, vector<32x1xf32> -> vector<32x1xf32>
    %c0_167 = arith.constant 0 : index
    %c0_168 = arith.constant 0 : index
    %201 = vector.load %arg12[%c0_167, %c0_168] : memref<1x1xf32, #tpu.memory_space<vmem>>, vector<1x1xf32>
    %202 = vector.broadcast %201 : vector<1x1xf32> to vector<32x1xf32>
    %203 = arith.mulf %200, %202 : vector<32x1xf32>
    %c0_169 = arith.constant 0 : index
    %c0_170 = arith.constant 0 : index
    %204 = vector.load %arg13[%c0_169, %c0_170] : memref<1x1xf32, #tpu.memory_space<vmem>>, vector<1x1xf32>
    %205 = vector.broadcast %204 : vector<1x1xf32> to vector<32x1xf32>
    %206 = arith.addf %203, %205 : vector<32x1xf32>
    %207 = tpu.concatenate %94, %146, %198, %206 in 1 : vector<32x1xf32>, vector<32x1xf32>, vector<32x1xf32>, vector<32x1xf32> -> vector<32x4xf32>
    %208 = arith.addf %207, %41 : vector<32x4xf32>
    %cst_171 = arith.constant 0.000000e+00 : f32
    %209 = vector.broadcast %cst_171 : f32 to vector<32x4xf32>
    %210 = arith.cmpf oge, %208, %209 : vector<32x4xf32>
    %cst_172 = arith.constant 2.000000e-01 : f32
    %211 = vector.broadcast %cst_172 : f32 to vector<32x4xf32>
    %212 = arith.mulf %211, %208 : vector<32x4xf32>
    %213 = arith.select %210, %208, %212 : vector<32x4xi1>, vector<32x4xf32>
    %214 = arith.truncf %213 : vector<32x4xf32> to vector<32x4xbf16>
    %c0_173 = arith.constant 0 : index
    %c0_174 = arith.constant 0 : index
    %c0_175 = arith.constant 0 : index
    %215 = vector.load %arg14[%c0_173, %c0_174, %c0_175] : memref<1x32x4xbf16, #tpu.memory_space<vmem>>, vector<1x32x4xbf16>
    %216 = vector.shape_cast %215 : vector<1x32x4xbf16> to vector<32x4xbf16>
    %217 = vector.shape_cast %214 : vector<32x4xbf16> to vector<1x32x4xbf16>
    tpu.vector_store %arg14[%c0_173, %c0_174, %c0_175], %217 {strides = array<i32>} : memref<1x32x4xbf16, #tpu.memory_space<vmem>>, vector<1x32x4xbf16>,
    return
  }
  func.func @transform_0(%arg0: i32) -> (i32, i32, i32, i32) {
    %c0_i32 = arith.constant 0 : i32
    %c0_i32_0 = arith.constant 0 : i32
    %c0_i32_1 = arith.constant 0 : i32
    %c0_i32_2 = arith.constant 0 : i32
    return %arg0, %c0_i32, %c0_i32_0, %c0_i32_1 : i32, i32, i32, i32
  }
  func.func @transform_1(%arg0: i32) -> (i32, i32, i32) {
    %c0_i32 = arith.constant 0 : i32
    %c0_i32_0 = arith.constant 0 : i32
    %c0_i32_1 = arith.constant 0 : i32
    %c0_i32_2 = arith.constant 0 : i32
    return %c0_i32, %c0_i32_0, %c0_i32_1 : i32, i32, i32
  }
  func.func @transform_2(%arg0: i32) -> (i32, i32) {
    %c0_i32 = arith.constant 0 : i32
    %c0_i32_0 = arith.constant 0 : i32
    %c0_i32_1 = arith.constant 0 : i32
    return %c0_i32, %c0_i32_0 : i32, i32
  }
  func.func @transform_3(%arg0: i32) -> (i32, i32) {
    %c0_i32 = arith.constant 0 : i32
    %c0_i32_0 = arith.constant 0 : i32
    %c0_i32_1 = arith.constant 0 : i32
    return %c0_i32, %c0_i32_0 : i32, i32
  }
  func.func @transform_4(%arg0: i32) -> (i32, i32, i32) {
    %c0_i32 = arith.constant 0 : i32
    %c0_i32_0 = arith.constant 0 : i32
    %c0_i32_1 = arith.constant 0 : i32
    %c0_i32_2 = arith.constant 0 : i32
    return %c0_i32, %c0_i32_0, %c0_i32_1 : i32, i32, i32
  }
  func.func @transform_5(%arg0: i32) -> (i32, i32, i32) {
    %c0_i32 = arith.constant 0 : i32
    %c0_i32_0 = arith.constant 0 : i32
    %c0_i32_1 = arith.constant 0 : i32
    %c0_i32_2 = arith.constant 0 : i32
    return %c0_i32, %c0_i32_0, %c0_i32_1 : i32, i32, i32
  }
  func.func @transform_6(%arg0: i32) -> (i32, i32, i32) {
    %c0_i32 = arith.constant 0 : i32
    %c0_i32_0 = arith.constant 0 : i32
    %c0_i32_1 = arith.constant 0 : i32
    %c0_i32_2 = arith.constant 0 : i32
    return %c0_i32, %c0_i32_0, %c0_i32_1 : i32, i32, i32
  }
  func.func @transform_7(%arg0: i32) -> (i32, i32, i32, i32) {
    %c0_i32 = arith.constant 0 : i32
    %c0_i32_0 = arith.constant 0 : i32
    %c0_i32_1 = arith.constant 0 : i32
    %c0_i32_2 = arith.constant 0 : i32
    %c0_i32_3 = arith.constant 0 : i32
    return %c0_i32, %c0_i32_0, %c0_i32_1, %c0_i32_2 : i32, i32, i32, i32
  }
  func.func @transform_8(%arg0: i32) -> (i32, i32, i32) {
    %c0_i32 = arith.constant 0 : i32
    %c0_i32_0 = arith.constant 0 : i32
    %c0_i32_1 = arith.constant 0 : i32
    %c0_i32_2 = arith.constant 0 : i32
    return %c0_i32, %c0_i32_0, %c0_i32_1 : i32, i32, i32
  }
  func.func @transform_9(%arg0: i32) -> (i32, i32, i32) {
    %c0_i32 = arith.constant 0 : i32
    %c0_i32_0 = arith.constant 0 : i32
    %c0_i32_1 = arith.constant 0 : i32
    %c0_i32_2 = arith.constant 0 : i32
    return %c0_i32, %c0_i32_0, %c0_i32_1 : i32, i32, i32
  }
  func.func @transform_10(%arg0: i32) -> (i32, i32) {
    %c0_i32 = arith.constant 0 : i32
    %c0_i32_0 = arith.constant 0 : i32
    %c0_i32_1 = arith.constant 0 : i32
    return %c0_i32, %c0_i32_0 : i32, i32
  }
  func.func @transform_11(%arg0: i32) -> (i32, i32) {
    %c0_i32 = arith.constant 0 : i32
    %c0_i32_0 = arith.constant 0 : i32
    %c0_i32_1 = arith.constant 0 : i32
    return %c0_i32, %c0_i32_0 : i32, i32
  }
  func.func @transform_12(%arg0: i32) -> (i32, i32) {
    %c0_i32 = arith.constant 0 : i32
    %c0_i32_0 = arith.constant 0 : i32
    %c0_i32_1 = arith.constant 0 : i32
    return %c0_i32, %c0_i32_0 : i32, i32
  }
  func.func @transform_13(%arg0: i32) -> (i32, i32, i32) {
    %c0_i32 = arith.constant 0 : i32
    %c0_i32_0 = arith.constant 0 : i32
    %c0_i32_1 = arith.constant 0 : i32
    return %arg0, %c0_i32, %c0_i32_0 : i32, i32, i32
  }
}

module attributes {stable_mosaic.version = 11 : i64} {
  func.func @_encoder_stage_kernel(%arg0: i32, %arg1: memref<1x2x17x4xbf16, #tpu.memory_space<vmem>>, %arg2: memref<4x4x8xbf16, #tpu.memory_space<vmem>>, %arg3: memref<1x8xf32, #tpu.memory_space<vmem>>, %arg4: memref<1x8xf32, #tpu.memory_space<vmem>>, %arg5: memref<3x8x2xbf16, #tpu.memory_space<vmem>>, %arg6: memref<3x1x2xf32, #tpu.memory_space<vmem>>, %arg7: memref<3x1x2xf32, #tpu.memory_space<vmem>>, %arg8: memref<3x4x2x2xbf16, #tpu.memory_space<vmem>>, %arg9: memref<3x1x2xf32, #tpu.memory_space<vmem>>, %arg10: memref<3x1x2xf32, #tpu.memory_space<vmem>>, %arg11: memref<8x2xbf16, #tpu.memory_space<vmem>>, %arg12: memref<1x2xf32, #tpu.memory_space<vmem>>, %arg13: memref<1x2xf32, #tpu.memory_space<vmem>>, %arg14: memref<1x16x8xbf16, #tpu.memory_space<vmem>>) attributes {dimension_semantics = [#tpu.dimension_semantics<parallel>], iteration_bounds = array<i64: 2>, scalar_prefetch = 0 : i64, scratch_operands = 0 : i64, tpu.core_type = #tpu.core_type<tc>, window_params = [{transform_indices = @transform_0, window_bounds = array<i64: 1, 2, 17, 4>}, {pipeline_mode = #tpu.pipeline_mode<synchronous>, transform_indices = @transform_1, window_bounds = array<i64: 4, 4, 8>}, {pipeline_mode = #tpu.pipeline_mode<synchronous>, transform_indices = @transform_2, window_bounds = array<i64: 1, 8>}, {pipeline_mode = #tpu.pipeline_mode<synchronous>, transform_indices = @transform_3, window_bounds = array<i64: 1, 8>}, {pipeline_mode = #tpu.pipeline_mode<synchronous>, transform_indices = @transform_4, window_bounds = array<i64: 3, 8, 2>}, {pipeline_mode = #tpu.pipeline_mode<synchronous>, transform_indices = @transform_5, window_bounds = array<i64: 3, 1, 2>}, {pipeline_mode = #tpu.pipeline_mode<synchronous>, transform_indices = @transform_6, window_bounds = array<i64: 3, 1, 2>}, {pipeline_mode = #tpu.pipeline_mode<synchronous>, transform_indices = @transform_7, window_bounds = array<i64: 3, 4, 2, 2>}, {pipeline_mode = #tpu.pipeline_mode<synchronous>, transform_indices = @transform_8, window_bounds = array<i64: 3, 1, 2>}, {pipeline_mode = #tpu.pipeline_mode<synchronous>, transform_indices = @transform_9, window_bounds = array<i64: 3, 1, 2>}, {pipeline_mode = #tpu.pipeline_mode<synchronous>, transform_indices = @transform_10, window_bounds = array<i64: 8, 2>}, {pipeline_mode = #tpu.pipeline_mode<synchronous>, transform_indices = @transform_11, window_bounds = array<i64: 1, 2>}, {pipeline_mode = #tpu.pipeline_mode<synchronous>, transform_indices = @transform_12, window_bounds = array<i64: 1, 2>}, {transform_indices = @transform_13, window_bounds = array<i64: 1, 16, 8>}]} {
    %cst = arith.constant 0.000000e+00 : f32
    %0 = vector.broadcast %cst : f32 to vector<16x8xf32>
    %c0 = arith.constant 0 : index
    %c0_0 = arith.constant 0 : index
    %c0_1 = arith.constant 0 : index
    %c0_2 = arith.constant 0 : index
    %1 = vector.load %arg1[%c0, %c0_0, %c0_1, %c0_2] : memref<1x2x17x4xbf16, #tpu.memory_space<vmem>>, vector<1x1x16x4xbf16>
    %2 = vector.shape_cast %1 : vector<1x1x16x4xbf16> to vector<16x4xbf16>
    %c0_3 = arith.constant 0 : index
    %c0_4 = arith.constant 0 : index
    %c0_5 = arith.constant 0 : index
    %3 = vector.load %arg2[%c0_3, %c0_4, %c0_5] : memref<4x4x8xbf16, #tpu.memory_space<vmem>>, vector<1x4x8xbf16>
    %4 = vector.shape_cast %3 : vector<1x4x8xbf16> to vector<4x8xbf16>
    %cst_6 = arith.constant dense<0.000000e+00> : vector<16x8xf32>
    %5 = tpu.matmul %2, %4, %cst_6 {dimension_numbers = #tpu.dot_dimension_numbers<[1], [0], [0], [1], [0, 0, 1, 1], [], []>} : vector<16x4xbf16>, vector<4x8xbf16>, vector<16x8xf32> -> vector<16x8xf32>
    %6 = arith.addf %0, %5 : vector<16x8xf32>
    %c0_7 = arith.constant 0 : index
    %c1 = arith.constant 1 : index
    %c0_8 = arith.constant 0 : index
    %c0_9 = arith.constant 0 : index
    %7 = vector.load %arg1[%c0_7, %c1, %c0_8, %c0_9] : memref<1x2x17x4xbf16, #tpu.memory_space<vmem>>, vector<1x1x16x4xbf16>
    %8 = vector.shape_cast %7 : vector<1x1x16x4xbf16> to vector<16x4xbf16>
    %c1_10 = arith.constant 1 : index
    %c0_11 = arith.constant 0 : index
    %c0_12 = arith.constant 0 : index
    %9 = vector.load %arg2[%c1_10, %c0_11, %c0_12] : memref<4x4x8xbf16, #tpu.memory_space<vmem>>, vector<1x4x8xbf16>
    %10 = vector.shape_cast %9 : vector<1x4x8xbf16> to vector<4x8xbf16>
    %cst_13 = arith.constant dense<0.000000e+00> : vector<16x8xf32>
    %11 = tpu.matmul %8, %10, %cst_13 {dimension_numbers = #tpu.dot_dimension_numbers<[1], [0], [0], [1], [0, 0, 1, 1], [], []>} : vector<16x4xbf16>, vector<4x8xbf16>, vector<16x8xf32> -> vector<16x8xf32>
    %12 = arith.addf %6, %11 : vector<16x8xf32>
    %c0_14 = arith.constant 0 : index
    %c0_15 = arith.constant 0 : index
    %c1_16 = arith.constant 1 : index
    %c0_17 = arith.constant 0 : index
    %13 = vector.load %arg1[%c0_14, %c0_15, %c1_16, %c0_17] : memref<1x2x17x4xbf16, #tpu.memory_space<vmem>>, vector<1x1x16x4xbf16>
    %14 = vector.shape_cast %13 : vector<1x1x16x4xbf16> to vector<16x4xbf16>
    %c2 = arith.constant 2 : index
    %c0_18 = arith.constant 0 : index
    %c0_19 = arith.constant 0 : index
    %15 = vector.load %arg2[%c2, %c0_18, %c0_19] : memref<4x4x8xbf16, #tpu.memory_space<vmem>>, vector<1x4x8xbf16>
    %16 = vector.shape_cast %15 : vector<1x4x8xbf16> to vector<4x8xbf16>
    %cst_20 = arith.constant dense<0.000000e+00> : vector<16x8xf32>
    %17 = tpu.matmul %14, %16, %cst_20 {dimension_numbers = #tpu.dot_dimension_numbers<[1], [0], [0], [1], [0, 0, 1, 1], [], []>} : vector<16x4xbf16>, vector<4x8xbf16>, vector<16x8xf32> -> vector<16x8xf32>
    %18 = arith.addf %12, %17 : vector<16x8xf32>
    %c0_21 = arith.constant 0 : index
    %c1_22 = arith.constant 1 : index
    %c1_23 = arith.constant 1 : index
    %c0_24 = arith.constant 0 : index
    %19 = vector.load %arg1[%c0_21, %c1_22, %c1_23, %c0_24] : memref<1x2x17x4xbf16, #tpu.memory_space<vmem>>, vector<1x1x16x4xbf16>
    %20 = vector.shape_cast %19 : vector<1x1x16x4xbf16> to vector<16x4xbf16>
    %c3 = arith.constant 3 : index
    %c0_25 = arith.constant 0 : index
    %c0_26 = arith.constant 0 : index
    %21 = vector.load %arg2[%c3, %c0_25, %c0_26] : memref<4x4x8xbf16, #tpu.memory_space<vmem>>, vector<1x4x8xbf16>
    %22 = vector.shape_cast %21 : vector<1x4x8xbf16> to vector<4x8xbf16>
    %cst_27 = arith.constant dense<0.000000e+00> : vector<16x8xf32>
    %23 = tpu.matmul %20, %22, %cst_27 {dimension_numbers = #tpu.dot_dimension_numbers<[1], [0], [0], [1], [0, 0, 1, 1], [], []>} : vector<16x4xbf16>, vector<4x8xbf16>, vector<16x8xf32> -> vector<16x8xf32>
    %24 = arith.addf %18, %23 : vector<16x8xf32>
    %c0_28 = arith.constant 0 : index
    %c0_29 = arith.constant 0 : index
    %25 = vector.load %arg3[%c0_28, %c0_29] : memref<1x8xf32, #tpu.memory_space<vmem>>, vector<1x8xf32>
    %26 = vector.broadcast %25 : vector<1x8xf32> to vector<16x8xf32>
    %27 = arith.mulf %24, %26 : vector<16x8xf32>
    %c0_30 = arith.constant 0 : index
    %c0_31 = arith.constant 0 : index
    %28 = vector.load %arg4[%c0_30, %c0_31] : memref<1x8xf32, #tpu.memory_space<vmem>>, vector<1x8xf32>
    %29 = vector.broadcast %28 : vector<1x8xf32> to vector<16x8xf32>
    %30 = arith.addf %27, %29 : vector<16x8xf32>
    %cst_32 = arith.constant 0.000000e+00 : f32
    %31 = vector.broadcast %cst_32 : f32 to vector<16x8xf32>
    %32 = arith.cmpf oge, %30, %31 : vector<16x8xf32>
    %cst_33 = arith.constant 2.000000e-01 : f32
    %33 = vector.broadcast %cst_33 : f32 to vector<16x8xf32>
    %34 = arith.mulf %33, %30 : vector<16x8xf32>
    %35 = arith.select %32, %30, %34 : vector<16x8xi1>, vector<16x8xf32>
    %36 = arith.truncf %35 : vector<16x8xf32> to vector<16x8xbf16>
    %c0_34 = arith.constant 0 : index
    %c0_35 = arith.constant 0 : index
    %c0_36 = arith.constant 0 : index
    %37 = vector.load %arg5[%c0_34, %c0_35, %c0_36] : memref<3x8x2xbf16, #tpu.memory_space<vmem>>, vector<1x8x2xbf16>
    %38 = vector.shape_cast %37 : vector<1x8x2xbf16> to vector<8x2xbf16>
    %cst_37 = arith.constant dense<0.000000e+00> : vector<16x2xf32>
    %39 = tpu.matmul %36, %38, %cst_37 {dimension_numbers = #tpu.dot_dimension_numbers<[1], [0], [0], [1], [0, 0, 1, 1], [], []>} : vector<16x8xbf16>, vector<8x2xbf16>, vector<16x2xf32> -> vector<16x2xf32>
    %c0_38 = arith.constant 0 : index
    %c0_39 = arith.constant 0 : index
    %c0_40 = arith.constant 0 : index
    %40 = vector.load %arg6[%c0_38, %c0_39, %c0_40] : memref<3x1x2xf32, #tpu.memory_space<vmem>>, vector<1x1x2xf32>
    %41 = vector.shape_cast %40 : vector<1x1x2xf32> to vector<1x2xf32>
    %42 = vector.broadcast %41 : vector<1x2xf32> to vector<16x2xf32>
    %43 = arith.mulf %39, %42 : vector<16x2xf32>
    %c0_41 = arith.constant 0 : index
    %c0_42 = arith.constant 0 : index
    %c0_43 = arith.constant 0 : index
    %44 = vector.load %arg7[%c0_41, %c0_42, %c0_43] : memref<3x1x2xf32, #tpu.memory_space<vmem>>, vector<1x1x2xf32>
    %45 = vector.shape_cast %44 : vector<1x1x2xf32> to vector<1x2xf32>
    %46 = vector.broadcast %45 : vector<1x2xf32> to vector<16x2xf32>
    %47 = arith.addf %43, %46 : vector<16x2xf32>
    %cst_44 = arith.constant 0.000000e+00 : f32
    %48 = vector.broadcast %cst_44 : f32 to vector<16x2xf32>
    %49 = arith.cmpf oge, %47, %48 : vector<16x2xf32>
    %cst_45 = arith.constant 2.000000e-01 : f32
    %50 = vector.broadcast %cst_45 : f32 to vector<16x2xf32>
    %51 = arith.mulf %50, %47 : vector<16x2xf32>
    %52 = arith.select %49, %47, %51 : vector<16x2xi1>, vector<16x2xf32>
    %cst_46 = arith.constant 0.000000e+00 : f32
    %53 = vector.broadcast %cst_46 : f32 to vector<12x2xf32>
    %cst_47 = arith.constant 0.000000e+00 : f32
    %54 = vector.broadcast %cst_47 : f32 to vector<12x2xf32>
    %55 = tpu.concatenate %53, %52, %54 in 0 : vector<12x2xf32>, vector<16x2xf32>, vector<12x2xf32> -> vector<40x2xf32>
    %cst_48 = arith.constant 0.000000e+00 : f32
    %56 = vector.broadcast %cst_48 : f32 to vector<16x2xf32>
    %57 = vector.extract_strided_slice %55 {offsets = [0, 0], sizes = [16, 2], strides = [1, 1]} : vector<40x2xf32> to vector<16x2xf32>
    %58 = arith.truncf %57 : vector<16x2xf32> to vector<16x2xbf16>
    %c0_49 = arith.constant 0 : index
    %c0_50 = arith.constant 0 : index
    %c0_51 = arith.constant 0 : index
    %c0_52 = arith.constant 0 : index
    %59 = vector.load %arg8[%c0_49, %c0_50, %c0_51, %c0_52] : memref<3x4x2x2xbf16, #tpu.memory_space<vmem>>, vector<1x1x2x2xbf16>
    %60 = vector.shape_cast %59 : vector<1x1x2x2xbf16> to vector<2x2xbf16>
    %cst_53 = arith.constant dense<0.000000e+00> : vector<16x2xf32>
    %61 = tpu.matmul %58, %60, %cst_53 {dimension_numbers = #tpu.dot_dimension_numbers<[1], [0], [0], [1], [0, 0, 1, 1], [], []>} : vector<16x2xbf16>, vector<2x2xbf16>, vector<16x2xf32> -> vector<16x2xf32>
    %62 = arith.addf %56, %61 : vector<16x2xf32>
    %63 = vector.extract_strided_slice %55 {offsets = [8, 0], sizes = [16, 2], strides = [1, 1]} : vector<40x2xf32> to vector<16x2xf32>
    %64 = arith.truncf %63 : vector<16x2xf32> to vector<16x2xbf16>
    %c0_54 = arith.constant 0 : index
    %c1_55 = arith.constant 1 : index
    %c0_56 = arith.constant 0 : index
    %c0_57 = arith.constant 0 : index
    %65 = vector.load %arg8[%c0_54, %c1_55, %c0_56, %c0_57] : memref<3x4x2x2xbf16, #tpu.memory_space<vmem>>, vector<1x1x2x2xbf16>
    %66 = vector.shape_cast %65 : vector<1x1x2x2xbf16> to vector<2x2xbf16>
    %cst_58 = arith.constant dense<0.000000e+00> : vector<16x2xf32>
    %67 = tpu.matmul %64, %66, %cst_58 {dimension_numbers = #tpu.dot_dimension_numbers<[1], [0], [0], [1], [0, 0, 1, 1], [], []>} : vector<16x2xbf16>, vector<2x2xbf16>, vector<16x2xf32> -> vector<16x2xf32>
    %68 = arith.addf %62, %67 : vector<16x2xf32>
    %69 = vector.extract_strided_slice %55 {offsets = [16, 0], sizes = [16, 2], strides = [1, 1]} : vector<40x2xf32> to vector<16x2xf32>
    %70 = arith.truncf %69 : vector<16x2xf32> to vector<16x2xbf16>
    %c0_59 = arith.constant 0 : index
    %c2_60 = arith.constant 2 : index
    %c0_61 = arith.constant 0 : index
    %c0_62 = arith.constant 0 : index
    %71 = vector.load %arg8[%c0_59, %c2_60, %c0_61, %c0_62] : memref<3x4x2x2xbf16, #tpu.memory_space<vmem>>, vector<1x1x2x2xbf16>
    %72 = vector.shape_cast %71 : vector<1x1x2x2xbf16> to vector<2x2xbf16>
    %cst_63 = arith.constant dense<0.000000e+00> : vector<16x2xf32>
    %73 = tpu.matmul %70, %72, %cst_63 {dimension_numbers = #tpu.dot_dimension_numbers<[1], [0], [0], [1], [0, 0, 1, 1], [], []>} : vector<16x2xbf16>, vector<2x2xbf16>, vector<16x2xf32> -> vector<16x2xf32>
    %74 = arith.addf %68, %73 : vector<16x2xf32>
    %75 = vector.extract_strided_slice %55 {offsets = [24, 0], sizes = [16, 2], strides = [1, 1]} : vector<40x2xf32> to vector<16x2xf32>
    %76 = arith.truncf %75 : vector<16x2xf32> to vector<16x2xbf16>
    %c0_64 = arith.constant 0 : index
    %c3_65 = arith.constant 3 : index
    %c0_66 = arith.constant 0 : index
    %c0_67 = arith.constant 0 : index
    %77 = vector.load %arg8[%c0_64, %c3_65, %c0_66, %c0_67] : memref<3x4x2x2xbf16, #tpu.memory_space<vmem>>, vector<1x1x2x2xbf16>
    %78 = vector.shape_cast %77 : vector<1x1x2x2xbf16> to vector<2x2xbf16>
    %cst_68 = arith.constant dense<0.000000e+00> : vector<16x2xf32>
    %79 = tpu.matmul %76, %78, %cst_68 {dimension_numbers = #tpu.dot_dimension_numbers<[1], [0], [0], [1], [0, 0, 1, 1], [], []>} : vector<16x2xbf16>, vector<2x2xbf16>, vector<16x2xf32> -> vector<16x2xf32>
    %80 = arith.addf %74, %79 : vector<16x2xf32>
    %c0_69 = arith.constant 0 : index
    %c0_70 = arith.constant 0 : index
    %c0_71 = arith.constant 0 : index
    %81 = vector.load %arg9[%c0_69, %c0_70, %c0_71] : memref<3x1x2xf32, #tpu.memory_space<vmem>>, vector<1x1x2xf32>
    %82 = vector.shape_cast %81 : vector<1x1x2xf32> to vector<1x2xf32>
    %83 = vector.broadcast %82 : vector<1x2xf32> to vector<16x2xf32>
    %84 = arith.mulf %80, %83 : vector<16x2xf32>
    %c0_72 = arith.constant 0 : index
    %c0_73 = arith.constant 0 : index
    %c0_74 = arith.constant 0 : index
    %85 = vector.load %arg10[%c0_72, %c0_73, %c0_74] : memref<3x1x2xf32, #tpu.memory_space<vmem>>, vector<1x1x2xf32>
    %86 = vector.shape_cast %85 : vector<1x1x2xf32> to vector<1x2xf32>
    %87 = vector.broadcast %86 : vector<1x2xf32> to vector<16x2xf32>
    %88 = arith.addf %84, %87 : vector<16x2xf32>
    %c1_75 = arith.constant 1 : index
    %c0_76 = arith.constant 0 : index
    %c0_77 = arith.constant 0 : index
    %89 = vector.load %arg5[%c1_75, %c0_76, %c0_77] : memref<3x8x2xbf16, #tpu.memory_space<vmem>>, vector<1x8x2xbf16>
    %90 = vector.shape_cast %89 : vector<1x8x2xbf16> to vector<8x2xbf16>
    %cst_78 = arith.constant dense<0.000000e+00> : vector<16x2xf32>
    %91 = tpu.matmul %36, %90, %cst_78 {dimension_numbers = #tpu.dot_dimension_numbers<[1], [0], [0], [1], [0, 0, 1, 1], [], []>} : vector<16x8xbf16>, vector<8x2xbf16>, vector<16x2xf32> -> vector<16x2xf32>
    %c1_79 = arith.constant 1 : index
    %c0_80 = arith.constant 0 : index
    %c0_81 = arith.constant 0 : index
    %92 = vector.load %arg6[%c1_79, %c0_80, %c0_81] : memref<3x1x2xf32, #tpu.memory_space<vmem>>, vector<1x1x2xf32>
    %93 = vector.shape_cast %92 : vector<1x1x2xf32> to vector<1x2xf32>
    %94 = vector.broadcast %93 : vector<1x2xf32> to vector<16x2xf32>
    %95 = arith.mulf %91, %94 : vector<16x2xf32>
    %c1_82 = arith.constant 1 : index
    %c0_83 = arith.constant 0 : index
    %c0_84 = arith.constant 0 : index
    %96 = vector.load %arg7[%c1_82, %c0_83, %c0_84] : memref<3x1x2xf32, #tpu.memory_space<vmem>>, vector<1x1x2xf32>
    %97 = vector.shape_cast %96 : vector<1x1x2xf32> to vector<1x2xf32>
    %98 = vector.broadcast %97 : vector<1x2xf32> to vector<16x2xf32>
    %99 = arith.addf %95, %98 : vector<16x2xf32>
    %cst_85 = arith.constant 0.000000e+00 : f32
    %100 = vector.broadcast %cst_85 : f32 to vector<16x2xf32>
    %101 = arith.cmpf oge, %99, %100 : vector<16x2xf32>
    %cst_86 = arith.constant 2.000000e-01 : f32
    %102 = vector.broadcast %cst_86 : f32 to vector<16x2xf32>
    %103 = arith.mulf %102, %99 : vector<16x2xf32>
    %104 = arith.select %101, %99, %103 : vector<16x2xi1>, vector<16x2xf32>
    %cst_87 = arith.constant 0.000000e+00 : f32
    %105 = vector.broadcast %cst_87 : f32 to vector<6x2xf32>
    %cst_88 = arith.constant 0.000000e+00 : f32
    %106 = vector.broadcast %cst_88 : f32 to vector<6x2xf32>
    %107 = tpu.concatenate %105, %104, %106 in 0 : vector<6x2xf32>, vector<16x2xf32>, vector<6x2xf32> -> vector<28x2xf32>
    %cst_89 = arith.constant 0.000000e+00 : f32
    %108 = vector.broadcast %cst_89 : f32 to vector<16x2xf32>
    %109 = vector.extract_strided_slice %107 {offsets = [0, 0], sizes = [16, 2], strides = [1, 1]} : vector<28x2xf32> to vector<16x2xf32>
    %110 = arith.truncf %109 : vector<16x2xf32> to vector<16x2xbf16>
    %c1_90 = arith.constant 1 : index
    %c0_91 = arith.constant 0 : index
    %c0_92 = arith.constant 0 : index
    %c0_93 = arith.constant 0 : index
    %111 = vector.load %arg8[%c1_90, %c0_91, %c0_92, %c0_93] : memref<3x4x2x2xbf16, #tpu.memory_space<vmem>>, vector<1x1x2x2xbf16>
    %112 = vector.shape_cast %111 : vector<1x1x2x2xbf16> to vector<2x2xbf16>
    %cst_94 = arith.constant dense<0.000000e+00> : vector<16x2xf32>
    %113 = tpu.matmul %110, %112, %cst_94 {dimension_numbers = #tpu.dot_dimension_numbers<[1], [0], [0], [1], [0, 0, 1, 1], [], []>} : vector<16x2xbf16>, vector<2x2xbf16>, vector<16x2xf32> -> vector<16x2xf32>
    %114 = arith.addf %108, %113 : vector<16x2xf32>
    %115 = vector.extract_strided_slice %107 {offsets = [4, 0], sizes = [16, 2], strides = [1, 1]} : vector<28x2xf32> to vector<16x2xf32>
    %116 = arith.truncf %115 : vector<16x2xf32> to vector<16x2xbf16>
    %c1_95 = arith.constant 1 : index
    %c1_96 = arith.constant 1 : index
    %c0_97 = arith.constant 0 : index
    %c0_98 = arith.constant 0 : index
    %117 = vector.load %arg8[%c1_95, %c1_96, %c0_97, %c0_98] : memref<3x4x2x2xbf16, #tpu.memory_space<vmem>>, vector<1x1x2x2xbf16>
    %118 = vector.shape_cast %117 : vector<1x1x2x2xbf16> to vector<2x2xbf16>
    %cst_99 = arith.constant dense<0.000000e+00> : vector<16x2xf32>
    %119 = tpu.matmul %116, %118, %cst_99 {dimension_numbers = #tpu.dot_dimension_numbers<[1], [0], [0], [1], [0, 0, 1, 1], [], []>} : vector<16x2xbf16>, vector<2x2xbf16>, vector<16x2xf32> -> vector<16x2xf32>
    %120 = arith.addf %114, %119 : vector<16x2xf32>
    %121 = vector.extract_strided_slice %107 {offsets = [8, 0], sizes = [16, 2], strides = [1, 1]} : vector<28x2xf32> to vector<16x2xf32>
    %122 = arith.truncf %121 : vector<16x2xf32> to vector<16x2xbf16>
    %c1_100 = arith.constant 1 : index
    %c2_101 = arith.constant 2 : index
    %c0_102 = arith.constant 0 : index
    %c0_103 = arith.constant 0 : index
    %123 = vector.load %arg8[%c1_100, %c2_101, %c0_102, %c0_103] : memref<3x4x2x2xbf16, #tpu.memory_space<vmem>>, vector<1x1x2x2xbf16>
    %124 = vector.shape_cast %123 : vector<1x1x2x2xbf16> to vector<2x2xbf16>
    %cst_104 = arith.constant dense<0.000000e+00> : vector<16x2xf32>
    %125 = tpu.matmul %122, %124, %cst_104 {dimension_numbers = #tpu.dot_dimension_numbers<[1], [0], [0], [1], [0, 0, 1, 1], [], []>} : vector<16x2xbf16>, vector<2x2xbf16>, vector<16x2xf32> -> vector<16x2xf32>
    %126 = arith.addf %120, %125 : vector<16x2xf32>
    %127 = vector.extract_strided_slice %107 {offsets = [12, 0], sizes = [16, 2], strides = [1, 1]} : vector<28x2xf32> to vector<16x2xf32>
    %128 = arith.truncf %127 : vector<16x2xf32> to vector<16x2xbf16>
    %c1_105 = arith.constant 1 : index
    %c3_106 = arith.constant 3 : index
    %c0_107 = arith.constant 0 : index
    %c0_108 = arith.constant 0 : index
    %129 = vector.load %arg8[%c1_105, %c3_106, %c0_107, %c0_108] : memref<3x4x2x2xbf16, #tpu.memory_space<vmem>>, vector<1x1x2x2xbf16>
    %130 = vector.shape_cast %129 : vector<1x1x2x2xbf16> to vector<2x2xbf16>
    %cst_109 = arith.constant dense<0.000000e+00> : vector<16x2xf32>
    %131 = tpu.matmul %128, %130, %cst_109 {dimension_numbers = #tpu.dot_dimension_numbers<[1], [0], [0], [1], [0, 0, 1, 1], [], []>} : vector<16x2xbf16>, vector<2x2xbf16>, vector<16x2xf32> -> vector<16x2xf32>
    %132 = arith.addf %126, %131 : vector<16x2xf32>
    %c1_110 = arith.constant 1 : index
    %c0_111 = arith.constant 0 : index
    %c0_112 = arith.constant 0 : index
    %133 = vector.load %arg9[%c1_110, %c0_111, %c0_112] : memref<3x1x2xf32, #tpu.memory_space<vmem>>, vector<1x1x2xf32>
    %134 = vector.shape_cast %133 : vector<1x1x2xf32> to vector<1x2xf32>
    %135 = vector.broadcast %134 : vector<1x2xf32> to vector<16x2xf32>
    %136 = arith.mulf %132, %135 : vector<16x2xf32>
    %c1_113 = arith.constant 1 : index
    %c0_114 = arith.constant 0 : index
    %c0_115 = arith.constant 0 : index
    %137 = vector.load %arg10[%c1_113, %c0_114, %c0_115] : memref<3x1x2xf32, #tpu.memory_space<vmem>>, vector<1x1x2xf32>
    %138 = vector.shape_cast %137 : vector<1x1x2xf32> to vector<1x2xf32>
    %139 = vector.broadcast %138 : vector<1x2xf32> to vector<16x2xf32>
    %140 = arith.addf %136, %139 : vector<16x2xf32>
    %c2_116 = arith.constant 2 : index
    %c0_117 = arith.constant 0 : index
    %c0_118 = arith.constant 0 : index
    %141 = vector.load %arg5[%c2_116, %c0_117, %c0_118] : memref<3x8x2xbf16, #tpu.memory_space<vmem>>, vector<1x8x2xbf16>
    %142 = vector.shape_cast %141 : vector<1x8x2xbf16> to vector<8x2xbf16>
    %cst_119 = arith.constant dense<0.000000e+00> : vector<16x2xf32>
    %143 = tpu.matmul %36, %142, %cst_119 {dimension_numbers = #tpu.dot_dimension_numbers<[1], [0], [0], [1], [0, 0, 1, 1], [], []>} : vector<16x8xbf16>, vector<8x2xbf16>, vector<16x2xf32> -> vector<16x2xf32>
    %c2_120 = arith.constant 2 : index
    %c0_121 = arith.constant 0 : index
    %c0_122 = arith.constant 0 : index
    %144 = vector.load %arg6[%c2_120, %c0_121, %c0_122] : memref<3x1x2xf32, #tpu.memory_space<vmem>>, vector<1x1x2xf32>
    %145 = vector.shape_cast %144 : vector<1x1x2xf32> to vector<1x2xf32>
    %146 = vector.broadcast %145 : vector<1x2xf32> to vector<16x2xf32>
    %147 = arith.mulf %143, %146 : vector<16x2xf32>
    %c2_123 = arith.constant 2 : index
    %c0_124 = arith.constant 0 : index
    %c0_125 = arith.constant 0 : index
    %148 = vector.load %arg7[%c2_123, %c0_124, %c0_125] : memref<3x1x2xf32, #tpu.memory_space<vmem>>, vector<1x1x2xf32>
    %149 = vector.shape_cast %148 : vector<1x1x2xf32> to vector<1x2xf32>
    %150 = vector.broadcast %149 : vector<1x2xf32> to vector<16x2xf32>
    %151 = arith.addf %147, %150 : vector<16x2xf32>
    %cst_126 = arith.constant 0.000000e+00 : f32
    %152 = vector.broadcast %cst_126 : f32 to vector<16x2xf32>
    %153 = arith.cmpf oge, %151, %152 : vector<16x2xf32>
    %cst_127 = arith.constant 2.000000e-01 : f32
    %154 = vector.broadcast %cst_127 : f32 to vector<16x2xf32>
    %155 = arith.mulf %154, %151 : vector<16x2xf32>
    %156 = arith.select %153, %151, %155 : vector<16x2xi1>, vector<16x2xf32>
    %cst_128 = arith.constant 0.000000e+00 : f32
    %157 = vector.broadcast %cst_128 : f32 to vector<3x2xf32>
    %cst_129 = arith.constant 0.000000e+00 : f32
    %158 = vector.broadcast %cst_129 : f32 to vector<3x2xf32>
    %159 = tpu.concatenate %157, %156, %158 in 0 : vector<3x2xf32>, vector<16x2xf32>, vector<3x2xf32> -> vector<22x2xf32>
    %cst_130 = arith.constant 0.000000e+00 : f32
    %160 = vector.broadcast %cst_130 : f32 to vector<16x2xf32>
    %161 = vector.extract_strided_slice %159 {offsets = [0, 0], sizes = [16, 2], strides = [1, 1]} : vector<22x2xf32> to vector<16x2xf32>
    %162 = arith.truncf %161 : vector<16x2xf32> to vector<16x2xbf16>
    %c2_131 = arith.constant 2 : index
    %c0_132 = arith.constant 0 : index
    %c0_133 = arith.constant 0 : index
    %c0_134 = arith.constant 0 : index
    %163 = vector.load %arg8[%c2_131, %c0_132, %c0_133, %c0_134] : memref<3x4x2x2xbf16, #tpu.memory_space<vmem>>, vector<1x1x2x2xbf16>
    %164 = vector.shape_cast %163 : vector<1x1x2x2xbf16> to vector<2x2xbf16>
    %cst_135 = arith.constant dense<0.000000e+00> : vector<16x2xf32>
    %165 = tpu.matmul %162, %164, %cst_135 {dimension_numbers = #tpu.dot_dimension_numbers<[1], [0], [0], [1], [0, 0, 1, 1], [], []>} : vector<16x2xbf16>, vector<2x2xbf16>, vector<16x2xf32> -> vector<16x2xf32>
    %166 = arith.addf %160, %165 : vector<16x2xf32>
    %167 = vector.extract_strided_slice %159 {offsets = [2, 0], sizes = [16, 2], strides = [1, 1]} : vector<22x2xf32> to vector<16x2xf32>
    %168 = arith.truncf %167 : vector<16x2xf32> to vector<16x2xbf16>
    %c2_136 = arith.constant 2 : index
    %c1_137 = arith.constant 1 : index
    %c0_138 = arith.constant 0 : index
    %c0_139 = arith.constant 0 : index
    %169 = vector.load %arg8[%c2_136, %c1_137, %c0_138, %c0_139] : memref<3x4x2x2xbf16, #tpu.memory_space<vmem>>, vector<1x1x2x2xbf16>
    %170 = vector.shape_cast %169 : vector<1x1x2x2xbf16> to vector<2x2xbf16>
    %cst_140 = arith.constant dense<0.000000e+00> : vector<16x2xf32>
    %171 = tpu.matmul %168, %170, %cst_140 {dimension_numbers = #tpu.dot_dimension_numbers<[1], [0], [0], [1], [0, 0, 1, 1], [], []>} : vector<16x2xbf16>, vector<2x2xbf16>, vector<16x2xf32> -> vector<16x2xf32>
    %172 = arith.addf %166, %171 : vector<16x2xf32>
    %173 = vector.extract_strided_slice %159 {offsets = [4, 0], sizes = [16, 2], strides = [1, 1]} : vector<22x2xf32> to vector<16x2xf32>
    %174 = arith.truncf %173 : vector<16x2xf32> to vector<16x2xbf16>
    %c2_141 = arith.constant 2 : index
    %c2_142 = arith.constant 2 : index
    %c0_143 = arith.constant 0 : index
    %c0_144 = arith.constant 0 : index
    %175 = vector.load %arg8[%c2_141, %c2_142, %c0_143, %c0_144] : memref<3x4x2x2xbf16, #tpu.memory_space<vmem>>, vector<1x1x2x2xbf16>
    %176 = vector.shape_cast %175 : vector<1x1x2x2xbf16> to vector<2x2xbf16>
    %cst_145 = arith.constant dense<0.000000e+00> : vector<16x2xf32>
    %177 = tpu.matmul %174, %176, %cst_145 {dimension_numbers = #tpu.dot_dimension_numbers<[1], [0], [0], [1], [0, 0, 1, 1], [], []>} : vector<16x2xbf16>, vector<2x2xbf16>, vector<16x2xf32> -> vector<16x2xf32>
    %178 = arith.addf %172, %177 : vector<16x2xf32>
    %179 = vector.extract_strided_slice %159 {offsets = [6, 0], sizes = [16, 2], strides = [1, 1]} : vector<22x2xf32> to vector<16x2xf32>
    %180 = arith.truncf %179 : vector<16x2xf32> to vector<16x2xbf16>
    %c2_146 = arith.constant 2 : index
    %c3_147 = arith.constant 3 : index
    %c0_148 = arith.constant 0 : index
    %c0_149 = arith.constant 0 : index
    %181 = vector.load %arg8[%c2_146, %c3_147, %c0_148, %c0_149] : memref<3x4x2x2xbf16, #tpu.memory_space<vmem>>, vector<1x1x2x2xbf16>
    %182 = vector.shape_cast %181 : vector<1x1x2x2xbf16> to vector<2x2xbf16>
    %cst_150 = arith.constant dense<0.000000e+00> : vector<16x2xf32>
    %183 = tpu.matmul %180, %182, %cst_150 {dimension_numbers = #tpu.dot_dimension_numbers<[1], [0], [0], [1], [0, 0, 1, 1], [], []>} : vector<16x2xbf16>, vector<2x2xbf16>, vector<16x2xf32> -> vector<16x2xf32>
    %184 = arith.addf %178, %183 : vector<16x2xf32>
    %c2_151 = arith.constant 2 : index
    %c0_152 = arith.constant 0 : index
    %c0_153 = arith.constant 0 : index
    %185 = vector.load %arg9[%c2_151, %c0_152, %c0_153] : memref<3x1x2xf32, #tpu.memory_space<vmem>>, vector<1x1x2xf32>
    %186 = vector.shape_cast %185 : vector<1x1x2xf32> to vector<1x2xf32>
    %187 = vector.broadcast %186 : vector<1x2xf32> to vector<16x2xf32>
    %188 = arith.mulf %184, %187 : vector<16x2xf32>
    %c2_154 = arith.constant 2 : index
    %c0_155 = arith.constant 0 : index
    %c0_156 = arith.constant 0 : index
    %189 = vector.load %arg10[%c2_154, %c0_155, %c0_156] : memref<3x1x2xf32, #tpu.memory_space<vmem>>, vector<1x1x2xf32>
    %190 = vector.shape_cast %189 : vector<1x1x2xf32> to vector<1x2xf32>
    %191 = vector.broadcast %190 : vector<1x2xf32> to vector<16x2xf32>
    %192 = arith.addf %188, %191 : vector<16x2xf32>
    %c0_157 = arith.constant 0 : index
    %c0_158 = arith.constant 0 : index
    %193 = vector.load %arg11[%c0_157, %c0_158] : memref<8x2xbf16, #tpu.memory_space<vmem>>, vector<8x2xbf16>
    %cst_159 = arith.constant dense<0.000000e+00> : vector<16x2xf32>
    %194 = tpu.matmul %36, %193, %cst_159 {dimension_numbers = #tpu.dot_dimension_numbers<[1], [0], [0], [1], [0, 0, 1, 1], [], []>} : vector<16x8xbf16>, vector<8x2xbf16>, vector<16x2xf32> -> vector<16x2xf32>
    %c0_160 = arith.constant 0 : index
    %c0_161 = arith.constant 0 : index
    %195 = vector.load %arg12[%c0_160, %c0_161] : memref<1x2xf32, #tpu.memory_space<vmem>>, vector<1x2xf32>
    %196 = vector.broadcast %195 : vector<1x2xf32> to vector<16x2xf32>
    %197 = arith.mulf %194, %196 : vector<16x2xf32>
    %c0_162 = arith.constant 0 : index
    %c0_163 = arith.constant 0 : index
    %198 = vector.load %arg13[%c0_162, %c0_163] : memref<1x2xf32, #tpu.memory_space<vmem>>, vector<1x2xf32>
    %199 = vector.broadcast %198 : vector<1x2xf32> to vector<16x2xf32>
    %200 = arith.addf %197, %199 : vector<16x2xf32>
    %201 = tpu.concatenate %88, %140, %192, %200 in 1 : vector<16x2xf32>, vector<16x2xf32>, vector<16x2xf32>, vector<16x2xf32> -> vector<16x8xf32>
    %202 = arith.addf %201, %35 : vector<16x8xf32>
    %cst_164 = arith.constant 0.000000e+00 : f32
    %203 = vector.broadcast %cst_164 : f32 to vector<16x8xf32>
    %204 = arith.cmpf oge, %202, %203 : vector<16x8xf32>
    %cst_165 = arith.constant 2.000000e-01 : f32
    %205 = vector.broadcast %cst_165 : f32 to vector<16x8xf32>
    %206 = arith.mulf %205, %202 : vector<16x8xf32>
    %207 = arith.select %204, %202, %206 : vector<16x8xi1>, vector<16x8xf32>
    %208 = arith.truncf %207 : vector<16x8xf32> to vector<16x8xbf16>
    %c0_166 = arith.constant 0 : index
    %c0_167 = arith.constant 0 : index
    %c0_168 = arith.constant 0 : index
    %209 = vector.load %arg14[%c0_166, %c0_167, %c0_168] : memref<1x16x8xbf16, #tpu.memory_space<vmem>>, vector<1x16x8xbf16>
    %210 = vector.shape_cast %209 : vector<1x16x8xbf16> to vector<16x8xbf16>
    %211 = vector.shape_cast %208 : vector<16x8xbf16> to vector<1x16x8xbf16>
    tpu.vector_store %arg14[%c0_166, %c0_167, %c0_168], %211 {strides = array<i32>} : memref<1x16x8xbf16, #tpu.memory_space<vmem>>, vector<1x16x8xbf16>,
    return
  }
  func.func @transform_0(%arg0: i32) -> (i32, i32, i32, i32) {
    %c0_i32 = arith.constant 0 : i32
    %c0_i32_0 = arith.constant 0 : i32
    %c0_i32_1 = arith.constant 0 : i32
    %c0_i32_2 = arith.constant 0 : i32
    return %arg0, %c0_i32, %c0_i32_0, %c0_i32_1 : i32, i32, i32, i32
  }
  func.func @transform_1(%arg0: i32) -> (i32, i32, i32) {
    %c0_i32 = arith.constant 0 : i32
    %c0_i32_0 = arith.constant 0 : i32
    %c0_i32_1 = arith.constant 0 : i32
    %c0_i32_2 = arith.constant 0 : i32
    return %c0_i32, %c0_i32_0, %c0_i32_1 : i32, i32, i32
  }
  func.func @transform_2(%arg0: i32) -> (i32, i32) {
    %c0_i32 = arith.constant 0 : i32
    %c0_i32_0 = arith.constant 0 : i32
    %c0_i32_1 = arith.constant 0 : i32
    return %c0_i32, %c0_i32_0 : i32, i32
  }
  func.func @transform_3(%arg0: i32) -> (i32, i32) {
    %c0_i32 = arith.constant 0 : i32
    %c0_i32_0 = arith.constant 0 : i32
    %c0_i32_1 = arith.constant 0 : i32
    return %c0_i32, %c0_i32_0 : i32, i32
  }
  func.func @transform_4(%arg0: i32) -> (i32, i32, i32) {
    %c0_i32 = arith.constant 0 : i32
    %c0_i32_0 = arith.constant 0 : i32
    %c0_i32_1 = arith.constant 0 : i32
    %c0_i32_2 = arith.constant 0 : i32
    return %c0_i32, %c0_i32_0, %c0_i32_1 : i32, i32, i32
  }
  func.func @transform_5(%arg0: i32) -> (i32, i32, i32) {
    %c0_i32 = arith.constant 0 : i32
    %c0_i32_0 = arith.constant 0 : i32
    %c0_i32_1 = arith.constant 0 : i32
    %c0_i32_2 = arith.constant 0 : i32
    return %c0_i32, %c0_i32_0, %c0_i32_1 : i32, i32, i32
  }
  func.func @transform_6(%arg0: i32) -> (i32, i32, i32) {
    %c0_i32 = arith.constant 0 : i32
    %c0_i32_0 = arith.constant 0 : i32
    %c0_i32_1 = arith.constant 0 : i32
    %c0_i32_2 = arith.constant 0 : i32
    return %c0_i32, %c0_i32_0, %c0_i32_1 : i32, i32, i32
  }
  func.func @transform_7(%arg0: i32) -> (i32, i32, i32, i32) {
    %c0_i32 = arith.constant 0 : i32
    %c0_i32_0 = arith.constant 0 : i32
    %c0_i32_1 = arith.constant 0 : i32
    %c0_i32_2 = arith.constant 0 : i32
    %c0_i32_3 = arith.constant 0 : i32
    return %c0_i32, %c0_i32_0, %c0_i32_1, %c0_i32_2 : i32, i32, i32, i32
  }
  func.func @transform_8(%arg0: i32) -> (i32, i32, i32) {
    %c0_i32 = arith.constant 0 : i32
    %c0_i32_0 = arith.constant 0 : i32
    %c0_i32_1 = arith.constant 0 : i32
    %c0_i32_2 = arith.constant 0 : i32
    return %c0_i32, %c0_i32_0, %c0_i32_1 : i32, i32, i32
  }
  func.func @transform_9(%arg0: i32) -> (i32, i32, i32) {
    %c0_i32 = arith.constant 0 : i32
    %c0_i32_0 = arith.constant 0 : i32
    %c0_i32_1 = arith.constant 0 : i32
    %c0_i32_2 = arith.constant 0 : i32
    return %c0_i32, %c0_i32_0, %c0_i32_1 : i32, i32, i32
  }
  func.func @transform_10(%arg0: i32) -> (i32, i32) {
    %c0_i32 = arith.constant 0 : i32
    %c0_i32_0 = arith.constant 0 : i32
    %c0_i32_1 = arith.constant 0 : i32
    return %c0_i32, %c0_i32_0 : i32, i32
  }
  func.func @transform_11(%arg0: i32) -> (i32, i32) {
    %c0_i32 = arith.constant 0 : i32
    %c0_i32_0 = arith.constant 0 : i32
    %c0_i32_1 = arith.constant 0 : i32
    return %c0_i32, %c0_i32_0 : i32, i32
  }
  func.func @transform_12(%arg0: i32) -> (i32, i32) {
    %c0_i32 = arith.constant 0 : i32
    %c0_i32_0 = arith.constant 0 : i32
    %c0_i32_1 = arith.constant 0 : i32
    return %c0_i32, %c0_i32_0 : i32, i32
  }
  func.func @transform_13(%arg0: i32) -> (i32, i32, i32) {
    %c0_i32 = arith.constant 0 : i32
    %c0_i32_0 = arith.constant 0 : i32
    %c0_i32_1 = arith.constant 0 : i32
    return %arg0, %c0_i32, %c0_i32_0 : i32, i32, i32
  }
}

module attributes {stable_mosaic.version = 11 : i64} {
  func.func @_encoder_stage_kernel(%arg0: i32, %arg1: memref<1x2x9x8xbf16, #tpu.memory_space<vmem>>, %arg2: memref<4x8x16xbf16, #tpu.memory_space<vmem>>, %arg3: memref<1x16xf32, #tpu.memory_space<vmem>>, %arg4: memref<1x16xf32, #tpu.memory_space<vmem>>, %arg5: memref<3x16x4xbf16, #tpu.memory_space<vmem>>, %arg6: memref<3x1x4xf32, #tpu.memory_space<vmem>>, %arg7: memref<3x1x4xf32, #tpu.memory_space<vmem>>, %arg8: memref<3x4x4x4xbf16, #tpu.memory_space<vmem>>, %arg9: memref<3x1x4xf32, #tpu.memory_space<vmem>>, %arg10: memref<3x1x4xf32, #tpu.memory_space<vmem>>, %arg11: memref<16x4xbf16, #tpu.memory_space<vmem>>, %arg12: memref<1x4xf32, #tpu.memory_space<vmem>>, %arg13: memref<1x4xf32, #tpu.memory_space<vmem>>, %arg14: memref<1x8x16xbf16, #tpu.memory_space<vmem>>) attributes {dimension_semantics = [#tpu.dimension_semantics<parallel>], iteration_bounds = array<i64: 2>, scalar_prefetch = 0 : i64, scratch_operands = 0 : i64, tpu.core_type = #tpu.core_type<tc>, window_params = [{transform_indices = @transform_0, window_bounds = array<i64: 1, 2, 9, 8>}, {pipeline_mode = #tpu.pipeline_mode<synchronous>, transform_indices = @transform_1, window_bounds = array<i64: 4, 8, 16>}, {pipeline_mode = #tpu.pipeline_mode<synchronous>, transform_indices = @transform_2, window_bounds = array<i64: 1, 16>}, {pipeline_mode = #tpu.pipeline_mode<synchronous>, transform_indices = @transform_3, window_bounds = array<i64: 1, 16>}, {pipeline_mode = #tpu.pipeline_mode<synchronous>, transform_indices = @transform_4, window_bounds = array<i64: 3, 16, 4>}, {pipeline_mode = #tpu.pipeline_mode<synchronous>, transform_indices = @transform_5, window_bounds = array<i64: 3, 1, 4>}, {pipeline_mode = #tpu.pipeline_mode<synchronous>, transform_indices = @transform_6, window_bounds = array<i64: 3, 1, 4>}, {pipeline_mode = #tpu.pipeline_mode<synchronous>, transform_indices = @transform_7, window_bounds = array<i64: 3, 4, 4, 4>}, {pipeline_mode = #tpu.pipeline_mode<synchronous>, transform_indices = @transform_8, window_bounds = array<i64: 3, 1, 4>}, {pipeline_mode = #tpu.pipeline_mode<synchronous>, transform_indices = @transform_9, window_bounds = array<i64: 3, 1, 4>}, {pipeline_mode = #tpu.pipeline_mode<synchronous>, transform_indices = @transform_10, window_bounds = array<i64: 16, 4>}, {pipeline_mode = #tpu.pipeline_mode<synchronous>, transform_indices = @transform_11, window_bounds = array<i64: 1, 4>}, {pipeline_mode = #tpu.pipeline_mode<synchronous>, transform_indices = @transform_12, window_bounds = array<i64: 1, 4>}, {transform_indices = @transform_13, window_bounds = array<i64: 1, 8, 16>}]} {
    %cst = arith.constant 0.000000e+00 : f32
    %0 = vector.broadcast %cst : f32 to vector<8x16xf32>
    %c0 = arith.constant 0 : index
    %c0_0 = arith.constant 0 : index
    %c0_1 = arith.constant 0 : index
    %c0_2 = arith.constant 0 : index
    %1 = vector.load %arg1[%c0, %c0_0, %c0_1, %c0_2] : memref<1x2x9x8xbf16, #tpu.memory_space<vmem>>, vector<1x1x8x8xbf16>
    %2 = vector.shape_cast %1 : vector<1x1x8x8xbf16> to vector<8x8xbf16>
    %c0_3 = arith.constant 0 : index
    %c0_4 = arith.constant 0 : index
    %c0_5 = arith.constant 0 : index
    %3 = vector.load %arg2[%c0_3, %c0_4, %c0_5] : memref<4x8x16xbf16, #tpu.memory_space<vmem>>, vector<1x8x16xbf16>
    %4 = vector.shape_cast %3 : vector<1x8x16xbf16> to vector<8x16xbf16>
    %cst_6 = arith.constant dense<0.000000e+00> : vector<8x16xf32>
    %5 = tpu.matmul %2, %4, %cst_6 {dimension_numbers = #tpu.dot_dimension_numbers<[1], [0], [0], [1], [0, 0, 1, 1], [], []>} : vector<8x8xbf16>, vector<8x16xbf16>, vector<8x16xf32> -> vector<8x16xf32>
    %6 = arith.addf %0, %5 : vector<8x16xf32>
    %c0_7 = arith.constant 0 : index
    %c1 = arith.constant 1 : index
    %c0_8 = arith.constant 0 : index
    %c0_9 = arith.constant 0 : index
    %7 = vector.load %arg1[%c0_7, %c1, %c0_8, %c0_9] : memref<1x2x9x8xbf16, #tpu.memory_space<vmem>>, vector<1x1x8x8xbf16>
    %8 = vector.shape_cast %7 : vector<1x1x8x8xbf16> to vector<8x8xbf16>
    %c1_10 = arith.constant 1 : index
    %c0_11 = arith.constant 0 : index
    %c0_12 = arith.constant 0 : index
    %9 = vector.load %arg2[%c1_10, %c0_11, %c0_12] : memref<4x8x16xbf16, #tpu.memory_space<vmem>>, vector<1x8x16xbf16>
    %10 = vector.shape_cast %9 : vector<1x8x16xbf16> to vector<8x16xbf16>
    %cst_13 = arith.constant dense<0.000000e+00> : vector<8x16xf32>
    %11 = tpu.matmul %8, %10, %cst_13 {dimension_numbers = #tpu.dot_dimension_numbers<[1], [0], [0], [1], [0, 0, 1, 1], [], []>} : vector<8x8xbf16>, vector<8x16xbf16>, vector<8x16xf32> -> vector<8x16xf32>
    %12 = arith.addf %6, %11 : vector<8x16xf32>
    %c0_14 = arith.constant 0 : index
    %c0_15 = arith.constant 0 : index
    %c1_16 = arith.constant 1 : index
    %c0_17 = arith.constant 0 : index
    %13 = vector.load %arg1[%c0_14, %c0_15, %c1_16, %c0_17] : memref<1x2x9x8xbf16, #tpu.memory_space<vmem>>, vector<1x1x8x8xbf16>
    %14 = vector.shape_cast %13 : vector<1x1x8x8xbf16> to vector<8x8xbf16>
    %c2 = arith.constant 2 : index
    %c0_18 = arith.constant 0 : index
    %c0_19 = arith.constant 0 : index
    %15 = vector.load %arg2[%c2, %c0_18, %c0_19] : memref<4x8x16xbf16, #tpu.memory_space<vmem>>, vector<1x8x16xbf16>
    %16 = vector.shape_cast %15 : vector<1x8x16xbf16> to vector<8x16xbf16>
    %cst_20 = arith.constant dense<0.000000e+00> : vector<8x16xf32>
    %17 = tpu.matmul %14, %16, %cst_20 {dimension_numbers = #tpu.dot_dimension_numbers<[1], [0], [0], [1], [0, 0, 1, 1], [], []>} : vector<8x8xbf16>, vector<8x16xbf16>, vector<8x16xf32> -> vector<8x16xf32>
    %18 = arith.addf %12, %17 : vector<8x16xf32>
    %c0_21 = arith.constant 0 : index
    %c1_22 = arith.constant 1 : index
    %c1_23 = arith.constant 1 : index
    %c0_24 = arith.constant 0 : index
    %19 = vector.load %arg1[%c0_21, %c1_22, %c1_23, %c0_24] : memref<1x2x9x8xbf16, #tpu.memory_space<vmem>>, vector<1x1x8x8xbf16>
    %20 = vector.shape_cast %19 : vector<1x1x8x8xbf16> to vector<8x8xbf16>
    %c3 = arith.constant 3 : index
    %c0_25 = arith.constant 0 : index
    %c0_26 = arith.constant 0 : index
    %21 = vector.load %arg2[%c3, %c0_25, %c0_26] : memref<4x8x16xbf16, #tpu.memory_space<vmem>>, vector<1x8x16xbf16>
    %22 = vector.shape_cast %21 : vector<1x8x16xbf16> to vector<8x16xbf16>
    %cst_27 = arith.constant dense<0.000000e+00> : vector<8x16xf32>
    %23 = tpu.matmul %20, %22, %cst_27 {dimension_numbers = #tpu.dot_dimension_numbers<[1], [0], [0], [1], [0, 0, 1, 1], [], []>} : vector<8x8xbf16>, vector<8x16xbf16>, vector<8x16xf32> -> vector<8x16xf32>
    %24 = arith.addf %18, %23 : vector<8x16xf32>
    %c0_28 = arith.constant 0 : index
    %c0_29 = arith.constant 0 : index
    %25 = vector.load %arg3[%c0_28, %c0_29] : memref<1x16xf32, #tpu.memory_space<vmem>>, vector<1x16xf32>
    %26 = vector.broadcast %25 : vector<1x16xf32> to vector<8x16xf32>
    %27 = arith.mulf %24, %26 : vector<8x16xf32>
    %c0_30 = arith.constant 0 : index
    %c0_31 = arith.constant 0 : index
    %28 = vector.load %arg4[%c0_30, %c0_31] : memref<1x16xf32, #tpu.memory_space<vmem>>, vector<1x16xf32>
    %29 = vector.broadcast %28 : vector<1x16xf32> to vector<8x16xf32>
    %30 = arith.addf %27, %29 : vector<8x16xf32>
    %cst_32 = arith.constant 0.000000e+00 : f32
    %31 = vector.broadcast %cst_32 : f32 to vector<8x16xf32>
    %32 = arith.cmpf oge, %30, %31 : vector<8x16xf32>
    %cst_33 = arith.constant 2.000000e-01 : f32
    %33 = vector.broadcast %cst_33 : f32 to vector<8x16xf32>
    %34 = arith.mulf %33, %30 : vector<8x16xf32>
    %35 = arith.select %32, %30, %34 : vector<8x16xi1>, vector<8x16xf32>
    %36 = arith.truncf %35 : vector<8x16xf32> to vector<8x16xbf16>
    %c0_34 = arith.constant 0 : index
    %c0_35 = arith.constant 0 : index
    %c0_36 = arith.constant 0 : index
    %37 = vector.load %arg5[%c0_34, %c0_35, %c0_36] : memref<3x16x4xbf16, #tpu.memory_space<vmem>>, vector<1x16x4xbf16>
    %38 = vector.shape_cast %37 : vector<1x16x4xbf16> to vector<16x4xbf16>
    %cst_37 = arith.constant dense<0.000000e+00> : vector<8x4xf32>
    %39 = tpu.matmul %36, %38, %cst_37 {dimension_numbers = #tpu.dot_dimension_numbers<[1], [0], [0], [1], [0, 0, 1, 1], [], []>} : vector<8x16xbf16>, vector<16x4xbf16>, vector<8x4xf32> -> vector<8x4xf32>
    %c0_38 = arith.constant 0 : index
    %c0_39 = arith.constant 0 : index
    %c0_40 = arith.constant 0 : index
    %40 = vector.load %arg6[%c0_38, %c0_39, %c0_40] : memref<3x1x4xf32, #tpu.memory_space<vmem>>, vector<1x1x4xf32>
    %41 = vector.shape_cast %40 : vector<1x1x4xf32> to vector<1x4xf32>
    %42 = vector.broadcast %41 : vector<1x4xf32> to vector<8x4xf32>
    %43 = arith.mulf %39, %42 : vector<8x4xf32>
    %c0_41 = arith.constant 0 : index
    %c0_42 = arith.constant 0 : index
    %c0_43 = arith.constant 0 : index
    %44 = vector.load %arg7[%c0_41, %c0_42, %c0_43] : memref<3x1x4xf32, #tpu.memory_space<vmem>>, vector<1x1x4xf32>
    %45 = vector.shape_cast %44 : vector<1x1x4xf32> to vector<1x4xf32>
    %46 = vector.broadcast %45 : vector<1x4xf32> to vector<8x4xf32>
    %47 = arith.addf %43, %46 : vector<8x4xf32>
    %cst_44 = arith.constant 0.000000e+00 : f32
    %48 = vector.broadcast %cst_44 : f32 to vector<8x4xf32>
    %49 = arith.cmpf oge, %47, %48 : vector<8x4xf32>
    %cst_45 = arith.constant 2.000000e-01 : f32
    %50 = vector.broadcast %cst_45 : f32 to vector<8x4xf32>
    %51 = arith.mulf %50, %47 : vector<8x4xf32>
    %52 = arith.select %49, %47, %51 : vector<8x4xi1>, vector<8x4xf32>
    %cst_46 = arith.constant 0.000000e+00 : f32
    %53 = vector.broadcast %cst_46 : f32 to vector<12x4xf32>
    %cst_47 = arith.constant 0.000000e+00 : f32
    %54 = vector.broadcast %cst_47 : f32 to vector<12x4xf32>
    %55 = tpu.concatenate %53, %52, %54 in 0 : vector<12x4xf32>, vector<8x4xf32>, vector<12x4xf32> -> vector<32x4xf32>
    %cst_48 = arith.constant 0.000000e+00 : f32
    %56 = vector.broadcast %cst_48 : f32 to vector<8x4xf32>
    %57 = vector.extract_strided_slice %55 {offsets = [0, 0], sizes = [8, 4], strides = [1, 1]} : vector<32x4xf32> to vector<8x4xf32>
    %58 = arith.truncf %57 : vector<8x4xf32> to vector<8x4xbf16>
    %c0_49 = arith.constant 0 : index
    %c0_50 = arith.constant 0 : index
    %c0_51 = arith.constant 0 : index
    %c0_52 = arith.constant 0 : index
    %59 = vector.load %arg8[%c0_49, %c0_50, %c0_51, %c0_52] : memref<3x4x4x4xbf16, #tpu.memory_space<vmem>>, vector<1x1x4x4xbf16>
    %60 = vector.shape_cast %59 : vector<1x1x4x4xbf16> to vector<4x4xbf16>
    %cst_53 = arith.constant dense<0.000000e+00> : vector<8x4xf32>
    %61 = tpu.matmul %58, %60, %cst_53 {dimension_numbers = #tpu.dot_dimension_numbers<[1], [0], [0], [1], [0, 0, 1, 1], [], []>} : vector<8x4xbf16>, vector<4x4xbf16>, vector<8x4xf32> -> vector<8x4xf32>
    %62 = arith.addf %56, %61 : vector<8x4xf32>
    %63 = vector.extract_strided_slice %55 {offsets = [8, 0], sizes = [8, 4], strides = [1, 1]} : vector<32x4xf32> to vector<8x4xf32>
    %64 = arith.truncf %63 : vector<8x4xf32> to vector<8x4xbf16>
    %c0_54 = arith.constant 0 : index
    %c1_55 = arith.constant 1 : index
    %c0_56 = arith.constant 0 : index
    %c0_57 = arith.constant 0 : index
    %65 = vector.load %arg8[%c0_54, %c1_55, %c0_56, %c0_57] : memref<3x4x4x4xbf16, #tpu.memory_space<vmem>>, vector<1x1x4x4xbf16>
    %66 = vector.shape_cast %65 : vector<1x1x4x4xbf16> to vector<4x4xbf16>
    %cst_58 = arith.constant dense<0.000000e+00> : vector<8x4xf32>
    %67 = tpu.matmul %64, %66, %cst_58 {dimension_numbers = #tpu.dot_dimension_numbers<[1], [0], [0], [1], [0, 0, 1, 1], [], []>} : vector<8x4xbf16>, vector<4x4xbf16>, vector<8x4xf32> -> vector<8x4xf32>
    %68 = arith.addf %62, %67 : vector<8x4xf32>
    %69 = vector.extract_strided_slice %55 {offsets = [16, 0], sizes = [8, 4], strides = [1, 1]} : vector<32x4xf32> to vector<8x4xf32>
    %70 = arith.truncf %69 : vector<8x4xf32> to vector<8x4xbf16>
    %c0_59 = arith.constant 0 : index
    %c2_60 = arith.constant 2 : index
    %c0_61 = arith.constant 0 : index
    %c0_62 = arith.constant 0 : index
    %71 = vector.load %arg8[%c0_59, %c2_60, %c0_61, %c0_62] : memref<3x4x4x4xbf16, #tpu.memory_space<vmem>>, vector<1x1x4x4xbf16>
    %72 = vector.shape_cast %71 : vector<1x1x4x4xbf16> to vector<4x4xbf16>
    %cst_63 = arith.constant dense<0.000000e+00> : vector<8x4xf32>
    %73 = tpu.matmul %70, %72, %cst_63 {dimension_numbers = #tpu.dot_dimension_numbers<[1], [0], [0], [1], [0, 0, 1, 1], [], []>} : vector<8x4xbf16>, vector<4x4xbf16>, vector<8x4xf32> -> vector<8x4xf32>
    %74 = arith.addf %68, %73 : vector<8x4xf32>
    %75 = vector.extract_strided_slice %55 {offsets = [24, 0], sizes = [8, 4], strides = [1, 1]} : vector<32x4xf32> to vector<8x4xf32>
    %76 = arith.truncf %75 : vector<8x4xf32> to vector<8x4xbf16>
    %c0_64 = arith.constant 0 : index
    %c3_65 = arith.constant 3 : index
    %c0_66 = arith.constant 0 : index
    %c0_67 = arith.constant 0 : index
    %77 = vector.load %arg8[%c0_64, %c3_65, %c0_66, %c0_67] : memref<3x4x4x4xbf16, #tpu.memory_space<vmem>>, vector<1x1x4x4xbf16>
    %78 = vector.shape_cast %77 : vector<1x1x4x4xbf16> to vector<4x4xbf16>
    %cst_68 = arith.constant dense<0.000000e+00> : vector<8x4xf32>
    %79 = tpu.matmul %76, %78, %cst_68 {dimension_numbers = #tpu.dot_dimension_numbers<[1], [0], [0], [1], [0, 0, 1, 1], [], []>} : vector<8x4xbf16>, vector<4x4xbf16>, vector<8x4xf32> -> vector<8x4xf32>
    %80 = arith.addf %74, %79 : vector<8x4xf32>
    %c0_69 = arith.constant 0 : index
    %c0_70 = arith.constant 0 : index
    %c0_71 = arith.constant 0 : index
    %81 = vector.load %arg9[%c0_69, %c0_70, %c0_71] : memref<3x1x4xf32, #tpu.memory_space<vmem>>, vector<1x1x4xf32>
    %82 = vector.shape_cast %81 : vector<1x1x4xf32> to vector<1x4xf32>
    %83 = vector.broadcast %82 : vector<1x4xf32> to vector<8x4xf32>
    %84 = arith.mulf %80, %83 : vector<8x4xf32>
    %c0_72 = arith.constant 0 : index
    %c0_73 = arith.constant 0 : index
    %c0_74 = arith.constant 0 : index
    %85 = vector.load %arg10[%c0_72, %c0_73, %c0_74] : memref<3x1x4xf32, #tpu.memory_space<vmem>>, vector<1x1x4xf32>
    %86 = vector.shape_cast %85 : vector<1x1x4xf32> to vector<1x4xf32>
    %87 = vector.broadcast %86 : vector<1x4xf32> to vector<8x4xf32>
    %88 = arith.addf %84, %87 : vector<8x4xf32>
    %c1_75 = arith.constant 1 : index
    %c0_76 = arith.constant 0 : index
    %c0_77 = arith.constant 0 : index
    %89 = vector.load %arg5[%c1_75, %c0_76, %c0_77] : memref<3x16x4xbf16, #tpu.memory_space<vmem>>, vector<1x16x4xbf16>
    %90 = vector.shape_cast %89 : vector<1x16x4xbf16> to vector<16x4xbf16>
    %cst_78 = arith.constant dense<0.000000e+00> : vector<8x4xf32>
    %91 = tpu.matmul %36, %90, %cst_78 {dimension_numbers = #tpu.dot_dimension_numbers<[1], [0], [0], [1], [0, 0, 1, 1], [], []>} : vector<8x16xbf16>, vector<16x4xbf16>, vector<8x4xf32> -> vector<8x4xf32>
    %c1_79 = arith.constant 1 : index
    %c0_80 = arith.constant 0 : index
    %c0_81 = arith.constant 0 : index
    %92 = vector.load %arg6[%c1_79, %c0_80, %c0_81] : memref<3x1x4xf32, #tpu.memory_space<vmem>>, vector<1x1x4xf32>
    %93 = vector.shape_cast %92 : vector<1x1x4xf32> to vector<1x4xf32>
    %94 = vector.broadcast %93 : vector<1x4xf32> to vector<8x4xf32>
    %95 = arith.mulf %91, %94 : vector<8x4xf32>
    %c1_82 = arith.constant 1 : index
    %c0_83 = arith.constant 0 : index
    %c0_84 = arith.constant 0 : index
    %96 = vector.load %arg7[%c1_82, %c0_83, %c0_84] : memref<3x1x4xf32, #tpu.memory_space<vmem>>, vector<1x1x4xf32>
    %97 = vector.shape_cast %96 : vector<1x1x4xf32> to vector<1x4xf32>
    %98 = vector.broadcast %97 : vector<1x4xf32> to vector<8x4xf32>
    %99 = arith.addf %95, %98 : vector<8x4xf32>
    %cst_85 = arith.constant 0.000000e+00 : f32
    %100 = vector.broadcast %cst_85 : f32 to vector<8x4xf32>
    %101 = arith.cmpf oge, %99, %100 : vector<8x4xf32>
    %cst_86 = arith.constant 2.000000e-01 : f32
    %102 = vector.broadcast %cst_86 : f32 to vector<8x4xf32>
    %103 = arith.mulf %102, %99 : vector<8x4xf32>
    %104 = arith.select %101, %99, %103 : vector<8x4xi1>, vector<8x4xf32>
    %cst_87 = arith.constant 0.000000e+00 : f32
    %105 = vector.broadcast %cst_87 : f32 to vector<6x4xf32>
    %cst_88 = arith.constant 0.000000e+00 : f32
    %106 = vector.broadcast %cst_88 : f32 to vector<6x4xf32>
    %107 = tpu.concatenate %105, %104, %106 in 0 : vector<6x4xf32>, vector<8x4xf32>, vector<6x4xf32> -> vector<20x4xf32>
    %cst_89 = arith.constant 0.000000e+00 : f32
    %108 = vector.broadcast %cst_89 : f32 to vector<8x4xf32>
    %109 = vector.extract_strided_slice %107 {offsets = [0, 0], sizes = [8, 4], strides = [1, 1]} : vector<20x4xf32> to vector<8x4xf32>
    %110 = arith.truncf %109 : vector<8x4xf32> to vector<8x4xbf16>
    %c1_90 = arith.constant 1 : index
    %c0_91 = arith.constant 0 : index
    %c0_92 = arith.constant 0 : index
    %c0_93 = arith.constant 0 : index
    %111 = vector.load %arg8[%c1_90, %c0_91, %c0_92, %c0_93] : memref<3x4x4x4xbf16, #tpu.memory_space<vmem>>, vector<1x1x4x4xbf16>
    %112 = vector.shape_cast %111 : vector<1x1x4x4xbf16> to vector<4x4xbf16>
    %cst_94 = arith.constant dense<0.000000e+00> : vector<8x4xf32>
    %113 = tpu.matmul %110, %112, %cst_94 {dimension_numbers = #tpu.dot_dimension_numbers<[1], [0], [0], [1], [0, 0, 1, 1], [], []>} : vector<8x4xbf16>, vector<4x4xbf16>, vector<8x4xf32> -> vector<8x4xf32>
    %114 = arith.addf %108, %113 : vector<8x4xf32>
    %115 = vector.extract_strided_slice %107 {offsets = [4, 0], sizes = [8, 4], strides = [1, 1]} : vector<20x4xf32> to vector<8x4xf32>
    %116 = arith.truncf %115 : vector<8x4xf32> to vector<8x4xbf16>
    %c1_95 = arith.constant 1 : index
    %c1_96 = arith.constant 1 : index
    %c0_97 = arith.constant 0 : index
    %c0_98 = arith.constant 0 : index
    %117 = vector.load %arg8[%c1_95, %c1_96, %c0_97, %c0_98] : memref<3x4x4x4xbf16, #tpu.memory_space<vmem>>, vector<1x1x4x4xbf16>
    %118 = vector.shape_cast %117 : vector<1x1x4x4xbf16> to vector<4x4xbf16>
    %cst_99 = arith.constant dense<0.000000e+00> : vector<8x4xf32>
    %119 = tpu.matmul %116, %118, %cst_99 {dimension_numbers = #tpu.dot_dimension_numbers<[1], [0], [0], [1], [0, 0, 1, 1], [], []>} : vector<8x4xbf16>, vector<4x4xbf16>, vector<8x4xf32> -> vector<8x4xf32>
    %120 = arith.addf %114, %119 : vector<8x4xf32>
    %121 = vector.extract_strided_slice %107 {offsets = [8, 0], sizes = [8, 4], strides = [1, 1]} : vector<20x4xf32> to vector<8x4xf32>
    %122 = arith.truncf %121 : vector<8x4xf32> to vector<8x4xbf16>
    %c1_100 = arith.constant 1 : index
    %c2_101 = arith.constant 2 : index
    %c0_102 = arith.constant 0 : index
    %c0_103 = arith.constant 0 : index
    %123 = vector.load %arg8[%c1_100, %c2_101, %c0_102, %c0_103] : memref<3x4x4x4xbf16, #tpu.memory_space<vmem>>, vector<1x1x4x4xbf16>
    %124 = vector.shape_cast %123 : vector<1x1x4x4xbf16> to vector<4x4xbf16>
    %cst_104 = arith.constant dense<0.000000e+00> : vector<8x4xf32>
    %125 = tpu.matmul %122, %124, %cst_104 {dimension_numbers = #tpu.dot_dimension_numbers<[1], [0], [0], [1], [0, 0, 1, 1], [], []>} : vector<8x4xbf16>, vector<4x4xbf16>, vector<8x4xf32> -> vector<8x4xf32>
    %126 = arith.addf %120, %125 : vector<8x4xf32>
    %127 = vector.extract_strided_slice %107 {offsets = [12, 0], sizes = [8, 4], strides = [1, 1]} : vector<20x4xf32> to vector<8x4xf32>
    %128 = arith.truncf %127 : vector<8x4xf32> to vector<8x4xbf16>
    %c1_105 = arith.constant 1 : index
    %c3_106 = arith.constant 3 : index
    %c0_107 = arith.constant 0 : index
    %c0_108 = arith.constant 0 : index
    %129 = vector.load %arg8[%c1_105, %c3_106, %c0_107, %c0_108] : memref<3x4x4x4xbf16, #tpu.memory_space<vmem>>, vector<1x1x4x4xbf16>
    %130 = vector.shape_cast %129 : vector<1x1x4x4xbf16> to vector<4x4xbf16>
    %cst_109 = arith.constant dense<0.000000e+00> : vector<8x4xf32>
    %131 = tpu.matmul %128, %130, %cst_109 {dimension_numbers = #tpu.dot_dimension_numbers<[1], [0], [0], [1], [0, 0, 1, 1], [], []>} : vector<8x4xbf16>, vector<4x4xbf16>, vector<8x4xf32> -> vector<8x4xf32>
    %132 = arith.addf %126, %131 : vector<8x4xf32>
    %c1_110 = arith.constant 1 : index
    %c0_111 = arith.constant 0 : index
    %c0_112 = arith.constant 0 : index
    %133 = vector.load %arg9[%c1_110, %c0_111, %c0_112] : memref<3x1x4xf32, #tpu.memory_space<vmem>>, vector<1x1x4xf32>
    %134 = vector.shape_cast %133 : vector<1x1x4xf32> to vector<1x4xf32>
    %135 = vector.broadcast %134 : vector<1x4xf32> to vector<8x4xf32>
    %136 = arith.mulf %132, %135 : vector<8x4xf32>
    %c1_113 = arith.constant 1 : index
    %c0_114 = arith.constant 0 : index
    %c0_115 = arith.constant 0 : index
    %137 = vector.load %arg10[%c1_113, %c0_114, %c0_115] : memref<3x1x4xf32, #tpu.memory_space<vmem>>, vector<1x1x4xf32>
    %138 = vector.shape_cast %137 : vector<1x1x4xf32> to vector<1x4xf32>
    %139 = vector.broadcast %138 : vector<1x4xf32> to vector<8x4xf32>
    %140 = arith.addf %136, %139 : vector<8x4xf32>
    %c2_116 = arith.constant 2 : index
    %c0_117 = arith.constant 0 : index
    %c0_118 = arith.constant 0 : index
    %141 = vector.load %arg5[%c2_116, %c0_117, %c0_118] : memref<3x16x4xbf16, #tpu.memory_space<vmem>>, vector<1x16x4xbf16>
    %142 = vector.shape_cast %141 : vector<1x16x4xbf16> to vector<16x4xbf16>
    %cst_119 = arith.constant dense<0.000000e+00> : vector<8x4xf32>
    %143 = tpu.matmul %36, %142, %cst_119 {dimension_numbers = #tpu.dot_dimension_numbers<[1], [0], [0], [1], [0, 0, 1, 1], [], []>} : vector<8x16xbf16>, vector<16x4xbf16>, vector<8x4xf32> -> vector<8x4xf32>
    %c2_120 = arith.constant 2 : index
    %c0_121 = arith.constant 0 : index
    %c0_122 = arith.constant 0 : index
    %144 = vector.load %arg6[%c2_120, %c0_121, %c0_122] : memref<3x1x4xf32, #tpu.memory_space<vmem>>, vector<1x1x4xf32>
    %145 = vector.shape_cast %144 : vector<1x1x4xf32> to vector<1x4xf32>
    %146 = vector.broadcast %145 : vector<1x4xf32> to vector<8x4xf32>
    %147 = arith.mulf %143, %146 : vector<8x4xf32>
    %c2_123 = arith.constant 2 : index
    %c0_124 = arith.constant 0 : index
    %c0_125 = arith.constant 0 : index
    %148 = vector.load %arg7[%c2_123, %c0_124, %c0_125] : memref<3x1x4xf32, #tpu.memory_space<vmem>>, vector<1x1x4xf32>
    %149 = vector.shape_cast %148 : vector<1x1x4xf32> to vector<1x4xf32>
    %150 = vector.broadcast %149 : vector<1x4xf32> to vector<8x4xf32>
    %151 = arith.addf %147, %150 : vector<8x4xf32>
    %cst_126 = arith.constant 0.000000e+00 : f32
    %152 = vector.broadcast %cst_126 : f32 to vector<8x4xf32>
    %153 = arith.cmpf oge, %151, %152 : vector<8x4xf32>
    %cst_127 = arith.constant 2.000000e-01 : f32
    %154 = vector.broadcast %cst_127 : f32 to vector<8x4xf32>
    %155 = arith.mulf %154, %151 : vector<8x4xf32>
    %156 = arith.select %153, %151, %155 : vector<8x4xi1>, vector<8x4xf32>
    %cst_128 = arith.constant 0.000000e+00 : f32
    %157 = vector.broadcast %cst_128 : f32 to vector<3x4xf32>
    %cst_129 = arith.constant 0.000000e+00 : f32
    %158 = vector.broadcast %cst_129 : f32 to vector<3x4xf32>
    %159 = tpu.concatenate %157, %156, %158 in 0 : vector<3x4xf32>, vector<8x4xf32>, vector<3x4xf32> -> vector<14x4xf32>
    %cst_130 = arith.constant 0.000000e+00 : f32
    %160 = vector.broadcast %cst_130 : f32 to vector<8x4xf32>
    %161 = vector.extract_strided_slice %159 {offsets = [0, 0], sizes = [8, 4], strides = [1, 1]} : vector<14x4xf32> to vector<8x4xf32>
    %162 = arith.truncf %161 : vector<8x4xf32> to vector<8x4xbf16>
    %c2_131 = arith.constant 2 : index
    %c0_132 = arith.constant 0 : index
    %c0_133 = arith.constant 0 : index
    %c0_134 = arith.constant 0 : index
    %163 = vector.load %arg8[%c2_131, %c0_132, %c0_133, %c0_134] : memref<3x4x4x4xbf16, #tpu.memory_space<vmem>>, vector<1x1x4x4xbf16>
    %164 = vector.shape_cast %163 : vector<1x1x4x4xbf16> to vector<4x4xbf16>
    %cst_135 = arith.constant dense<0.000000e+00> : vector<8x4xf32>
    %165 = tpu.matmul %162, %164, %cst_135 {dimension_numbers = #tpu.dot_dimension_numbers<[1], [0], [0], [1], [0, 0, 1, 1], [], []>} : vector<8x4xbf16>, vector<4x4xbf16>, vector<8x4xf32> -> vector<8x4xf32>
    %166 = arith.addf %160, %165 : vector<8x4xf32>
    %167 = vector.extract_strided_slice %159 {offsets = [2, 0], sizes = [8, 4], strides = [1, 1]} : vector<14x4xf32> to vector<8x4xf32>
    %168 = arith.truncf %167 : vector<8x4xf32> to vector<8x4xbf16>
    %c2_136 = arith.constant 2 : index
    %c1_137 = arith.constant 1 : index
    %c0_138 = arith.constant 0 : index
    %c0_139 = arith.constant 0 : index
    %169 = vector.load %arg8[%c2_136, %c1_137, %c0_138, %c0_139] : memref<3x4x4x4xbf16, #tpu.memory_space<vmem>>, vector<1x1x4x4xbf16>
    %170 = vector.shape_cast %169 : vector<1x1x4x4xbf16> to vector<4x4xbf16>
    %cst_140 = arith.constant dense<0.000000e+00> : vector<8x4xf32>
    %171 = tpu.matmul %168, %170, %cst_140 {dimension_numbers = #tpu.dot_dimension_numbers<[1], [0], [0], [1], [0, 0, 1, 1], [], []>} : vector<8x4xbf16>, vector<4x4xbf16>, vector<8x4xf32> -> vector<8x4xf32>
    %172 = arith.addf %166, %171 : vector<8x4xf32>
    %173 = vector.extract_strided_slice %159 {offsets = [4, 0], sizes = [8, 4], strides = [1, 1]} : vector<14x4xf32> to vector<8x4xf32>
    %174 = arith.truncf %173 : vector<8x4xf32> to vector<8x4xbf16>
    %c2_141 = arith.constant 2 : index
    %c2_142 = arith.constant 2 : index
    %c0_143 = arith.constant 0 : index
    %c0_144 = arith.constant 0 : index
    %175 = vector.load %arg8[%c2_141, %c2_142, %c0_143, %c0_144] : memref<3x4x4x4xbf16, #tpu.memory_space<vmem>>, vector<1x1x4x4xbf16>
    %176 = vector.shape_cast %175 : vector<1x1x4x4xbf16> to vector<4x4xbf16>
    %cst_145 = arith.constant dense<0.000000e+00> : vector<8x4xf32>
    %177 = tpu.matmul %174, %176, %cst_145 {dimension_numbers = #tpu.dot_dimension_numbers<[1], [0], [0], [1], [0, 0, 1, 1], [], []>} : vector<8x4xbf16>, vector<4x4xbf16>, vector<8x4xf32> -> vector<8x4xf32>
    %178 = arith.addf %172, %177 : vector<8x4xf32>
    %179 = vector.extract_strided_slice %159 {offsets = [6, 0], sizes = [8, 4], strides = [1, 1]} : vector<14x4xf32> to vector<8x4xf32>
    %180 = arith.truncf %179 : vector<8x4xf32> to vector<8x4xbf16>
    %c2_146 = arith.constant 2 : index
    %c3_147 = arith.constant 3 : index
    %c0_148 = arith.constant 0 : index
    %c0_149 = arith.constant 0 : index
    %181 = vector.load %arg8[%c2_146, %c3_147, %c0_148, %c0_149] : memref<3x4x4x4xbf16, #tpu.memory_space<vmem>>, vector<1x1x4x4xbf16>
    %182 = vector.shape_cast %181 : vector<1x1x4x4xbf16> to vector<4x4xbf16>
    %cst_150 = arith.constant dense<0.000000e+00> : vector<8x4xf32>
    %183 = tpu.matmul %180, %182, %cst_150 {dimension_numbers = #tpu.dot_dimension_numbers<[1], [0], [0], [1], [0, 0, 1, 1], [], []>} : vector<8x4xbf16>, vector<4x4xbf16>, vector<8x4xf32> -> vector<8x4xf32>
    %184 = arith.addf %178, %183 : vector<8x4xf32>
    %c2_151 = arith.constant 2 : index
    %c0_152 = arith.constant 0 : index
    %c0_153 = arith.constant 0 : index
    %185 = vector.load %arg9[%c2_151, %c0_152, %c0_153] : memref<3x1x4xf32, #tpu.memory_space<vmem>>, vector<1x1x4xf32>
    %186 = vector.shape_cast %185 : vector<1x1x4xf32> to vector<1x4xf32>
    %187 = vector.broadcast %186 : vector<1x4xf32> to vector<8x4xf32>
    %188 = arith.mulf %184, %187 : vector<8x4xf32>
    %c2_154 = arith.constant 2 : index
    %c0_155 = arith.constant 0 : index
    %c0_156 = arith.constant 0 : index
    %189 = vector.load %arg10[%c2_154, %c0_155, %c0_156] : memref<3x1x4xf32, #tpu.memory_space<vmem>>, vector<1x1x4xf32>
    %190 = vector.shape_cast %189 : vector<1x1x4xf32> to vector<1x4xf32>
    %191 = vector.broadcast %190 : vector<1x4xf32> to vector<8x4xf32>
    %192 = arith.addf %188, %191 : vector<8x4xf32>
    %c0_157 = arith.constant 0 : index
    %c0_158 = arith.constant 0 : index
    %193 = vector.load %arg11[%c0_157, %c0_158] : memref<16x4xbf16, #tpu.memory_space<vmem>>, vector<16x4xbf16>
    %cst_159 = arith.constant dense<0.000000e+00> : vector<8x4xf32>
    %194 = tpu.matmul %36, %193, %cst_159 {dimension_numbers = #tpu.dot_dimension_numbers<[1], [0], [0], [1], [0, 0, 1, 1], [], []>} : vector<8x16xbf16>, vector<16x4xbf16>, vector<8x4xf32> -> vector<8x4xf32>
    %c0_160 = arith.constant 0 : index
    %c0_161 = arith.constant 0 : index
    %195 = vector.load %arg12[%c0_160, %c0_161] : memref<1x4xf32, #tpu.memory_space<vmem>>, vector<1x4xf32>
    %196 = vector.broadcast %195 : vector<1x4xf32> to vector<8x4xf32>
    %197 = arith.mulf %194, %196 : vector<8x4xf32>
    %c0_162 = arith.constant 0 : index
    %c0_163 = arith.constant 0 : index
    %198 = vector.load %arg13[%c0_162, %c0_163] : memref<1x4xf32, #tpu.memory_space<vmem>>, vector<1x4xf32>
    %199 = vector.broadcast %198 : vector<1x4xf32> to vector<8x4xf32>
    %200 = arith.addf %197, %199 : vector<8x4xf32>
    %201 = tpu.concatenate %88, %140, %192, %200 in 1 : vector<8x4xf32>, vector<8x4xf32>, vector<8x4xf32>, vector<8x4xf32> -> vector<8x16xf32>
    %202 = arith.addf %201, %35 : vector<8x16xf32>
    %cst_164 = arith.constant 0.000000e+00 : f32
    %203 = vector.broadcast %cst_164 : f32 to vector<8x16xf32>
    %204 = arith.cmpf oge, %202, %203 : vector<8x16xf32>
    %cst_165 = arith.constant 2.000000e-01 : f32
    %205 = vector.broadcast %cst_165 : f32 to vector<8x16xf32>
    %206 = arith.mulf %205, %202 : vector<8x16xf32>
    %207 = arith.select %204, %202, %206 : vector<8x16xi1>, vector<8x16xf32>
    %208 = arith.truncf %207 : vector<8x16xf32> to vector<8x16xbf16>
    %c0_166 = arith.constant 0 : index
    %c0_167 = arith.constant 0 : index
    %c0_168 = arith.constant 0 : index
    %209 = vector.load %arg14[%c0_166, %c0_167, %c0_168] : memref<1x8x16xbf16, #tpu.memory_space<vmem>>, vector<1x8x16xbf16>
    %210 = vector.shape_cast %209 : vector<1x8x16xbf16> to vector<8x16xbf16>
    %211 = vector.shape_cast %208 : vector<8x16xbf16> to vector<1x8x16xbf16>
    tpu.vector_store %arg14[%c0_166, %c0_167, %c0_168], %211 {strides = array<i32>} : memref<1x8x16xbf16, #tpu.memory_space<vmem>>, vector<1x8x16xbf16>,
    return
  }
  func.func @transform_0(%arg0: i32) -> (i32, i32, i32, i32) {
    %c0_i32 = arith.constant 0 : i32
    %c0_i32_0 = arith.constant 0 : i32
    %c0_i32_1 = arith.constant 0 : i32
    %c0_i32_2 = arith.constant 0 : i32
    return %arg0, %c0_i32, %c0_i32_0, %c0_i32_1 : i32, i32, i32, i32
  }
  func.func @transform_1(%arg0: i32) -> (i32, i32, i32) {
    %c0_i32 = arith.constant 0 : i32
    %c0_i32_0 = arith.constant 0 : i32
    %c0_i32_1 = arith.constant 0 : i32
    %c0_i32_2 = arith.constant 0 : i32
    return %c0_i32, %c0_i32_0, %c0_i32_1 : i32, i32, i32
  }
  func.func @transform_2(%arg0: i32) -> (i32, i32) {
    %c0_i32 = arith.constant 0 : i32
    %c0_i32_0 = arith.constant 0 : i32
    %c0_i32_1 = arith.constant 0 : i32
    return %c0_i32, %c0_i32_0 : i32, i32
  }
  func.func @transform_3(%arg0: i32) -> (i32, i32) {
    %c0_i32 = arith.constant 0 : i32
    %c0_i32_0 = arith.constant 0 : i32
    %c0_i32_1 = arith.constant 0 : i32
    return %c0_i32, %c0_i32_0 : i32, i32
  }
  func.func @transform_4(%arg0: i32) -> (i32, i32, i32) {
    %c0_i32 = arith.constant 0 : i32
    %c0_i32_0 = arith.constant 0 : i32
    %c0_i32_1 = arith.constant 0 : i32
    %c0_i32_2 = arith.constant 0 : i32
    return %c0_i32, %c0_i32_0, %c0_i32_1 : i32, i32, i32
  }
  func.func @transform_5(%arg0: i32) -> (i32, i32, i32) {
    %c0_i32 = arith.constant 0 : i32
    %c0_i32_0 = arith.constant 0 : i32
    %c0_i32_1 = arith.constant 0 : i32
    %c0_i32_2 = arith.constant 0 : i32
    return %c0_i32, %c0_i32_0, %c0_i32_1 : i32, i32, i32
  }
  func.func @transform_6(%arg0: i32) -> (i32, i32, i32) {
    %c0_i32 = arith.constant 0 : i32
    %c0_i32_0 = arith.constant 0 : i32
    %c0_i32_1 = arith.constant 0 : i32
    %c0_i32_2 = arith.constant 0 : i32
    return %c0_i32, %c0_i32_0, %c0_i32_1 : i32, i32, i32
  }
  func.func @transform_7(%arg0: i32) -> (i32, i32, i32, i32) {
    %c0_i32 = arith.constant 0 : i32
    %c0_i32_0 = arith.constant 0 : i32
    %c0_i32_1 = arith.constant 0 : i32
    %c0_i32_2 = arith.constant 0 : i32
    %c0_i32_3 = arith.constant 0 : i32
    return %c0_i32, %c0_i32_0, %c0_i32_1, %c0_i32_2 : i32, i32, i32, i32
  }
  func.func @transform_8(%arg0: i32) -> (i32, i32, i32) {
    %c0_i32 = arith.constant 0 : i32
    %c0_i32_0 = arith.constant 0 : i32
    %c0_i32_1 = arith.constant 0 : i32
    %c0_i32_2 = arith.constant 0 : i32
    return %c0_i32, %c0_i32_0, %c0_i32_1 : i32, i32, i32
  }
  func.func @transform_9(%arg0: i32) -> (i32, i32, i32) {
    %c0_i32 = arith.constant 0 : i32
    %c0_i32_0 = arith.constant 0 : i32
    %c0_i32_1 = arith.constant 0 : i32
    %c0_i32_2 = arith.constant 0 : i32
    return %c0_i32, %c0_i32_0, %c0_i32_1 : i32, i32, i32
  }
  func.func @transform_10(%arg0: i32) -> (i32, i32) {
    %c0_i32 = arith.constant 0 : i32
    %c0_i32_0 = arith.constant 0 : i32
    %c0_i32_1 = arith.constant 0 : i32
    return %c0_i32, %c0_i32_0 : i32, i32
  }
  func.func @transform_11(%arg0: i32) -> (i32, i32) {
    %c0_i32 = arith.constant 0 : i32
    %c0_i32_0 = arith.constant 0 : i32
    %c0_i32_1 = arith.constant 0 : i32
    return %c0_i32, %c0_i32_0 : i32, i32
  }
  func.func @transform_12(%arg0: i32) -> (i32, i32) {
    %c0_i32 = arith.constant 0 : i32
    %c0_i32_0 = arith.constant 0 : i32
    %c0_i32_1 = arith.constant 0 : i32
    return %c0_i32, %c0_i32_0 : i32, i32
  }
  func.func @transform_13(%arg0: i32) -> (i32, i32, i32) {
    %c0_i32 = arith.constant 0 : i32
    %c0_i32_0 = arith.constant 0 : i32
    %c0_i32_1 = arith.constant 0 : i32
    return %arg0, %c0_i32, %c0_i32_0 : i32, i32, i32
  }
}

module attributes {stable_mosaic.version = 11 : i64} {
  func.func @_fc_head_kernel(%arg0: memref<2x128xbf16, #tpu.memory_space<vmem>>, %arg1: memref<128x128xbf16, #tpu.memory_space<vmem>>, %arg2: memref<1x128xf32, #tpu.memory_space<vmem>>, %arg3: memref<1x128xf32, #tpu.memory_space<vmem>>, %arg4: memref<128x128xbf16, #tpu.memory_space<vmem>>, %arg5: memref<1x128xf32, #tpu.memory_space<vmem>>, %arg6: memref<1x128xf32, #tpu.memory_space<vmem>>, %arg7: memref<128x5xbf16, #tpu.memory_space<vmem>>, %arg8: memref<1x5xf32, #tpu.memory_space<vmem>>, %arg9: memref<2x5xf32, #tpu.memory_space<vmem>>) attributes {dimension_semantics = [], scalar_prefetch = 0 : i64, scratch_operands = 0 : i64, tpu.core_type = #tpu.core_type<tc>} {
    %c0 = arith.constant 0 : index
    %c0_0 = arith.constant 0 : index
    %0 = vector.load %arg0[%c0, %c0_0] : memref<2x128xbf16, #tpu.memory_space<vmem>>, vector<2x128xbf16>
    %c0_1 = arith.constant 0 : index
    %c0_2 = arith.constant 0 : index
    %1 = vector.load %arg1[%c0_1, %c0_2] : memref<128x128xbf16, #tpu.memory_space<vmem>>, vector<128x128xbf16>
    %cst = arith.constant dense<0.000000e+00> : vector<2x128xf32>
    %2 = tpu.matmul %0, %1, %cst {dimension_numbers = #tpu.dot_dimension_numbers<[1], [0], [0], [1], [0, 0, 1, 1], [], []>} : vector<2x128xbf16>, vector<128x128xbf16>, vector<2x128xf32> -> vector<2x128xf32>
    %c0_3 = arith.constant 0 : index
    %c0_4 = arith.constant 0 : index
    %3 = vector.load %arg2[%c0_3, %c0_4] : memref<1x128xf32, #tpu.memory_space<vmem>>, vector<1x128xf32>
    %4 = vector.broadcast %3 : vector<1x128xf32> to vector<2x128xf32>
    %5 = arith.mulf %2, %4 : vector<2x128xf32>
    %c0_5 = arith.constant 0 : index
    %c0_6 = arith.constant 0 : index
    %6 = vector.load %arg3[%c0_5, %c0_6] : memref<1x128xf32, #tpu.memory_space<vmem>>, vector<1x128xf32>
    %7 = vector.broadcast %6 : vector<1x128xf32> to vector<2x128xf32>
    %8 = arith.addf %5, %7 : vector<2x128xf32>
    %cst_7 = arith.constant 0.000000e+00 : f32
    %9 = vector.broadcast %cst_7 : f32 to vector<2x128xf32>
    %10 = arith.cmpf oge, %8, %9 : vector<2x128xf32>
    %cst_8 = arith.constant 2.000000e-01 : f32
    %11 = vector.broadcast %cst_8 : f32 to vector<2x128xf32>
    %12 = arith.mulf %11, %8 : vector<2x128xf32>
    %13 = arith.select %10, %8, %12 : vector<2x128xi1>, vector<2x128xf32>
    %14 = arith.truncf %13 : vector<2x128xf32> to vector<2x128xbf16>
    %c0_9 = arith.constant 0 : index
    %c0_10 = arith.constant 0 : index
    %15 = vector.load %arg4[%c0_9, %c0_10] : memref<128x128xbf16, #tpu.memory_space<vmem>>, vector<128x128xbf16>
    %cst_11 = arith.constant dense<0.000000e+00> : vector<2x128xf32>
    %16 = tpu.matmul %14, %15, %cst_11 {dimension_numbers = #tpu.dot_dimension_numbers<[1], [0], [0], [1], [0, 0, 1, 1], [], []>} : vector<2x128xbf16>, vector<128x128xbf16>, vector<2x128xf32> -> vector<2x128xf32>
    %c0_12 = arith.constant 0 : index
    %c0_13 = arith.constant 0 : index
    %17 = vector.load %arg5[%c0_12, %c0_13] : memref<1x128xf32, #tpu.memory_space<vmem>>, vector<1x128xf32>
    %18 = vector.broadcast %17 : vector<1x128xf32> to vector<2x128xf32>
    %19 = arith.mulf %16, %18 : vector<2x128xf32>
    %c0_14 = arith.constant 0 : index
    %c0_15 = arith.constant 0 : index
    %20 = vector.load %arg6[%c0_14, %c0_15] : memref<1x128xf32, #tpu.memory_space<vmem>>, vector<1x128xf32>
    %21 = vector.broadcast %20 : vector<1x128xf32> to vector<2x128xf32>
    %22 = arith.addf %19, %21 : vector<2x128xf32>
    %cst_16 = arith.constant 0.000000e+00 : f32
    %23 = vector.broadcast %cst_16 : f32 to vector<2x128xf32>
    %24 = arith.cmpf oge, %22, %23 : vector<2x128xf32>
    %cst_17 = arith.constant 2.000000e-01 : f32
    %25 = vector.broadcast %cst_17 : f32 to vector<2x128xf32>
    %26 = arith.mulf %25, %22 : vector<2x128xf32>
    %27 = arith.select %24, %22, %26 : vector<2x128xi1>, vector<2x128xf32>
    %28 = arith.truncf %27 : vector<2x128xf32> to vector<2x128xbf16>
    %c0_18 = arith.constant 0 : index
    %c0_19 = arith.constant 0 : index
    %29 = vector.load %arg7[%c0_18, %c0_19] : memref<128x5xbf16, #tpu.memory_space<vmem>>, vector<128x5xbf16>
    %cst_20 = arith.constant dense<0.000000e+00> : vector<2x5xf32>
    %30 = tpu.matmul %28, %29, %cst_20 {dimension_numbers = #tpu.dot_dimension_numbers<[1], [0], [0], [1], [0, 0, 1, 1], [], []>} : vector<2x128xbf16>, vector<128x5xbf16>, vector<2x5xf32> -> vector<2x5xf32>
    %c0_21 = arith.constant 0 : index
    %c0_22 = arith.constant 0 : index
    %31 = vector.load %arg8[%c0_21, %c0_22] : memref<1x5xf32, #tpu.memory_space<vmem>>, vector<1x5xf32>
    %32 = vector.broadcast %31 : vector<1x5xf32> to vector<2x5xf32>
    %33 = arith.addf %30, %32 : vector<2x5xf32>
    %c0_23 = arith.constant 0 : index
    %c0_24 = arith.constant 0 : index
    %34 = vector.load %arg9[%c0_23, %c0_24] : memref<2x5xf32, #tpu.memory_space<vmem>>, vector<2x5xf32>
    tpu.vector_store %arg9[%c0_23, %c0_24], %33 {strides = array<i32>} : memref<2x5xf32, #tpu.memory_space<vmem>>, vector<2x5xf32>,
    return
  }
}

</mosaic_0001>

<llo_original>
// kernel: _lambda_.7
$region0: #{_lambda_.7}
  #allocation0 [shape = 'u32[]', space=smem, size = 0x4, offset = 0x4, fixed_abs, tag = 'smem constant byte address 0x4 - core index']
  #allocation1 [shape = 'u32[72,128]{1,0:T(1,128)}', space=vmem, size = 0x9000, scoped, tag = 'internal scratch']
  %s0 = inlined_call_operand.vmem [shape: bf16[2,128], index: 0, kind: input, shape index: {}]
  %s1 = inlined_call_operand.vmem [shape: bf16[128,128], index: 1, kind: input, shape index: {}]
  %s2 = inlined_call_operand.vmem [shape: f32[1,128], index: 2, kind: input, shape index: {}, may-alias: {2,5}]
  %s3 = inlined_call_operand.vmem [shape: f32[1,128], index: 3, kind: input, shape index: {}]
  %s4 = inlined_call_operand.vmem [shape: bf16[128,128], index: 4, kind: input, shape index: {}]
  %s5 = inlined_call_operand.vmem [shape: f32[1,128], index: 5, kind: input, shape index: {}, may-alias: {2,5}]
  %s6 = inlined_call_operand.vmem [shape: f32[1,128], index: 6, kind: input, shape index: {}]
  %s7 = inlined_call_operand.vmem [shape: bf16[128,5], index: 7, kind: input, shape index: {}]
  %s8 = inlined_call_operand.vmem [shape: f32[1,5], index: 8, kind: input, shape index: {}]
  %s9 = inlined_call_operand.hbm [shape: f32[2,5], index: 9, kind: output, shape index: {}]
  %s10 = sld [smem:[#allocation0]]
  $region46: #{_lambda_.7} parent=0
    _
  %s12 = ssub.s32 1, %s10
  %s13 = scalar_select 0, %s12, %s10
  $region1: #{_lambda_.7} parent=0
    #allocation2 [shape = 'u8[1024]{0}', space=vmem, size = 0x400, scoped, tag = 'output window, operand 0, single buffered']
    #allocation3 [shape = 's32[1]{0}', space=sflag, size = 0x4, scoped, tag = 'scoped memory for _lambda_.7']
    %14 = vsyncpa [#allocation3], 0
    // Predicated region
    $region2: #{_lambda_.7} parent=1 // pred_check
      _
    $region3: #{_lambda_.7} parent=1 // pred_check_branch
      %16 = sbr.rel (0) target = $region5
    $region4: #{_lambda_.7} parent=1 // pred_region
      _
    $region5: #{_lambda_.7} parent=1 // pred_fallthru
      _
    // Predicated region
    $region6: #{_lambda_.7} parent=1 // pred_check
      _
    $region7: #{_lambda_.7} parent=1 // pred_check_branch
      %18 = sbr.rel (0) target = $region9
    $region8: #{_lambda_.7} parent=1 // pred_region
      _
    $region9: #{_lambda_.7} parent=1 // pred_fallthru
      _
    // Predicated region
    $region10: #{_lambda_.7} parent=1 // pred_check
      _
    $region11: #{_lambda_.7} parent=1 // pred_check_branch
      %20 = sbr.rel (0) target = $region13
    $region12: #{_lambda_.7} parent=1 // pred_region
      _
    $region13: #{_lambda_.7} parent=1 // pred_fallthru
      _
    // Predicated region
    $region14: #{_lambda_.7} parent=1 // pred_check
      _
    $region15: #{_lambda_.7} parent=1 // pred_check_branch
      %22 = sbr.rel (0) target = $region17
    $region16: #{_lambda_.7} parent=1 // pred_region
      _
    $region17: #{_lambda_.7} parent=1 // pred_fallthru
      _
    // Predicated region
    $region18: #{_lambda_.7} parent=1 // pred_check
      _
    $region19: #{_lambda_.7} parent=1 // pred_check_branch
      %24 = sbr.rel (0) target = $region21
    $region20: #{_lambda_.7} parent=1 // pred_region
      _
    $region21: #{_lambda_.7} parent=1 // pred_fallthru
      _
    // Predicated region
    $region22: #{_lambda_.7} parent=1 // pred_check
      _
    $region23: #{_lambda_.7} parent=1 // pred_check_branch
      %26 = sbr.rel (0) target = $region25
    $region24: #{_lambda_.7} parent=1 // pred_region
      _
    $region25: #{_lambda_.7} parent=1 // pred_fallthru
      _
    // Predicated region
    $region26: #{_lambda_.7} parent=1 // pred_check
      _
    $region27: #{_lambda_.7} parent=1 // pred_check_branch
      %28 = sbr.rel (0) target = $region29
    $region28: #{_lambda_.7} parent=1 // pred_region
      _
    $region29: #{_lambda_.7} parent=1 // pred_fallthru
      _
    // Predicated region
    $region30: #{_lambda_.7} parent=1 // pred_check
      _
    $region31: #{_lambda_.7} parent=1 // pred_check_branch
      %30 = sbr.rel (0) target = $region33
    $region32: #{_lambda_.7} parent=1 // pred_region
      _
    $region33: #{_lambda_.7} parent=1 // pred_fallthru
      _
    // Predicated region
    $region34: #{_lambda_.7} parent=1 // pred_check
      _
    $region35: #{_lambda_.7} parent=1 // pred_check_branch
      %32 = sbr.rel (0) target = $region37
    $region36: #{_lambda_.7} parent=1 // pred_region
      _
    $region37: #{_lambda_.7} parent=1 // pred_fallthru
      _
    %v33 = vld [vmem:[%s0] sm:$0x1]
    %v34 = vld [vmem:[%s1] sm:$0xf]
    %v35 = vld [vmem:[%s1 + $0x4] sm:$0xf]
    %v36 = vld [vmem:[%s1 + $0x8] sm:$0xf]
    %v37 = vld [vmem:[%s1 + $0xc] sm:$0xf]
    %v38 = vld [vmem:[%s1 + $0x10] sm:$0xf]
    %v39 = vld [vmem:[%s1 + $0x14] sm:$0xf]
    %v40 = vld [vmem:[%s1 + $0x18] sm:$0xf]
    %v41 = vld [vmem:[%s1 + $0x1c] sm:$0xf]
    %v42 = vld [vmem:[%s1 + $0x20] sm:$0xf]
    %v43 = vld [vmem:[%s1 + $0x24] sm:$0xf]
    %v44 = vld [vmem:[%s1 + $0x28] sm:$0xf]
    %v45 = vld [vmem:[%s1 + $0x2c] sm:$0xf]
    %v46 = vld [vmem:[%s1 + $0x30] sm:$0xf]
    %v47 = vld [vmem:[%s1 + $0x34] sm:$0xf]
    %v48 = vld [vmem:[%s1 + $0x38] sm:$0xf]
    %v49 = vld [vmem:[%s1 + $0x3c] sm:$0xf]
    %v66 = vunpack.c.l.b16 %v34
    %v67 = vunpack.c.l.b16 %v35
    %v68 = vunpack.c.l.b16 %v36
    %v69 = vunpack.c.l.b16 %v37
    %v70 = vunpack.c.l.b16 %v38
    %v71 = vunpack.c.l.b16 %v39
    %v72 = vunpack.c.l.b16 %v40
    %v73 = vunpack.c.l.b16 %v41
    %v74 = vunpack.c.l.b16 %v42
    %v75 = vunpack.c.l.b16 %v43
    %v76 = vunpack.c.l.b16 %v44
    %v77 = vunpack.c.l.b16 %v45
    %v78 = vunpack.c.l.b16 %v46
    %v79 = vunpack.c.l.b16 %v47
    %v80 = vunpack.c.l.b16 %v48
    %v81 = vunpack.c.l.b16 %v49
    %v82 = vpack.c.b16 %v67, %v66
    %v83 = vpack.c.b16 %v69, %v68
    %v84 = vpack.c.b16 %v71, %v70
    %v85 = vpack.c.b16 %v73, %v72
    %v86 = vpack.c.b16 %v75, %v74
    %v87 = vpack.c.b16 %v77, %v76
    %v88 = vpack.c.b16 %v79, %v78
    %v89 = vpack.c.b16 %v81, %v80
    %98 = vmatpush.bf16.msra.mxu0 %v89
    %99 = vmatpush.bf16.msra.mxu0 %v88
    %100 = vmatpush.bf16.msra.mxu0 %v87
    %101 = vmatpush.bf16.msra.mxu0 %v86
    %102 = vmatpush.bf16.msra.mxu0 %v85
    %103 = vmatpush.bf16.msra.mxu0 %v84
    %104 = vmatpush.bf16.msra.mxu0 %v83
    %105 = vmatpush.bf16.msra.mxu0 %v82
    %106 = vmatmul.bf16.gmra.mxu0 %v33
    %v107 = vpop.f32.mrf.mxu0
    %v108 = vadd.f32 0.0, %v107
    %v109 = vpop.f32.mrf.mxu0
    %110 = vdwg.mxu0
    %v111 = vld [vmem:[%s2] sm:$0x1]
    %v113 = vperm.slane %v111, 0
    %v115 = vmul.f32 %v108, %v113
    %v116 = vld [vmem:[%s3] sm:$0x1]
    %v118 = vperm.slane %v116, 0
    %v120 = vadd.f32 %v115, %v118
    %vm121 = vcmp.ge.f32.partialorder %v120, 0.0
    %v122 = vmul.f32 %v120, 0.2
    %v123 = vsel %vm121, %v120, %v122
    %v124 = vpack.c.bf16 %v123, %v123
    %v125 = vld [vmem:[%s4] sm:$0xf]
    %v126 = vld [vmem:[%s4 + $0x4] sm:$0xf]
    %v127 = vld [vmem:[%s4 + $0x8] sm:$0xf]
    %v128 = vld [vmem:[%s4 + $0xc] sm:$0xf]
    %v129 = vld [vmem:[%s4 + $0x10] sm:$0xf]
    %v130 = vld [vmem:[%s4 + $0x14] sm:$0xf]
    %v131 = vld [vmem:[%s4 + $0x18] sm:$0xf]
    %v132 = vld [vmem:[%s4 + $0x1c] sm:$0xf]
    %v133 = vld [vmem:[%s4 + $0x20] sm:$0xf]
    %v134 = vld [vmem:[%s4 + $0x24] sm:$0xf]
    %v135 = vld [vmem:[%s4 + $0x28] sm:$0xf]
    %v136 = vld [vmem:[%s4 + $0x2c] sm:$0xf]
    %v137 = vld [vmem:[%s4 + $0x30] sm:$0xf]
    %v138 = vld [vmem:[%s4 + $0x34] sm:$0xf]
    %v139 = vld [vmem:[%s4 + $0x38] sm:$0xf]
    %v140 = vld [vmem:[%s4 + $0x3c] sm:$0xf]
    %v157 = vunpack.c.l.b16 %v125
    %v158 = vunpack.c.l.b16 %v126
    %v159 = vunpack.c.l.b16 %v127
    %v160 = vunpack.c.l.b16 %v128
    %v161 = vunpack.c.l.b16 %v129
    %v162 = vunpack.c.l.b16 %v130
    %v163 = vunpack.c.l.b16 %v131
    %v164 = vunpack.c.l.b16 %v132
    %v165 = vunpack.c.l.b16 %v133
    %v166 = vunpack.c.l.b16 %v134
    %v167 = vunpack.c.l.b16 %v135
    %v168 = vunpack.c.l.b16 %v136
    %v169 = vunpack.c.l.b16 %v137
    %v170 = vunpack.c.l.b16 %v138
    %v171 = vunpack.c.l.b16 %v139
    %v172 = vunpack.c.l.b16 %v140
    %v173 = vpack.c.b16 %v158, %v157
    %v174 = vpack.c.b16 %v160, %v159
    %v175 = vpack.c.b16 %v162, %v161
    %v176 = vpack.c.b16 %v164, %v163
    %v177 = vpack.c.b16 %v166, %v165
    %v178 = vpack.c.b16 %v168, %v167
    %v179 = vpack.c.b16 %v170, %v169
    %v180 = vpack.c.b16 %v172, %v171
    %189 = vmatpush.bf16.msra.mxu0 %v180
    %190 = vmatpush.bf16.msra.mxu0 %v179
    %191 = vmatpush.bf16.msra.mxu0 %v178
    %192 = vmatpush.bf16.msra.mxu0 %v177
    %193 = vmatpush.bf16.msra.mxu0 %v176
    %194 = vmatpush.bf16.msra.mxu0 %v175
    %195 = vmatpush.bf16.msra.mxu0 %v174
    %196 = vmatpush.bf16.msra.mxu0 %v173
    %197 = vmatmul.bf16.gmra.mxu0 %v124
    %v198 = vpop.f32.mrf.mxu0
    %v199 = vadd.f32 0.0, %v198
    %v200 = vpop.f32.mrf.mxu0
    %201 = vdwg.mxu0
    %v202 = vld [vmem:[%s5] sm:$0x1]
    %v204 = vperm.slane %v202, 0
    %v206 = vmul.f32 %v199, %v204
    %v207 = vld [vmem:[%s6] sm:$0x1]
    %v209 = vperm.slane %v207, 0
    %v211 = vadd.f32 %v206, %v209
    %vm212 = vcmp.ge.f32.partialorder %v211, 0.0
    %v213 = vmul.f32 %v211, 0.2
    %v214 = vsel %vm212, %v211, %v213
    %v215 = vpack.c.bf16 %v214, %v214
    %v216 = vld [vmem:[%s7] sm:$0xf]
    %v217 = vld [vmem:[%s7 + $0x4] sm:$0xf]
    %v218 = vld [vmem:[%s7 + $0x8] sm:$0xf]
    %v219 = vld [vmem:[%s7 + $0xc] sm:$0xf]
    %v220 = vld [vmem:[%s7 + $0x10] sm:$0xf]
    %v221 = vld [vmem:[%s7 + $0x14] sm:$0xf]
    %v222 = vld [vmem:[%s7 + $0x18] sm:$0xf]
    %v223 = vld [vmem:[%s7 + $0x1c] sm:$0xf]
    %v224 = vld [vmem:[%s7 + $0x20] sm:$0xf]
    %v225 = vld [vmem:[%s7 + $0x24] sm:$0xf]
    %v226 = vld [vmem:[%s7 + $0x28] sm:$0xf]
    %v227 = vld [vmem:[%s7 + $0x2c] sm:$0xf]
    %v228 = vld [vmem:[%s7 + $0x30] sm:$0xf]
    %v229 = vld [vmem:[%s7 + $0x34] sm:$0xf]
    %v230 = vld [vmem:[%s7 + $0x38] sm:$0xf]
    %v231 = vld [vmem:[%s7 + $0x3c] sm:$0xf]
    %v232 = vld [vmem:[%s8] sm:$0x1]
    %v234 = vperm.slane %v232, 0
    %v252 = vunpack.c.l.b16 %v216
    %v253 = vunpack.c.l.b16 %v217
    %v254 = vunpack.c.l.b16 %v218
    %v255 = vunpack.c.l.b16 %v219
    %v256 = vunpack.c.l.b16 %v220
    %v257 = vunpack.c.l.b16 %v221
    %v258 = vunpack.c.l.b16 %v222
    %v259 = vunpack.c.l.b16 %v223
    %v260 = vunpack.c.l.b16 %v224
    %v261 = vunpack.c.l.b16 %v225
    %v262 = vunpack.c.l.b16 %v226
    %v263 = vunpack.c.l.b16 %v227
    %v264 = vunpack.c.l.b16 %v228
    %v265 = vunpack.c.l.b16 %v229
    %v266 = vunpack.c.l.b16 %v230
    %v267 = vunpack.c.l.b16 %v231
    %v268 = vpack.c.b16 %v253, %v252
    %v269 = vpack.c.b16 %v255, %v254
    %v270 = vpack.c.b16 %v257, %v256
    %v271 = vpack.c.b16 %v259, %v258
    %v272 = vpack.c.b16 %v261, %v260
    %v273 = vpack.c.b16 %v263, %v262
    %v274 = vpack.c.b16 %v265, %v264
    %v275 = vpack.c.b16 %v267, %v266
    %284 = vmatpush.bf16.msra.mxu0 %v275
    %285 = vmatpush.bf16.msra.mxu0 %v274
    %286 = vmatpush.bf16.msra.mxu0 %v273
    %287 = vmatpush.bf16.msra.mxu0 %v272
    %288 = vmatpush.bf16.msra.mxu0 %v271
    %289 = vmatpush.bf16.msra.mxu0 %v270
    %290 = vmatpush.bf16.msra.mxu0 %v269
    %291 = vmatpush.bf16.msra.mxu0 %v268
    %292 = vmatmul.bf16.gmra.mxu0 %v215
    %v293 = vpop.f32.mrf.mxu0
    %v294 = vadd.f32 %v234, %v293
    %v295 = vpop.f32.mrf.mxu0
    %296 = vdwg.mxu0
    %vm297 = vcmask 33792
    %298 = vst.msk [vmem:[#allocation2] sm:$0x3] %vm297, %v294
    // Predicated region
    $region38: #{_lambda_.7} parent=1 // pred_check
      _
    $region39: #{_lambda_.7} parent=1 // pred_check_branch
      %300 = sbr.rel (0) target = $region41
    $region40: #{_lambda_.7} parent=1 // pred_region
      %302 = vsyncadd [#allocation3], 0
      %s304 = sshll.u32 [#allocation2], 4
      %s305 = int_to_ptr.vmem [resolvable:$true] %s304
      %s306 = sshll.u32 %s9, 4
      %s307 = int_to_ptr.hbm [resolvable:$true] %s306
      %309 = dma.vmem_to_hbm [thread:$0]  %s305, 32, %s307, [#allocation3]
    $region41: #{_lambda_.7} parent=1 // pred_fallthru
      _
    // Predicated region
    $region42: #{_lambda_.7} parent=1 // pred_check
      _
    $region43: #{_lambda_.7} parent=1 // pred_check_branch
      %311 = sbr.rel (0) target = $region45
    $region44: #{_lambda_.7} parent=1 // pred_region
      %313 = dma.done [#allocation3], 32
    $region45: #{_lambda_.7} parent=1 // pred_fallthru
      _
    %314 = vsyncpa [#allocation3], 1

// kernel: _lambda_.5
$region0: #{_lambda_.5}
  #allocation0 [shape = 'u32[]', space=smem, size = 0x4, offset = 0x4, fixed_abs, tag = 'smem constant byte address 0x4 - core index']
  #allocation1 [shape = 'u32[72,128]{1,0:T(1,128)}', space=vmem, size = 0x9000, scoped, tag = 'internal scratch']
  %s0 = inlined_call_operand.vmem [shape: bf16[2,2,17,4], index: 0, kind: input, shape index: {}]
  %s1 = inlined_call_operand.vmem [shape: bf16[4,4,8], index: 1, kind: input, shape index: {}]
  %s2 = inlined_call_operand.vmem [shape: f32[1,8], index: 2, kind: input, shape index: {}]
  %s3 = inlined_call_operand.vmem [shape: f32[1,8], index: 3, kind: input, shape index: {}]
  %s4 = inlined_call_operand.vmem [shape: bf16[3,8,2], index: 4, kind: input, shape index: {}]
  %s5 = inlined_call_operand.vmem [shape: f32[3,1,2], index: 5, kind: input, shape index: {}, may-alias: {5,8}]
  %s6 = inlined_call_operand.vmem [shape: f32[3,1,2], index: 6, kind: input, shape index: {}]
  %s7 = inlined_call_operand.vmem [shape: bf16[3,4,2,2], index: 7, kind: input, shape index: {}]
  %s8 = inlined_call_operand.vmem [shape: f32[3,1,2], index: 8, kind: input, shape index: {}, may-alias: {5,8}]
  %s9 = inlined_call_operand.vmem [shape: f32[3,1,2], index: 9, kind: input, shape index: {}]
  %s10 = inlined_call_operand.vmem [shape: bf16[8,2], index: 10, kind: input, shape index: {}]
  %s11 = inlined_call_operand.vmem [shape: f32[1,2], index: 11, kind: input, shape index: {}]
  %s12 = inlined_call_operand.vmem [shape: f32[1,2], index: 12, kind: input, shape index: {}]
  %s13 = inlined_call_operand.vmem [shape: bf16[2,16,8], index: 13, kind: output, shape index: {}]
  %s14 = sld [smem:[#allocation0]]
  $region85: #{_lambda_.5} parent=0
    _
  %s16 = ssub.s32 1, %s14
  %s17 = scalar_select 0, %s16, %s14
  loop: start=0, step=1, limit=4
  $region2: #{_lambda_.5} parent=0 // loop_pre_header
    _
  $region3: #{_lambda_.5} parent=0 // loop_header
    %s19 = sphi 0, %s23
    %p20 = scmp.ge.s32.totalorder %s19, 4
    %s29 = sphi 0, %s31
    %s32 = sphi 0, %s29
    %s33 = sphi 0, %s32
    %s49 = sphi 0, %s33
    %s53 = sphi 0, %s53
    %s55 = sphi 0, %s53
    %s56 = sphi 0, %s55
    %s70 = sphi 0, %s56
    %s74 = sphi 0, %s74
    %s76 = sphi 0, %s74
    %s77 = sphi 0, %s76
    %s91 = sphi 0, %s77
    %s95 = sphi 0, %s95
    %s97 = sphi 0, %s95
    %s98 = sphi 0, %s97
    %s112 = sphi 0, %s98
    %s116 = sphi 0, %s116
    %s118 = sphi 0, %s116
    %s119 = sphi 0, %s118
    %s133 = sphi 0, %s119
    %s137 = sphi 0, %s137
    %s139 = sphi 0, %s137
    %s140 = sphi 0, %s139
    %s154 = sphi 0, %s140
    %s158 = sphi 0, %s158
    %s160 = sphi 0, %s158
    %s161 = sphi 0, %s160
    %s175 = sphi 0, %s161
    %s179 = sphi 0, %s179
    %s181 = sphi 0, %s179
    %s182 = sphi 0, %s181
    %s196 = sphi 0, %s182
    %s200 = sphi 0, %s200
    %s202 = sphi 0, %s200
    %s203 = sphi 0, %s202
    %s217 = sphi 0, %s203
    %s221 = sphi 0, %s221
    %s223 = sphi 0, %s221
    %s224 = sphi 0, %s223
    %s238 = sphi 0, %s224
    %s242 = sphi 0, %s242
    %s244 = sphi 0, %s242
    %s245 = sphi 0, %s244
    %s259 = sphi 0, %s245
    %s263 = sphi 0, %s263
    %s265 = sphi 0, %s263
    %s266 = sphi 0, %s265
    %s280 = sphi 0, %s266
    %s284 = sphi 0, %s284
    %s286 = sphi 0, %s284
    %s287 = sphi 0, %s286
    %s301 = sphi 0, %s287
    %s307 = sphi 0, %s309
    %s310 = sphi 0, %s307
    %s311 = sphi 0, %s310
    %s327 = sphi 0, %s311
  $region4: #{_lambda_.5} parent=0 // loop_header_branch
    %22 = sbr.rel (%p20) target = $region8
  $region5: #{_lambda_.5} parent=0 // loop_body
    %s24 = ssub.s32 %s19, 1
    %s25 = ssub.s32 %s19, 2
    %s26 = sadd.s32 %s19, 1
    %s27 = ssub.s32 %s19, %s26
    %p28 = scmp.eq.s32.totalorder %s27, 0
    %s30 = sadd.s32 %s29, 1
    %s31 = scalar_select %p28, %s29, %s30
    %p34 = pneg %p28
    %p35 = scmp.eq.s32.totalorder %s19, 1
    %p36 = por %p34, %p35
    %p37 = scmp.ne.s32.totalorder %s29, %s32
    %p38 = scmp.eq.s32.totalorder %s19, 0
    %p39 = por %p37, %p38
    %p40 = scmp.ne.s32.totalorder %s29, %s32
    %p41 = scmp.eq.s32.totalorder %s24, 1
    %p42 = por %p40, %p41
    %p43 = scmp.ne.s32.totalorder %s32, %s33
    %p44 = scmp.eq.s32.totalorder %s24, 0
    %p45 = por %p43, %p44
    %p46 = scmp.ne.s32.totalorder %s32, %s33
    %p47 = scmp.eq.s32.totalorder %s25, 1
    %p48 = por %p46, %p47
    %p50 = scmp.ne.s32.totalorder %s33, %s49
    %p51 = scmp.eq.s32.totalorder %s25, 0
    %p52 = por %p50, %p51
    %s54 = sadd.s32 %s53, 1
    %p57 = scmp.eq.s32.totalorder %s19, 1
    %p58 = scmp.ne.s32.totalorder %s53, %s55
    %p59 = scmp.eq.s32.totalorder %s19, 0
    %p60 = por %p58, %p59
    %p61 = scmp.ne.s32.totalorder %s53, %s55
    %p62 = scmp.eq.s32.totalorder %s24, 1
    %p63 = por %p61, %p62
    %p64 = scmp.ne.s32.totalorder %s55, %s56
    %p65 = scmp.eq.s32.totalorder %s24, 0
    %p66 = por %p64, %p65
    %p67 = scmp.ne.s32.totalorder %s55, %s56
    %p68 = scmp.eq.s32.totalorder %s25, 1
    %p69 = por %p67, %p68
    %p71 = scmp.ne.s32.totalorder %s56, %s70
    %p72 = scmp.eq.s32.totalorder %s25, 0
    %p73 = por %p71, %p72
    %s75 = sadd.s32 %s74, 1
    %p78 = scmp.eq.s32.totalorder %s19, 1
    %p79 = scmp.ne.s32.totalorder %s74, %s76
    %p80 = scmp.eq.s32.totalorder %s19, 0
    %p81 = por %p79, %p80
    %p82 = scmp.ne.s32.totalorder %s74, %s76
    %p83 = scmp.eq.s32.totalorder %s24, 1
    %p84 = por %p82, %p83
    %p85 = scmp.ne.s32.totalorder %s76, %s77
    %p86 = scmp.eq.s32.totalorder %s24, 0
    %p87 = por %p85, %p86
    %p88 = scmp.ne.s32.totalorder %s76, %s77
    %p89 = scmp.eq.s32.totalorder %s25, 1
    %p90 = por %p88, %p89
    %p92 = scmp.ne.s32.totalorder %s77, %s91
    %p93 = scmp.eq.s32.totalorder %s25, 0
    %p94 = por %p92, %p93
    %s96 = sadd.s32 %s95, 1
    %p99 = scmp.eq.s32.totalorder %s19, 1
    %p100 = scmp.ne.s32.totalorder %s95, %s97
    %p101 = scmp.eq.s32.totalorder %s19, 0
    %p102 = por %p100, %p101
    %p103 = scmp.ne.s32.totalorder %s95, %s97
    %p104 = scmp.eq.s32.totalorder %s24, 1
    %p105 = por %p103, %p104
    %p106 = scmp.ne.s32.totalorder %s97, %s98
    %p107 = scmp.eq.s32.totalorder %s24, 0
    %p108 = por %p106, %p107
    %p109 = scmp.ne.s32.totalorder %s97, %s98
    %p110 = scmp.eq.s32.totalorder %s25, 1
    %p111 = por %p109, %p110
    %p113 = scmp.ne.s32.totalorder %s98, %s112
    %p114 = scmp.eq.s32.totalorder %s25, 0
    %p115 = por %p113, %p114
    %s117 = sadd.s32 %s116, 1
    %p120 = scmp.eq.s32.totalorder %s19, 1
    %p121 = scmp.ne.s32.totalorder %s116, %s118
    %p122 = scmp.eq.s32.totalorder %s19, 0
    %p123 = por %p121, %p122
    %p124 = scmp.ne.s32.totalorder %s116, %s118
    %p125 = scmp.eq.s32.totalorder %s24, 1
    %p126 = por %p124, %p125
    %p127 = scmp.ne.s32.totalorder %s118, %s119
    %p128 = scmp.eq.s32.totalorder %s24, 0
    %p129 = por %p127, %p128
    %p130 = scmp.ne.s32.totalorder %s118, %s119
    %p131 = scmp.eq.s32.totalorder %s25, 1
    %p132 = por %p130, %p131
    %p134 = scmp.ne.s32.totalorder %s119, %s133
    %p135 = scmp.eq.s32.totalorder %s25, 0
    %p136 = por %p134, %p135
    %s138 = sadd.s32 %s137, 1
    %p141 = scmp.eq.s32.totalorder %s19, 1
    %p142 = scmp.ne.s32.totalorder %s137, %s139
    %p143 = scmp.eq.s32.totalorder %s19, 0
    %p144 = por %p142, %p143
    %p145 = scmp.ne.s32.totalorder %s137, %s139
    %p146 = scmp.eq.s32.totalorder %s24, 1
    %p147 = por %p145, %p146
    %p148 = scmp.ne.s32.totalorder %s139, %s140
    %p149 = scmp.eq.s32.totalorder %s24, 0
    %p150 = por %p148, %p149
    %p151 = scmp.ne.s32.totalorder %s139, %s140
    %p152 = scmp.eq.s32.totalorder %s25, 1
    %p153 = por %p151, %p152
    %p155 = scmp.ne.s32.totalorder %s140, %s154
    %p156 = scmp.eq.s32.totalorder %s25, 0
    %p157 = por %p155, %p156
    %s159 = sadd.s32 %s158, 1
    %p162 = scmp.eq.s32.totalorder %s19, 1
    %p163 = scmp.ne.s32.totalorder %s158, %s160
    %p164 = scmp.eq.s32.totalorder %s19, 0
    %p165 = por %p163, %p164
    %p166 = scmp.ne.s32.totalorder %s158, %s160
    %p167 = scmp.eq.s32.totalorder %s24, 1
    %p168 = por %p166, %p167
    %p169 = scmp.ne.s32.totalorder %s160, %s161
    %p170 = scmp.eq.s32.totalorder %s24, 0
    %p171 = por %p169, %p170
    %p172 = scmp.ne.s32.totalorder %s160, %s161
    %p173 = scmp.eq.s32.totalorder %s25, 1
    %p174 = por %p172, %p173
    %p176 = scmp.ne.s32.totalorder %s161, %s175
    %p177 = scmp.eq.s32.totalorder %s25, 0
    %p178 = por %p176, %p177
    %s180 = sadd.s32 %s179, 1
    %p183 = scmp.eq.s32.totalorder %s19, 1
    %p184 = scmp.ne.s32.totalorder %s179, %s181
    %p185 = scmp.eq.s32.totalorder %s19, 0
    %p186 = por %p184, %p185
    %p187 = scmp.ne.s32.totalorder %s179, %s181
    %p188 = scmp.eq.s32.totalorder %s24, 1
    %p189 = por %p187, %p188
    %p190 = scmp.ne.s32.totalorder %s181, %s182
    %p191 = scmp.eq.s32.totalorder %s24, 0
    %p192 = por %p190, %p191
    %p193 = scmp.ne.s32.totalorder %s181, %s182
    %p194 = scmp.eq.s32.totalorder %s25, 1
    %p195 = por %p193, %p194
    %p197 = scmp.ne.s32.totalorder %s182, %s196
    %p198 = scmp.eq.s32.totalorder %s25, 0
    %p199 = por %p197, %p198
    %s201 = sadd.s32 %s200, 1
    %p204 = scmp.eq.s32.totalorder %s19, 1
    %p205 = scmp.ne.s32.totalorder %s200, %s202
    %p206 = scmp.eq.s32.totalorder %s19, 0
    %p207 = por %p205, %p206
    %p208 = scmp.ne.s32.totalorder %s200, %s202
    %p209 = scmp.eq.s32.totalorder %s24, 1
    %p210 = por %p208, %p209
    %p211 = scmp.ne.s32.totalorder %s202, %s203
    %p212 = scmp.eq.s32.totalorder %s24, 0
    %p213 = por %p211, %p212
    %p214 = scmp.ne.s32.totalorder %s202, %s203
    %p215 = scmp.eq.s32.totalorder %s25, 1
    %p216 = por %p214, %p215
    %p218 = scmp.ne.s32.totalorder %s203, %s217
    %p219 = scmp.eq.s32.totalorder %s25, 0
    %p220 = por %p218, %p219
    %s222 = sadd.s32 %s221, 1
    %p225 = scmp.eq.s32.totalorder %s19, 1
    %p226 = scmp.ne.s32.totalorder %s221, %s223
    %p227 = scmp.eq.s32.totalorder %s19, 0
    %p228 = por %p226, %p227
    %p229 = scmp.ne.s32.totalorder %s221, %s223
    %p230 = scmp.eq.s32.totalorder %s24, 1
    %p231 = por %p229, %p230
    %p232 = scmp.ne.s32.totalorder %s223, %s224
    %p233 = scmp.eq.s32.totalorder %s24, 0
    %p234 = por %p232, %p233
    %p235 = scmp.ne.s32.totalorder %s223, %s224
    %p236 = scmp.eq.s32.totalorder %s25, 1
    %p237 = por %p235, %p236
    %p239 = scmp.ne.s32.totalorder %s224, %s238
    %p240 = scmp.eq.s32.totalorder %s25, 0
    %p241 = por %p239, %p240
    %s243 = sadd.s32 %s242, 1
    %p246 = scmp.eq.s32.totalorder %s19, 1
    %p247 = scmp.ne.s32.totalorder %s242, %s244
    %p248 = scmp.eq.s32.totalorder %s19, 0
    %p249 = por %p247, %p248
    %p250 = scmp.ne.s32.totalorder %s242, %s244
    %p251 = scmp.eq.s32.totalorder %s24, 1
    %p252 = por %p250, %p251
    %p253 = scmp.ne.s32.totalorder %s244, %s245
    %p254 = scmp.eq.s32.totalorder %s24, 0
    %p255 = por %p253, %p254
    %p256 = scmp.ne.s32.totalorder %s244, %s245
    %p257 = scmp.eq.s32.totalorder %s25, 1
    %p258 = por %p256, %p257
    %p260 = scmp.ne.s32.totalorder %s245, %s259
    %p261 = scmp.eq.s32.totalorder %s25, 0
    %p262 = por %p260, %p261
    %s264 = sadd.s32 %s263, 1
    %p267 = scmp.eq.s32.totalorder %s19, 1
    %p268 = scmp.ne.s32.totalorder %s263, %s265
    %p269 = scmp.eq.s32.totalorder %s19, 0
    %p270 = por %p268, %p269
    %p271 = scmp.ne.s32.totalorder %s263, %s265
    %p272 = scmp.eq.s32.totalorder %s24, 1
    %p273 = por %p271, %p272
    %p274 = scmp.ne.s32.totalorder %s265, %s266
    %p275 = scmp.eq.s32.totalorder %s24, 0
    %p276 = por %p274, %p275
    %p277 = scmp.ne.s32.totalorder %s265, %s266
    %p278 = scmp.eq.s32.totalorder %s25, 1
    %p279 = por %p277, %p278
    %p281 = scmp.ne.s32.totalorder %s266, %s280
    %p282 = scmp.eq.s32.totalorder %s25, 0
    %p283 = por %p281, %p282
    %s285 = sadd.s32 %s284, 1
    %p288 = scmp.eq.s32.totalorder %s19, 1
    %p289 = scmp.ne.s32.totalorder %s284, %s286
    %p290 = scmp.eq.s32.totalorder %s19, 0
    %p291 = por %p289, %p290
    %p292 = scmp.ne.s32.totalorder %s284, %s286
    %p293 = scmp.eq.s32.totalorder %s24, 1
    %p294 = por %p292, %p293
    %p295 = scmp.ne.s32.totalorder %s286, %s287
    %p296 = scmp.eq.s32.totalorder %s24, 0
    %p297 = por %p295, %p296
    %p298 = scmp.ne.s32.totalorder %s286, %s287
    %p299 = scmp.eq.s32.totalorder %s25, 1
    %p300 = por %p298, %p299
    %p302 = scmp.ne.s32.totalorder %s287, %s301
    %p303 = scmp.eq.s32.totalorder %s25, 0
    %p304 = por %p302, %p303
    %s305 = ssub.s32 %s19, %s26
    %p306 = scmp.eq.s32.totalorder %s305, 0
    %s308 = sadd.s32 %s307, 1
    %s309 = scalar_select %p306, %s307, %s308
    %p312 = pneg %p306
    %p313 = scmp.eq.s32.totalorder %s19, 1
    %p314 = por %p312, %p313
    %p315 = scmp.ne.s32.totalorder %s307, %s310
    %p316 = scmp.eq.s32.totalorder %s19, 0
    %p317 = por %p315, %p316
    %p318 = scmp.ne.s32.totalorder %s307, %s310
    %p319 = scmp.eq.s32.totalorder %s24, 1
    %p320 = por %p318, %p319
    %p321 = scmp.ne.s32.totalorder %s310, %s311
    %p322 = scmp.eq.s32.totalorder %s24, 0
    %p323 = por %p321, %p322
    %p324 = scmp.ne.s32.totalorder %s310, %s311
    %p325 = scmp.eq.s32.totalorder %s25, 1
    %p326 = por %p324, %p325
    %p328 = scmp.ne.s32.totalorder %s311, %s327
    %p329 = scmp.eq.s32.totalorder %s25, 0
    %p330 = por %p328, %p329
    %p331 = scmp.le.s32.totalorder 1, %s19
    %p332 = scmp.lt.s32.totalorder %s19, 3
    %p333 = pnand %p331, %p332
    %p334 = pneg %p333
    // Predicated region
    $region9: #{_lambda_.5} parent=5 // pred_check
      _
    $region10: #{_lambda_.5} parent=5 // pred_check_branch
      %336 = sbr.rel (%p333) target = $region12
    $region11: #{_lambda_.5} parent=5 // pred_region
      %s337 = ssub.s32 %s19, 1
      // Predicated region
      $region13: #{_lambda_.5} parent=11 // pred_check
        %p338 = pneg %p66
      $region14: #{_lambda_.5} parent=11 // pred_check_branch
        %340 = sbr.rel (%p338) target = $region16
      $region15: #{_lambda_.5} parent=11 // pred_region
        _
      $region16: #{_lambda_.5} parent=11 // pred_fallthru
        _
      // Predicated region
      $region17: #{_lambda_.5} parent=11 // pred_check
        %p341 = pneg %p87
      $region18: #{_lambda_.5} parent=11 // pred_check_branch
        %343 = sbr.rel (%p341) target = $region20
      $region19: #{_lambda_.5} parent=11 // pred_region
        _
      $region20: #{_lambda_.5} parent=11 // pred_fallthru
        _
      // Predicated region
      $region21: #{_lambda_.5} parent=11 // pred_check
        %p344 = pneg %p108
      $region22: #{_lambda_.5} parent=11 // pred_check_branch
        %346 = sbr.rel (%p344) target = $region24
      $region23: #{_lambda_.5} parent=11 // pred_region
        _
      $region24: #{_lambda_.5} parent=11 // pred_fallthru
        _
      // Predicated region
      $region25: #{_lambda_.5} parent=11 // pred_check
        %p347 = pneg %p129
      $region26: #{_lambda_.5} parent=11 // pred_check_branch
        %349 = sbr.rel (%p347) target = $region28
      $region27: #{_lambda_.5} parent=11 // pred_region
        _
      $region28: #{_lambda_.5} parent=11 // pred_fallthru
        _
      // Predicated region
      $region29: #{_lambda_.5} parent=11 // pred_check
        %p350 = pneg %p150
      $region30: #{_lambda_.5} parent=11 // pred_check_branch
        %352 = sbr.rel (%p350) target = $region32
      $region31: #{_lambda_.5} parent=11 // pred_region
        _
      $region32: #{_lambda_.5} parent=11 // pred_fallthru
        _
      // Predicated region
      $region33: #{_lambda_.5} parent=11 // pred_check
        %p353 = pneg %p171
      $region34: #{_lambda_.5} parent=11 // pred_check_branch
        %355 = sbr.rel (%p353) target = $region36
      $region35: #{_lambda_.5} parent=11 // pred_region
        _
      $region36: #{_lambda_.5} parent=11 // pred_fallthru
        _
      // Predicated region
      $region37: #{_lambda_.5} parent=11 // pred_check
        %p356 = pneg %p192
      $region38: #{_lambda_.5} parent=11 // pred_check_branch
        %358 = sbr.rel (%p356) target = $region40
      $region39: #{_lambda_.5} parent=11 // pred_region
        _
      $region40: #{_lambda_.5} parent=11 // pred_fallthru
        _
      // Predicated region
      $region41: #{_lambda_.5} parent=11 // pred_check
        %p359 = pneg %p213
      $region42: #{_lambda_.5} parent=11 // pred_check_branch
        %361 = sbr.rel (%p359) target = $region44
      $region43: #{_lambda_.5} parent=11 // pred_region
        _
      $region44: #{_lambda_.5} parent=11 // pred_fallthru
        _
      // Predicated region
      $region45: #{_lambda_.5} parent=11 // pred_check
        %p362 = pneg %p234
      $region46: #{_lambda_.5} parent=11 // pred_check_branch
        %364 = sbr.rel (%p362) target = $region48
      $region47: #{_lambda_.5} parent=11 // pred_region
        _
      $region48: #{_lambda_.5} parent=11 // pred_fallthru
        _
      // Predicated region
      $region49: #{_lambda_.5} parent=11 // pred_check
        %p365 = pneg %p255
      $region50: #{_lambda_.5} parent=11 // pred_check_branch
        %367 = sbr.rel (%p365) target = $region52
      $region51: #{_lambda_.5} parent=11 // pred_region
        _
      $region52: #{_lambda_.5} parent=11 // pred_fallthru
        _
      // Predicated region
      $region53: #{_lambda_.5} parent=11 // pred_check
        %p368 = pneg %p276
      $region54: #{_lambda_.5} parent=11 // pred_check_branch
        %370 = sbr.rel (%p368) target = $region56
      $region55: #{_lambda_.5} parent=11 // pred_region
        _
      $region56: #{_lambda_.5} parent=11 // pred_fallthru
        _
      // Predicated region
      $region57: #{_lambda_.5} parent=11 // pred_check
        %p371 = pneg %p297
      $region58: #{_lambda_.5} parent=11 // pred_check_branch
        %373 = sbr.rel (%p371) target = $region60
      $region59: #{_lambda_.5} parent=11 // pred_region
        _
      $region60: #{_lambda_.5} parent=11 // pred_fallthru
        _
    $region12: #{_lambda_.5} parent=5 // pred_fallthru
      _
    %p374 = scmp.lt.s32.totalorder %s19, 2
    // Predicated region
    $region61: #{_lambda_.5} parent=5 // pred_check
      %p375 = pneg %p374
    $region62: #{_lambda_.5} parent=5 // pred_check_branch
      %377 = sbr.rel (%p375) target = $region64
    $region63: #{_lambda_.5} parent=5 // pred_region
      // Predicated region
      $region65: #{_lambda_.5} parent=63 // pred_check
        %p378 = pneg %p39
      $region66: #{_lambda_.5} parent=63 // pred_check_branch
        %380 = sbr.rel (%p378) target = $region68
      $region67: #{_lambda_.5} parent=63 // pred_region
        %p381 = scmp.lt.s32.totalorder %s19, 1
        %s382 = scalar_select %p381, %s19, 1
        %s383 = smul.addr %s382, 6
        %s384 = smul.addr %s383, 4
        %s385 = scalar_lea.vmem %s0, %s384
      $region68: #{_lambda_.5} parent=63 // pred_fallthru
        _
    $region64: #{_lambda_.5} parent=5 // pred_fallthru
      _
    %p386 = scmp.le.s32.totalorder 1, %s19
    %p387 = scmp.lt.s32.totalorder %s19, 3
    %p388 = pnand %p386, %p387
    %p389 = pneg %p388
    // Predicated region
    $region69: #{_lambda_.5} parent=5 // pred_check
      _
    $region70: #{_lambda_.5} parent=5 // pred_check_branch
      %391 = sbr.rel (%p388) target = $region72
    $region71: #{_lambda_.5} parent=5 // pred_region
      %s392 = ssub.s32 %s19, 1
      %p393 = scmp.lt.s32.totalorder %s24, 1
      %s394 = scalar_select %p393, %s24, 1
      %s395 = smul.addr %s394, 6
      %s396 = smul.addr %s395, 4
      %s397 = scalar_lea.vmem %s0, %s396
      %p398 = pneg %p45
      %p399 = pneg %p42
      %p400 = pneg %p66
      %p401 = pneg %p63
      %p402 = pneg %p87
      %p403 = pneg %p84
      %p404 = pneg %p108
      %p405 = pneg %p105
      %p406 = pneg %p129
      %p407 = pneg %p126
      %p408 = pneg %p150
      %p409 = pneg %p147
      %p410 = pneg %p171
      %p411 = pneg %p168
      %p412 = pneg %p192
      %p413 = pneg %p189
      %p414 = pneg %p213
      %p415 = pneg %p210
      %p416 = pneg %p234
      %p417 = pneg %p231
      %p418 = pneg %p255
      %p419 = pneg %p252
      %p420 = pneg %p276
      %p421 = pneg %p273
      %p422 = pneg %p297
      %p423 = pneg %p294
      %p424 = pneg %p323
      %p425 = pneg %p320
      %p426 = scmp.lt.s32.totalorder %s24, 1
      %s427 = scalar_select %p426, %s24, 1
      %s428 = smul.addr %s427, 2
      %s429 = smul.addr %s428, 4
      %s430 = scalar_lea.vmem %s13, %s429
      %p431 = scmp.lt.s32.totalorder %s24, 1
      %s432 = scalar_select %p431, %s24, 1
      %s433 = smul.addr %s432, 6
      %s434 = smul.addr %s433, 4
      %s435 = scalar_lea.vmem %s0, %s434
      %p436 = scmp.lt.s32.totalorder %s24, 1
      %s437 = scalar_select %p436, %s24, 1
      %s438 = smul.addr %s437, 2
      %s439 = smul.addr %s438, 4
      %s440 = scalar_lea.vmem %s13, %s439
      %v442 = vld [vmem:[%s435] sm:$0xf]
      %v443 = vld [vmem:[%s435 + $0x4] sm:$0xf]
      %v444 = vld [vmem:[%s1] sm:$0x3]
      %s445 = scalar_lea.vmem %s435, 12
      %v446 = vld [vmem:[%s445] sm:$0xf]
      %v447 = vld [vmem:[%s445 + $0x4] sm:$0xf]
      %s448 = scalar_lea.vmem %s1, 2
      %v449 = vld [vmem:[%s448] sm:$0x3]
      %v452 = vunpack.c.l.b16 %v446
      %v453 = vunpack.c.l.b16 %v447
      %v454 = vpack.c.b16 %v453, %v452
      %vm455 = vcmask 31744
      %v457 = vsel %vm455, %v454, 0
      %vm459 = vcmask 1041408
      %v461 = vsel %vm459, %v449, 0
      %463 = vmatpush.bf16.msra.mxu0 0
      %464 = vmatpush.bf16.msra.mxu0 0
      %465 = vmatpush.bf16.msra.mxu0 0
      %466 = vmatpush.bf16.msra.mxu0 0
      %467 = vmatpush.bf16.msra.mxu0 0
      %468 = vmatpush.bf16.msra.mxu0 0
      %469 = vmatpush.bf16.msra.mxu0 0
      %470 = vmatpush.bf16.msra.mxu0 %v461
      %471 = vmatmul.bf16.gmra.mxu0 %v457
      %v472 = vpop.f32.mrf.mxu0
      %v473 = vadd.f32 0.0, %v472
      %v474 = vpop.f32.mrf.mxu0
      %v475 = vadd.f32 0.0, %v474
      %476 = vdwg.mxu0
      %v479 = vunpack.c.l.b16 %v442
      %v480 = vunpack.c.l.b16 %v443
      %v481 = vpack.c.b16 %v480, %v479
      %v483 = vsel %vm455, %v481, 0
      %v486 = vsel %vm459, %v444, 0
      %488 = vmatpush.bf16.msra.mxu0 0
      %489 = vmatpush.bf16.msra.mxu0 0
      %490 = vmatpush.bf16.msra.mxu0 0
      %491 = vmatpush.bf16.msra.mxu0 0
      %492 = vmatpush.bf16.msra.mxu0 0
      %493 = vmatpush.bf16.msra.mxu0 0
      %494 = vmatpush.bf16.msra.mxu0 0
      %495 = vmatpush.bf16.msra.mxu0 %v486
      %496 = vmatmul.bf16.gmra.mxu0 %v483
      %v497 = vpop.f32.mrf.mxu0
      %v498 = vadd.f32 %v473, %v497
      %v499 = vpop.f32.mrf.mxu0
      %v500 = vadd.f32 %v475, %v499
      %501 = vdwg.mxu0
      %v502 = vld [vmem:[%s435] sm:$0xf]
      %v503 = vld [vmem:[%s435 + $0x4] sm:$0xf]
      %v504 = vld [vmem:[%s435 + $0x8] sm:$0x1]
      %s505 = scalar_lea.vmem %s1, 4
      %v506 = vld [vmem:[%s505] sm:$0x3]
      %v510 = vunpack.c.l.b16 %v502
      %v511 = vunpack.c.l.b16 %v503
      %v512 = vunpack.c.l.b16 %v504
      %v513 = vpack.c.b16 %v511, %v510
      %v514 = vpack.c.b16 %v512, %v512
      %vm515 = vsmask.f32 7424
      %v517 = vshrl.u32 %v513, 16
      %v519 = vshll.u32 %v513, 16
      %v521 = vrot.slane %v519, 1
      %v522 = vor.u32 %v517, %v521
      %v524 = vshll.u32 %v514, 16
      %v526 = vrot.slane %v524, 1
      %v527 = vsel %vm515, %v522, %v526
      %v529 = vsel %vm455, %v527, 0
      %v532 = vsel %vm459, %v506, 0
      %534 = vmatpush.bf16.msra.mxu0 0
      %535 = vmatpush.bf16.msra.mxu0 0
      %536 = vmatpush.bf16.msra.mxu0 0
      %537 = vmatpush.bf16.msra.mxu0 0
      %538 = vmatpush.bf16.msra.mxu0 0
      %539 = vmatpush.bf16.msra.mxu0 0
      %540 = vmatpush.bf16.msra.mxu0 0
      %541 = vmatpush.bf16.msra.mxu0 %v532
      %542 = vmatmul.bf16.gmra.mxu0 %v529
      %v543 = vpop.f32.mrf.mxu0
      %v544 = vadd.f32 0.0, %v543
      %v545 = vpop.f32.mrf.mxu0
      %v546 = vadd.f32 0.0, %v545
      %547 = vdwg.mxu0
      %v548 = vadd.f32 %v498, %v544
      %v549 = vadd.f32 %v500, %v546
      %v550 = vld [vmem:[%s445] sm:$0xf]
      %v551 = vld [vmem:[%s445 + $0x4] sm:$0xf]
      %v552 = vld [vmem:[%s445 + $0x8] sm:$0x1]
      %s553 = scalar_lea.vmem %s1, 6
      %v554 = vld [vmem:[%s553] sm:$0x3]
      %v558 = vunpack.c.l.b16 %v550
      %v559 = vunpack.c.l.b16 %v551
      %v560 = vunpack.c.l.b16 %v552
      %v561 = vpack.c.b16 %v559, %v558
      %v562 = vpack.c.b16 %v560, %v560
      %v564 = vshrl.u32 %v561, 16
      %v566 = vshll.u32 %v561, 16
      %v568 = vrot.slane %v566, 1
      %v569 = vor.u32 %v564, %v568
      %v571 = vshll.u32 %v562, 16
      %v573 = vrot.slane %v571, 1
      %v574 = vsel %vm515, %v569, %v573
      %v576 = vsel %vm455, %v574, 0
      %v579 = vsel %vm459, %v554, 0
      %581 = vmatpush.bf16.msra.mxu0 0
      %582 = vmatpush.bf16.msra.mxu0 0
      %583 = vmatpush.bf16.msra.mxu0 0
      %584 = vmatpush.bf16.msra.mxu0 0
      %585 = vmatpush.bf16.msra.mxu0 0
      %586 = vmatpush.bf16.msra.mxu0 0
      %587 = vmatpush.bf16.msra.mxu0 0
      %588 = vmatpush.bf16.msra.mxu0 %v579
      %589 = vmatmul.bf16.gmra.mxu0 %v576
      %v590 = vpop.f32.mrf.mxu0
      %v591 = vadd.f32 0.0, %v590
      %v592 = vpop.f32.mrf.mxu0
      %v593 = vadd.f32 0.0, %v592
      %594 = vdwg.mxu0
      %v595 = vadd.f32 %v548, %v591
      %v596 = vadd.f32 %v549, %v593
      %v597 = vld [vmem:[%s2] sm:$0x1]
      %v599 = vperm.slane %v597, 0
      %v601 = vmul.f32 %v595, %v599
      %v602 = vmul.f32 %v596, %v599
      %v603 = vld [vmem:[%s3] sm:$0x1]
      %v605 = vperm.slane %v603, 0
      %v607 = vadd.f32 %v601, %v605
      %v608 = vadd.f32 %v602, %v605
      %vm609 = vcmp.ge.f32.partialorder %v607, 0.0
      %vm610 = vcmp.ge.f32.partialorder %v608, 0.0
      %v611 = vmul.f32 %v607, 0.2
      %v612 = vmul.f32 %v608, 0.2
      %v613 = vsel %vm609, %v607, %v611
      %v614 = vsel %vm610, %v608, %v612
      %v615 = vpack.c.bf16 %v614, %v613
      %v616 = vld [vmem:[%s4] sm:$0xf]
      %vm617 = vcmask 64512
      %v619 = vsel %vm617, %v615, 0
      %vm621 = vcmask 1043456
      %v623 = vsel %vm621, %v616, 0
      %625 = vmatpush.bf16.msra.mxu0 0
      %626 = vmatpush.bf16.msra.mxu0 0
      %627 = vmatpush.bf16.msra.mxu0 0
      %628 = vmatpush.bf16.msra.mxu0 0
      %629 = vmatpush.bf16.msra.mxu0 0
      %630 = vmatpush.bf16.msra.mxu0 0
      %631 = vmatpush.bf16.msra.mxu0 0
      %632 = vmatpush.bf16.msra.mxu0 %v623
      %633 = vmatmul.bf16.gmra.mxu0 %v619
      %v634 = vpop.f32.mrf.mxu0
      %v635 = vadd.f32 0.0, %v634
      %v636 = vpop.f32.mrf.mxu0
      %v637 = vadd.f32 0.0, %v636
      %638 = vdwg.mxu0
      %v639 = vld [vmem:[%s5] sm:$0x1]
      %v641 = vperm.slane %v639, 0
      %v643 = vmul.f32 %v635, %v641
      %v644 = vmul.f32 %v637, %v641
      %v645 = vld [vmem:[%s6] sm:$0x1]
      %v647 = vperm.slane %v645, 0
      %v649 = vadd.f32 %v643, %v647
      %v650 = vadd.f32 %v644, %v647
      %vm651 = vcmp.ge.f32.partialorder %v649, 0.0
      %vm652 = vcmp.ge.f32.partialorder %v650, 0.0
      %v653 = vmul.f32 %v649, 0.2
      %v654 = vmul.f32 %v650, 0.2
      %v655 = vsel %vm651, %v649, %v653
      %v656 = vsel %vm652, %v650, %v654
      %v659 = vrot.slane %v655, 4
      %v660 = vrot.slane %v656, 4
      %v661 = vsel %vm621, %v659, %v660
      %v665 = vsel %vm621, 0.0, %v659
      %v666 = vsel %vm621, %v660, 0.0
      %v667 = vpack.c.bf16 %v665, 0.0
      %v668 = vld [vmem:[%s7] sm:$0x1]
      %v669 = vpack.c.bf16 %v661, %v665
      %s670 = scalar_lea.vmem %s7, 1
      %v671 = vld [vmem:[%s670] sm:$0x1]
      %vm672 = vcmask 15360
      %v674 = vsel %vm672, %v669, 0
      %vm676 = vcmask 1040384
      %v678 = vsel %vm676, %v671, 0
      %680 = vmatpush.bf16.msra.mxu0 0
      %681 = vmatpush.bf16.msra.mxu0 0
      %682 = vmatpush.bf16.msra.mxu0 0
      %683 = vmatpush.bf16.msra.mxu0 0
      %684 = vmatpush.bf16.msra.mxu0 0
      %685 = vmatpush.bf16.msra.mxu0 0
      %686 = vmatpush.bf16.msra.mxu0 0
      %687 = vmatpush.bf16.msra.mxu0 %v678
      %688 = vmatmul.bf16.gmra.mxu0 %v674
      %v689 = vpop.f32.mrf.mxu0
      %v690 = vadd.f32 0.0, %v689
      %v691 = vpop.f32.mrf.mxu0
      %v692 = vadd.f32 0.0, %v691
      %693 = vdwg.mxu0
      %v695 = vsel %vm672, %v667, 0
      %v698 = vsel %vm676, %v668, 0
      %700 = vmatpush.bf16.msra.mxu0 0
      %701 = vmatpush.bf16.msra.mxu0 0
      %702 = vmatpush.bf16.msra.mxu0 0
      %703 = vmatpush.bf16.msra.mxu0 0
      %704 = vmatpush.bf16.msra.mxu0 0
      %705 = vmatpush.bf16.msra.mxu0 0
      %706 = vmatpush.bf16.msra.mxu0 0
      %707 = vmatpush.bf16.msra.mxu0 %v698
      %708 = vmatmul.bf16.gmra.mxu0 %v695
      %v709 = vpop.f32.mrf.mxu0
      %v710 = vadd.f32 %v690, %v709
      %v711 = vpop.f32.mrf.mxu0
      %v712 = vadd.f32 %v692, %v711
      %713 = vdwg.mxu0
      %v714 = vpack.c.bf16 %v666, %v661
      %s715 = scalar_lea.vmem %s7, 2
      %v716 = vld [vmem:[%s715] sm:$0x1]
      %v718 = vsel %vm672, %v714, 0
      %v721 = vsel %vm676, %v716, 0
      %723 = vmatpush.bf16.msra.mxu0 0
      %724 = vmatpush.bf16.msra.mxu0 0
      %725 = vmatpush.bf16.msra.mxu0 0
      %726 = vmatpush.bf16.msra.mxu0 0
      %727 = vmatpush.bf16.msra.mxu0 0
      %728 = vmatpush.bf16.msra.mxu0 0
      %729 = vmatpush.bf16.msra.mxu0 0
      %730 = vmatpush.bf16.msra.mxu0 %v721
      %731 = vmatmul.bf16.gmra.mxu0 %v718
      %v732 = vpop.f32.mrf.mxu0
      %v733 = vadd.f32 0.0, %v732
      %v734 = vpop.f32.mrf.mxu0
      %v735 = vadd.f32 0.0, %v734
      %736 = vdwg.mxu0
      %v737 = vadd.f32 %v710, %v733
      %v738 = vadd.f32 %v712, %v735
      %v739 = vpack.c.bf16 0.0, %v666
      %s740 = scalar_lea.vmem %s7, 3
      %v741 = vld [vmem:[%s740] sm:$0x1]
      %v743 = vsel %vm672, %v739, 0
      %v746 = vsel %vm676, %v741, 0
      %748 = vmatpush.bf16.msra.mxu0 0
      %749 = vmatpush.bf16.msra.mxu0 0
      %750 = vmatpush.bf16.msra.mxu0 0
      %751 = vmatpush.bf16.msra.mxu0 0
      %752 = vmatpush.bf16.msra.mxu0 0
      %753 = vmatpush.bf16.msra.mxu0 0
      %754 = vmatpush.bf16.msra.mxu0 0
      %755 = vmatpush.bf16.msra.mxu0 %v746
      %756 = vmatmul.bf16.gmra.mxu0 %v743
      %v757 = vpop.f32.mrf.mxu0
      %v758 = vadd.f32 0.0, %v757
      %v759 = vpop.f32.mrf.mxu0
      %v760 = vadd.f32 0.0, %v759
      %761 = vdwg.mxu0
      %v762 = vadd.f32 %v737, %v758
      %v763 = vadd.f32 %v738, %v760
      %v764 = vld [vmem:[%s8] sm:$0x1]
      %v766 = vperm.slane %v764, 0
      %v768 = vmul.f32 %v762, %v766
      %v769 = vmul.f32 %v763, %v766
      %v770 = vld [vmem:[%s9] sm:$0x1]
      %v772 = vperm.slane %v770, 0
      %v774 = vadd.f32 %v768, %v772
      %v775 = vadd.f32 %v769, %v772
      %s776 = scalar_lea.vmem %s4, 4
      %v777 = vld [vmem:[%s776] sm:$0xf]
      %v779 = vsel %vm621, %v777, 0
      %781 = vmatpush.bf16.msra.mxu0 0
      %782 = vmatpush.bf16.msra.mxu0 0
      %783 = vmatpush.bf16.msra.mxu0 0
      %784 = vmatpush.bf16.msra.mxu0 0
      %785 = vmatpush.bf16.msra.mxu0 0
      %786 = vmatpush.bf16.msra.mxu0 0
      %787 = vmatpush.bf16.msra.mxu0 0
      %788 = vmatpush.bf16.msra.mxu0 %v779
      %789 = vmatmul.bf16.gmra.mxu0 %v619
      %v790 = vpop.f32.mrf.mxu0
      %v791 = vadd.f32 0.0, %v790
      %v792 = vpop.f32.mrf.mxu0
      %v793 = vadd.f32 0.0, %v792
      %794 = vdwg.mxu0
      %s795 = scalar_lea.vmem %s5, 1
      %v796 = vld [vmem:[%s795] sm:$0x1]
      %v798 = vperm.slane %v796, 0
      %v800 = vmul.f32 %v791, %v798
      %v801 = vmul.f32 %v793, %v798
      %s802 = scalar_lea.vmem %s6, 1
      %v803 = vld [vmem:[%s802] sm:$0x1]
      %v805 = vperm.slane %v803, 0
      %v807 = vadd.f32 %v800, %v805
      %v808 = vadd.f32 %v801, %v805
      %vm809 = vcmp.ge.f32.partialorder %v807, 0.0
      %vm810 = vcmp.ge.f32.partialorder %v808, 0.0
      %v811 = vmul.f32 %v807, 0.2
      %v812 = vmul.f32 %v808, 0.2
      %v813 = vsel %vm809, %v807, %v811
      %v814 = vsel %vm810, %v808, %v812
      %vm817 = vcmask 1045504
      %v818 = vrot.slane %v813, 2
      %v819 = vrot.slane %v814, 2
      %v820 = vsel %vm817, %v818, %v819
      %v824 = vsel %vm817, 0.0, %v818
      %v825 = vsel %vm817, %v819, 0.0
      %v826 = vpack.c.bf16 %v820, %v824
      %s827 = scalar_lea.vmem %s7, 4
      %v828 = vld [vmem:[%s827] sm:$0x1]
      %v829 = vpack.c.bf16 %v825, %v825
      %s830 = scalar_lea.vmem %s7, 5
      %v831 = vld [vmem:[%s830] sm:$0x1]
      %vm834 = vcmask 1045504
      %v835 = vrot.slane %v826, 2
      %v836 = vrot.slane %v829, 2
      %v837 = vsel %vm834, %v835, %v836
      %v839 = vsel %vm672, %v837, 0
      %v842 = vsel %vm676, %v831, 0
      %844 = vmatpush.bf16.msra.mxu0 0
      %845 = vmatpush.bf16.msra.mxu0 0
      %846 = vmatpush.bf16.msra.mxu0 0
      %847 = vmatpush.bf16.msra.mxu0 0
      %848 = vmatpush.bf16.msra.mxu0 0
      %849 = vmatpush.bf16.msra.mxu0 0
      %850 = vmatpush.bf16.msra.mxu0 0
      %851 = vmatpush.bf16.msra.mxu0 %v842
      %852 = vmatmul.bf16.gmra.mxu0 %v839
      %v853 = vpop.f32.mrf.mxu0
      %v854 = vadd.f32 0.0, %v853
      %v855 = vpop.f32.mrf.mxu0
      %v856 = vadd.f32 0.0, %v855
      %857 = vdwg.mxu0
      %v859 = vsel %vm672, %v826, 0
      %v862 = vsel %vm676, %v828, 0
      %864 = vmatpush.bf16.msra.mxu0 0
      %865 = vmatpush.bf16.msra.mxu0 0
      %866 = vmatpush.bf16.msra.mxu0 0
      %867 = vmatpush.bf16.msra.mxu0 0
      %868 = vmatpush.bf16.msra.mxu0 0
      %869 = vmatpush.bf16.msra.mxu0 0
      %870 = vmatpush.bf16.msra.mxu0 0
      %871 = vmatpush.bf16.msra.mxu0 %v862
      %872 = vmatmul.bf16.gmra.mxu0 %v859
      %v873 = vpop.f32.mrf.mxu0
      %v874 = vadd.f32 %v854, %v873
      %v875 = vpop.f32.mrf.mxu0
      %v876 = vadd.f32 %v856, %v875
      %877 = vdwg.mxu0
      %v878 = vpack.c.bf16 %v825, %v820
      %s879 = scalar_lea.vmem %s7, 6
      %v880 = vld [vmem:[%s879] sm:$0x1]
      %v882 = vsel %vm672, %v878, 0
      %v885 = vsel %vm676, %v880, 0
      %887 = vmatpush.bf16.msra.mxu0 0
      %888 = vmatpush.bf16.msra.mxu0 0
      %889 = vmatpush.bf16.msra.mxu0 0
      %890 = vmatpush.bf16.msra.mxu0 0
      %891 = vmatpush.bf16.msra.mxu0 0
      %892 = vmatpush.bf16.msra.mxu0 0
      %893 = vmatpush.bf16.msra.mxu0 0
      %894 = vmatpush.bf16.msra.mxu0 %v885
      %895 = vmatmul.bf16.gmra.mxu0 %v882
      %v896 = vpop.f32.mrf.mxu0
      %v897 = vadd.f32 0.0, %v896
      %v898 = vpop.f32.mrf.mxu0
      %v899 = vadd.f32 0.0, %v898
      %900 = vdwg.mxu0
      %v901 = vadd.f32 %v874, %v897
      %v902 = vadd.f32 %v876, %v899
      %v903 = vpack.c.bf16 0.0, 0.0
      %s904 = scalar_lea.vmem %s7, 7
      %v905 = vld [vmem:[%s904] sm:$0x1]
      %v908 = vrot.slane %v878, 2
      %v909 = vrot.slane %v903, 2
      %v910 = vsel %vm834, %v908, %v909
      %v912 = vsel %vm672, %v910, 0
      %v915 = vsel %vm676, %v905, 0
      %917 = vmatpush.bf16.msra.mxu0 0
      %918 = vmatpush.bf16.msra.mxu0 0
      %919 = vmatpush.bf16.msra.mxu0 0
      %920 = vmatpush.bf16.msra.mxu0 0
      %921 = vmatpush.bf16.msra.mxu0 0
      %922 = vmatpush.bf16.msra.mxu0 0
      %923 = vmatpush.bf16.msra.mxu0 0
      %924 = vmatpush.bf16.msra.mxu0 %v915
      %925 = vmatmul.bf16.gmra.mxu0 %v912
      %v926 = vpop.f32.mrf.mxu0
      %v927 = vadd.f32 0.0, %v926
      %v928 = vpop.f32.mrf.mxu0
      %v929 = vadd.f32 0.0, %v928
      %930 = vdwg.mxu0
      %v931 = vadd.f32 %v901, %v927
      %v932 = vadd.f32 %v902, %v929
      %s933 = scalar_lea.vmem %s8, 1
      %v934 = vld [vmem:[%s933] sm:$0x1]
      %v936 = vperm.slane %v934, 0
      %v938 = vmul.f32 %v931, %v936
      %v939 = vmul.f32 %v932, %v936
      %s940 = scalar_lea.vmem %s9, 1
      %v941 = vld [vmem:[%s940] sm:$0x1]
      %v943 = vperm.slane %v941, 0
      %v945 = vadd.f32 %v938, %v943
      %v946 = vadd.f32 %v939, %v943
      %s947 = scalar_lea.vmem %s4, 8
      %v948 = vld [vmem:[%s947] sm:$0xf]
      %v950 = vsel %vm621, %v948, 0
      %952 = vmatpush.bf16.msra.mxu0 0
      %953 = vmatpush.bf16.msra.mxu0 0
      %954 = vmatpush.bf16.msra.mxu0 0
      %955 = vmatpush.bf16.msra.mxu0 0
      %956 = vmatpush.bf16.msra.mxu0 0
      %957 = vmatpush.bf16.msra.mxu0 0
      %958 = vmatpush.bf16.msra.mxu0 0
      %959 = vmatpush.bf16.msra.mxu0 %v950
      %960 = vmatmul.bf16.gmra.mxu0 %v619
      %v961 = vpop.f32.mrf.mxu0
      %v962 = vadd.f32 0.0, %v961
      %v963 = vpop.f32.mrf.mxu0
      %v964 = vadd.f32 0.0, %v963
      %965 = vdwg.mxu0
      %s966 = scalar_lea.vmem %s5, 2
      %v967 = vld [vmem:[%s966] sm:$0x1]
      %v969 = vperm.slane %v967, 0
      %v971 = vmul.f32 %v962, %v969
      %v972 = vmul.f32 %v964, %v969
      %s973 = scalar_lea.vmem %s6, 2
      %v974 = vld [vmem:[%s973] sm:$0x1]
      %v976 = vperm.slane %v974, 0
      %v978 = vadd.f32 %v971, %v976
      %v979 = vadd.f32 %v972, %v976
      %vm980 = vcmp.ge.f32.partialorder %v978, 0.0
      %vm981 = vcmp.ge.f32.partialorder %v979, 0.0
      %v982 = vmul.f32 %v978, 0.2
      %v983 = vmul.f32 %v979, 0.2
      %v984 = vsel %vm980, %v978, %v982
      %v985 = vsel %vm981, %v979, %v983
      %vm988 = vcmask 1042432
      %v989 = vrot.slane %v984, 5
      %v990 = vrot.slane %v985, 5
      %v991 = vsel %vm988, %v989, %v990
      %v995 = vsel %vm988, 0.0, %v989
      %v996 = vsel %vm988, %v990, 0.0
      %v997 = vpack.c.bf16 %v991, %v995
      %s998 = scalar_lea.vmem %s7, 8
      %v999 = vld [vmem:[%s998] sm:$0x1]
      %v1000 = vpack.c.bf16 %v996, %v996
      %s1001 = scalar_lea.vmem %s7, 9
      %v1002 = vld [vmem:[%s1001] sm:$0x1]
      %vm1005 = vcmask 1046528
      %v1006 = vrot.slane %v997, 1
      %v1007 = vrot.slane %v1000, 1
      %v1008 = vsel %vm1005, %v1006, %v1007
      %v1010 = vsel %vm672, %v1008, 0
      %v1013 = vsel %vm676, %v1002, 0
      %1015 = vmatpush.bf16.msra.mxu0 0
      %1016 = vmatpush.bf16.msra.mxu0 0
      %1017 = vmatpush.bf16.msra.mxu0 0
      %1018 = vmatpush.bf16.msra.mxu0 0
      %1019 = vmatpush.bf16.msra.mxu0 0
      %1020 = vmatpush.bf16.msra.mxu0 0
      %1021 = vmatpush.bf16.msra.mxu0 0
      %1022 = vmatpush.bf16.msra.mxu0 %v1013
      %1023 = vmatmul.bf16.gmra.mxu0 %v1010
      %v1024 = vpop.f32.mrf.mxu0
      %v1025 = vadd.f32 0.0, %v1024
      %v1026 = vpop.f32.mrf.mxu0
      %v1027 = vadd.f32 0.0, %v1026
      %1028 = vdwg.mxu0
      %v1030 = vsel %vm672, %v997, 0
      %v1033 = vsel %vm676, %v999, 0
      %1035 = vmatpush.bf16.msra.mxu0 0
      %1036 = vmatpush.bf16.msra.mxu0 0
      %1037 = vmatpush.bf16.msra.mxu0 0
      %1038 = vmatpush.bf16.msra.mxu0 0
      %1039 = vmatpush.bf16.msra.mxu0 0
      %1040 = vmatpush.bf16.msra.mxu0 0
      %1041 = vmatpush.bf16.msra.mxu0 0
      %1042 = vmatpush.bf16.msra.mxu0 %v1033
      %1043 = vmatmul.bf16.gmra.mxu0 %v1030
      %v1044 = vpop.f32.mrf.mxu0
      %v1045 = vadd.f32 %v1025, %v1044
      %v1046 = vpop.f32.mrf.mxu0
      %v1047 = vadd.f32 %v1027, %v1046
      %1048 = vdwg.mxu0
      %s1049 = scalar_lea.vmem %s7, 10
      %v1050 = vld [vmem:[%s1049] sm:$0x1]
      %v1051 = vrot.slane %v997, 2
      %v1052 = vrot.slane %v1000, 2
      %v1053 = vsel %vm834, %v1051, %v1052
      %v1055 = vsel %vm672, %v1053, 0
      %v1058 = vsel %vm676, %v1050, 0
      %1060 = vmatpush.bf16.msra.mxu0 0
      %1061 = vmatpush.bf16.msra.mxu0 0
      %1062 = vmatpush.bf16.msra.mxu0 0
      %1063 = vmatpush.bf16.msra.mxu0 0
      %1064 = vmatpush.bf16.msra.mxu0 0
      %1065 = vmatpush.bf16.msra.mxu0 0
      %1066 = vmatpush.bf16.msra.mxu0 0
      %1067 = vmatpush.bf16.msra.mxu0 %v1058
      %1068 = vmatmul.bf16.gmra.mxu0 %v1055
      %v1069 = vpop.f32.mrf.mxu0
      %v1070 = vadd.f32 0.0, %v1069
      %v1071 = vpop.f32.mrf.mxu0
      %v1072 = vadd.f32 0.0, %v1071
      %1073 = vdwg.mxu0
      %v1074 = vadd.f32 %v1045, %v1070
      %v1075 = vadd.f32 %v1047, %v1072
      %s1076 = scalar_lea.vmem %s7, 11
      %v1077 = vld [vmem:[%s1076] sm:$0x1]
      %vm1078 = vcmask 1044480
      %v1079 = vrot.slane %v997, 3
      %v1080 = vrot.slane %v1000, 3
      %v1081 = vsel %vm1078, %v1079, %v1080
      %v1083 = vsel %vm672, %v1081, 0
      %v1086 = vsel %vm676, %v1077, 0
      %1088 = vmatpush.bf16.msra.mxu0 0
      %1089 = vmatpush.bf16.msra.mxu0 0
      %1090 = vmatpush.bf16.msra.mxu0 0
      %1091 = vmatpush.bf16.msra.mxu0 0
      %1092 = vmatpush.bf16.msra.mxu0 0
      %1093 = vmatpush.bf16.msra.mxu0 0
      %1094 = vmatpush.bf16.msra.mxu0 0
      %1095 = vmatpush.bf16.msra.mxu0 %v1086
      %1096 = vmatmul.bf16.gmra.mxu0 %v1083
      %v1097 = vpop.f32.mrf.mxu0
      %v1098 = vadd.f32 0.0, %v1097
      %v1099 = vpop.f32.mrf.mxu0
      %v1100 = vadd.f32 0.0, %v1099
      %1101 = vdwg.mxu0
      %v1102 = vadd.f32 %v1074, %v1098
      %v1103 = vadd.f32 %v1075, %v1100
      %s1104 = scalar_lea.vmem %s8, 2
      %v1105 = vld [vmem:[%s1104] sm:$0x1]
      %v1107 = vperm.slane %v1105, 0
      %v1109 = vmul.f32 %v1102, %v1107
      %v1110 = vmul.f32 %v1103, %v1107
      %s1111 = scalar_lea.vmem %s9, 2
      %v1112 = vld [vmem:[%s1111] sm:$0x1]
      %v1114 = vperm.slane %v1112, 0
      %v1116 = vadd.f32 %v1109, %v1114
      %v1117 = vadd.f32 %v1110, %v1114
      %v1118 = vld [vmem:[%s10] sm:$0xf]
      %v1120 = vsel %vm621, %v1118, 0
      %1122 = vmatpush.bf16.msra.mxu0 0
      %1123 = vmatpush.bf16.msra.mxu0 0
      %1124 = vmatpush.bf16.msra.mxu0 0
      %1125 = vmatpush.bf16.msra.mxu0 0
      %1126 = vmatpush.bf16.msra.mxu0 0
      %1127 = vmatpush.bf16.msra.mxu0 0
      %1128 = vmatpush.bf16.msra.mxu0 0
      %1129 = vmatpush.bf16.msra.mxu0 %v1120
      %1130 = vmatmul.bf16.gmra.mxu0 %v619
      %v1131 = vpop.f32.mrf.mxu0
      %v1132 = vadd.f32 0.0, %v1131
      %v1133 = vpop.f32.mrf.mxu0
      %v1134 = vadd.f32 0.0, %v1133
      %1135 = vdwg.mxu0
      %v1136 = vld [vmem:[%s11] sm:$0x1]
      %v1138 = vperm.slane %v1136, 0
      %v1140 = vmul.f32 %v1132, %v1138
      %v1141 = vmul.f32 %v1134, %v1138
      %v1142 = vld [vmem:[%s12] sm:$0x1]
      %v1144 = vperm.slane %v1142, 0
      %v1146 = vadd.f32 %v1140, %v1144
      %v1147 = vadd.f32 %v1141, %v1144
      %1150 = vrot.lane.b32.xlu0 %v945, 2
      %v1151 = vpop.permute.xlu0 %1150
      %1152 = vrot.lane.b32.xlu0 %v946, 2
      %v1153 = vpop.permute.xlu0 %1152
      %1158 = vrot.lane.b32.xlu0 %v1116, 4
      %v1159 = vpop.permute.xlu0 %1158
      %1160 = vrot.lane.b32.xlu0 %v1117, 4
      %v1161 = vpop.permute.xlu0 %1160
      %1166 = vrot.lane.b32.xlu0 %v1146, 6
      %v1167 = vpop.permute.xlu0 %1166
      %1168 = vrot.lane.b32.xlu0 %v1147, 6
      %v1169 = vpop.permute.xlu0 %1168
      %v1172 = vsel %vm672, %v774, %v1151
      %v1173 = vsel %vm672, %v775, %v1153
      %v1174 = vsel %vm455, %v1172, %v1159
      %v1175 = vsel %vm455, %v1173, %v1161
      %vm1176 = vcmask 48128
      %v1177 = vsel %vm1176, %v1174, %v1167
      %v1178 = vsel %vm1176, %v1175, %v1169
      %v1179 = vadd.f32 %v1177, %v613
      %v1180 = vadd.f32 %v1178, %v614
      %vm1181 = vcmp.ge.f32.partialorder %v1179, 0.0
      %vm1182 = vcmp.ge.f32.partialorder %v1180, 0.0
      %v1183 = vmul.f32 %v1179, 0.2
      %v1184 = vmul.f32 %v1180, 0.2
      %v1185 = vsel %vm1181, %v1179, %v1183
      %v1186 = vsel %vm1182, %v1180, %v1184
      %v1187 = vpack.c.bf16 %v1185, %v1185
      %v1188 = vpack.c.bf16 %v1186, %v1186
      %vm1189 = vcmask 60416
      %1190 = vst.msk [vmem:[%s440] sm:$0xf] %vm1189, %v1187
      %1191 = vst.msk [vmem:[%s440 + $0x4] sm:$0xf] %vm1189, %v1188
      %p1192 = scmp.lt.s32.totalorder %s24, 1
      %s1193 = scalar_select %p1192, %s24, 1
      %s1194 = smul.addr %s1193, 2
      %s1195 = smul.addr %s1194, 4
      %s1196 = scalar_lea.vmem %s13, %s1195
      // Predicated region
      $region73: #{_lambda_.5} parent=71 // pred_check
        %p1197 = pneg %p320
      $region74: #{_lambda_.5} parent=71 // pred_check_branch
        %1199 = sbr.rel (%p1197) target = $region76
      $region75: #{_lambda_.5} parent=71 // pred_region
        _
      $region76: #{_lambda_.5} parent=71 // pred_fallthru
        _
    $region72: #{_lambda_.5} parent=5 // pred_fallthru
      _
    %p1200 = scmp.le.s32.totalorder 2, %s19
    // Predicated region
    $region77: #{_lambda_.5} parent=5 // pred_check
      %p1201 = pneg %p1200
    $region78: #{_lambda_.5} parent=5 // pred_check_branch
      %1203 = sbr.rel (%p1201) target = $region80
    $region79: #{_lambda_.5} parent=5 // pred_region
      %s1204 = ssub.s32 %s19, 2
      // Predicated region
      $region81: #{_lambda_.5} parent=79 // pred_check
        %p1205 = pneg %p326
      $region82: #{_lambda_.5} parent=79 // pred_check_branch
        %1207 = sbr.rel (%p1205) target = $region84
      $region83: #{_lambda_.5} parent=79 // pred_region
        %p1208 = scmp.lt.s32.totalorder %s25, 1
        %s1209 = scalar_select %p1208, %s25, 1
        %s1210 = smul.addr %s1209, 2
        %s1211 = smul.addr %s1210, 4
        %s1212 = scalar_lea.vmem %s13, %s1211
      $region84: #{_lambda_.5} parent=79 // pred_fallthru
        _
    $region80: #{_lambda_.5} parent=5 // pred_fallthru
      _
  $region6: #{_lambda_.5} parent=0 // loop_footer
    %s23 = sadd.s32 1, %s19
  $region7: #{_lambda_.5} parent=0 // loop_footer_branch
    %18 = sbr.rel target = $region3
  $region8: #{_lambda_.5} parent=0 // loop_exit
    _

// kernel: _lambda_.6
$region0: #{_lambda_.6}
  #allocation0 [shape = 'u32[]', space=smem, size = 0x4, offset = 0x4, fixed_abs, tag = 'smem constant byte address 0x4 - core index']
  #allocation1 [shape = 'u32[72,128]{1,0:T(1,128)}', space=vmem, size = 0x9000, scoped, tag = 'internal scratch']
  %s0 = inlined_call_operand.vmem [shape: bf16[2,2,9,8], index: 0, kind: input, shape index: {}]
  %s1 = inlined_call_operand.vmem [shape: bf16[4,8,16], index: 1, kind: input, shape index: {}]
  %s2 = inlined_call_operand.vmem [shape: f32[1,16], index: 2, kind: input, shape index: {}]
  %s3 = inlined_call_operand.vmem [shape: f32[1,16], index: 3, kind: input, shape index: {}]
  %s4 = inlined_call_operand.vmem [shape: bf16[3,16,4], index: 4, kind: input, shape index: {}]
  %s5 = inlined_call_operand.vmem [shape: f32[3,1,4], index: 5, kind: input, shape index: {}, may-alias: {5,8}]
  %s6 = inlined_call_operand.vmem [shape: f32[3,1,4], index: 6, kind: input, shape index: {}]
  %s7 = inlined_call_operand.vmem [shape: bf16[3,4,4,4], index: 7, kind: input, shape index: {}]
  %s8 = inlined_call_operand.vmem [shape: f32[3,1,4], index: 8, kind: input, shape index: {}, may-alias: {5,8}]
  %s9 = inlined_call_operand.vmem [shape: f32[3,1,4], index: 9, kind: input, shape index: {}]
  %s10 = inlined_call_operand.vmem [shape: bf16[16,4], index: 10, kind: input, shape index: {}]
  %s11 = inlined_call_operand.vmem [shape: f32[1,4], index: 11, kind: input, shape index: {}]
  %s12 = inlined_call_operand.vmem [shape: f32[1,4], index: 12, kind: input, shape index: {}]
  %s13 = inlined_call_operand.vmem [shape: bf16[2,8,16], index: 13, kind: output, shape index: {}]
  %s14 = sld [smem:[#allocation0]]
  $region85: #{_lambda_.6} parent=0
    _
  %s16 = ssub.s32 1, %s14
  %s17 = scalar_select 0, %s16, %s14
  loop: start=0, step=1, limit=4
  $region2: #{_lambda_.6} parent=0 // loop_pre_header
    _
  $region3: #{_lambda_.6} parent=0 // loop_header
    %s19 = sphi 0, %s23
    %p20 = scmp.ge.s32.totalorder %s19, 4
    %s29 = sphi 0, %s31
    %s32 = sphi 0, %s29
    %s33 = sphi 0, %s32
    %s49 = sphi 0, %s33
    %s53 = sphi 0, %s53
    %s55 = sphi 0, %s53
    %s56 = sphi 0, %s55
    %s70 = sphi 0, %s56
    %s74 = sphi 0, %s74
    %s76 = sphi 0, %s74
    %s77 = sphi 0, %s76
    %s91 = sphi 0, %s77
    %s95 = sphi 0, %s95
    %s97 = sphi 0, %s95
    %s98 = sphi 0, %s97
    %s112 = sphi 0, %s98
    %s116 = sphi 0, %s116
    %s118 = sphi 0, %s116
    %s119 = sphi 0, %s118
    %s133 = sphi 0, %s119
    %s137 = sphi 0, %s137
    %s139 = sphi 0, %s137
    %s140 = sphi 0, %s139
    %s154 = sphi 0, %s140
    %s158 = sphi 0, %s158
    %s160 = sphi 0, %s158
    %s161 = sphi 0, %s160
    %s175 = sphi 0, %s161
    %s179 = sphi 0, %s179
    %s181 = sphi 0, %s179
    %s182 = sphi 0, %s181
    %s196 = sphi 0, %s182
    %s200 = sphi 0, %s200
    %s202 = sphi 0, %s200
    %s203 = sphi 0, %s202
    %s217 = sphi 0, %s203
    %s221 = sphi 0, %s221
    %s223 = sphi 0, %s221
    %s224 = sphi 0, %s223
    %s238 = sphi 0, %s224
    %s242 = sphi 0, %s242
    %s244 = sphi 0, %s242
    %s245 = sphi 0, %s244
    %s259 = sphi 0, %s245
    %s263 = sphi 0, %s263
    %s265 = sphi 0, %s263
    %s266 = sphi 0, %s265
    %s280 = sphi 0, %s266
    %s284 = sphi 0, %s284
    %s286 = sphi 0, %s284
    %s287 = sphi 0, %s286
    %s301 = sphi 0, %s287
    %s307 = sphi 0, %s309
    %s310 = sphi 0, %s307
    %s311 = sphi 0, %s310
    %s327 = sphi 0, %s311
  $region4: #{_lambda_.6} parent=0 // loop_header_branch
    %22 = sbr.rel (%p20) target = $region8
  $region5: #{_lambda_.6} parent=0 // loop_body
    %s24 = ssub.s32 %s19, 1
    %s25 = ssub.s32 %s19, 2
    %s26 = sadd.s32 %s19, 1
    %s27 = ssub.s32 %s19, %s26
    %p28 = scmp.eq.s32.totalorder %s27, 0
    %s30 = sadd.s32 %s29, 1
    %s31 = scalar_select %p28, %s29, %s30
    %p34 = pneg %p28
    %p35 = scmp.eq.s32.totalorder %s19, 1
    %p36 = por %p34, %p35
    %p37 = scmp.ne.s32.totalorder %s29, %s32
    %p38 = scmp.eq.s32.totalorder %s19, 0
    %p39 = por %p37, %p38
    %p40 = scmp.ne.s32.totalorder %s29, %s32
    %p41 = scmp.eq.s32.totalorder %s24, 1
    %p42 = por %p40, %p41
    %p43 = scmp.ne.s32.totalorder %s32, %s33
    %p44 = scmp.eq.s32.totalorder %s24, 0
    %p45 = por %p43, %p44
    %p46 = scmp.ne.s32.totalorder %s32, %s33
    %p47 = scmp.eq.s32.totalorder %s25, 1
    %p48 = por %p46, %p47
    %p50 = scmp.ne.s32.totalorder %s33, %s49
    %p51 = scmp.eq.s32.totalorder %s25, 0
    %p52 = por %p50, %p51
    %s54 = sadd.s32 %s53, 1
    %p57 = scmp.eq.s32.totalorder %s19, 1
    %p58 = scmp.ne.s32.totalorder %s53, %s55
    %p59 = scmp.eq.s32.totalorder %s19, 0
    %p60 = por %p58, %p59
    %p61 = scmp.ne.s32.totalorder %s53, %s55
    %p62 = scmp.eq.s32.totalorder %s24, 1
    %p63 = por %p61, %p62
    %p64 = scmp.ne.s32.totalorder %s55, %s56
    %p65 = scmp.eq.s32.totalorder %s24, 0
    %p66 = por %p64, %p65
    %p67 = scmp.ne.s32.totalorder %s55, %s56
    %p68 = scmp.eq.s32.totalorder %s25, 1
    %p69 = por %p67, %p68
    %p71 = scmp.ne.s32.totalorder %s56, %s70
    %p72 = scmp.eq.s32.totalorder %s25, 0
    %p73 = por %p71, %p72
    %s75 = sadd.s32 %s74, 1
    %p78 = scmp.eq.s32.totalorder %s19, 1
    %p79 = scmp.ne.s32.totalorder %s74, %s76
    %p80 = scmp.eq.s32.totalorder %s19, 0
    %p81 = por %p79, %p80
    %p82 = scmp.ne.s32.totalorder %s74, %s76
    %p83 = scmp.eq.s32.totalorder %s24, 1
    %p84 = por %p82, %p83
    %p85 = scmp.ne.s32.totalorder %s76, %s77
    %p86 = scmp.eq.s32.totalorder %s24, 0
    %p87 = por %p85, %p86
    %p88 = scmp.ne.s32.totalorder %s76, %s77
    %p89 = scmp.eq.s32.totalorder %s25, 1
    %p90 = por %p88, %p89
    %p92 = scmp.ne.s32.totalorder %s77, %s91
    %p93 = scmp.eq.s32.totalorder %s25, 0
    %p94 = por %p92, %p93
    %s96 = sadd.s32 %s95, 1
    %p99 = scmp.eq.s32.totalorder %s19, 1
    %p100 = scmp.ne.s32.totalorder %s95, %s97
    %p101 = scmp.eq.s32.totalorder %s19, 0
    %p102 = por %p100, %p101
    %p103 = scmp.ne.s32.totalorder %s95, %s97
    %p104 = scmp.eq.s32.totalorder %s24, 1
    %p105 = por %p103, %p104
    %p106 = scmp.ne.s32.totalorder %s97, %s98
    %p107 = scmp.eq.s32.totalorder %s24, 0
    %p108 = por %p106, %p107
    %p109 = scmp.ne.s32.totalorder %s97, %s98
    %p110 = scmp.eq.s32.totalorder %s25, 1
    %p111 = por %p109, %p110
    %p113 = scmp.ne.s32.totalorder %s98, %s112
    %p114 = scmp.eq.s32.totalorder %s25, 0
    %p115 = por %p113, %p114
    %s117 = sadd.s32 %s116, 1
    %p120 = scmp.eq.s32.totalorder %s19, 1
    %p121 = scmp.ne.s32.totalorder %s116, %s118
    %p122 = scmp.eq.s32.totalorder %s19, 0
    %p123 = por %p121, %p122
    %p124 = scmp.ne.s32.totalorder %s116, %s118
    %p125 = scmp.eq.s32.totalorder %s24, 1
    %p126 = por %p124, %p125
    %p127 = scmp.ne.s32.totalorder %s118, %s119
    %p128 = scmp.eq.s32.totalorder %s24, 0
    %p129 = por %p127, %p128
    %p130 = scmp.ne.s32.totalorder %s118, %s119
    %p131 = scmp.eq.s32.totalorder %s25, 1
    %p132 = por %p130, %p131
    %p134 = scmp.ne.s32.totalorder %s119, %s133
    %p135 = scmp.eq.s32.totalorder %s25, 0
    %p136 = por %p134, %p135
    %s138 = sadd.s32 %s137, 1
    %p141 = scmp.eq.s32.totalorder %s19, 1
    %p142 = scmp.ne.s32.totalorder %s137, %s139
    %p143 = scmp.eq.s32.totalorder %s19, 0
    %p144 = por %p142, %p143
    %p145 = scmp.ne.s32.totalorder %s137, %s139
    %p146 = scmp.eq.s32.totalorder %s24, 1
    %p147 = por %p145, %p146
    %p148 = scmp.ne.s32.totalorder %s139, %s140
    %p149 = scmp.eq.s32.totalorder %s24, 0
    %p150 = por %p148, %p149
    %p151 = scmp.ne.s32.totalorder %s139, %s140
    %p152 = scmp.eq.s32.totalorder %s25, 1
    %p153 = por %p151, %p152
    %p155 = scmp.ne.s32.totalorder %s140, %s154
    %p156 = scmp.eq.s32.totalorder %s25, 0
    %p157 = por %p155, %p156
    %s159 = sadd.s32 %s158, 1
    %p162 = scmp.eq.s32.totalorder %s19, 1
    %p163 = scmp.ne.s32.totalorder %s158, %s160
    %p164 = scmp.eq.s32.totalorder %s19, 0
    %p165 = por %p163, %p164
    %p166 = scmp.ne.s32.totalorder %s158, %s160
    %p167 = scmp.eq.s32.totalorder %s24, 1
    %p168 = por %p166, %p167
    %p169 = scmp.ne.s32.totalorder %s160, %s161
    %p170 = scmp.eq.s32.totalorder %s24, 0
    %p171 = por %p169, %p170
    %p172 = scmp.ne.s32.totalorder %s160, %s161
    %p173 = scmp.eq.s32.totalorder %s25, 1
    %p174 = por %p172, %p173
    %p176 = scmp.ne.s32.totalorder %s161, %s175
    %p177 = scmp.eq.s32.totalorder %s25, 0
    %p178 = por %p176, %p177
    %s180 = sadd.s32 %s179, 1
    %p183 = scmp.eq.s32.totalorder %s19, 1
    %p184 = scmp.ne.s32.totalorder %s179, %s181
    %p185 = scmp.eq.s32.totalorder %s19, 0
    %p186 = por %p184, %p185
    %p187 = scmp.ne.s32.totalorder %s179, %s181
    %p188 = scmp.eq.s32.totalorder %s24, 1
    %p189 = por %p187, %p188
    %p190 = scmp.ne.s32.totalorder %s181, %s182
    %p191 = scmp.eq.s32.totalorder %s24, 0
    %p192 = por %p190, %p191
    %p193 = scmp.ne.s32.totalorder %s181, %s182
    %p194 = scmp.eq.s32.totalorder %s25, 1
    %p195 = por %p193, %p194
    %p197 = scmp.ne.s32.totalorder %s182, %s196
    %p198 = scmp.eq.s32.totalorder %s25, 0
    %p199 = por %p197, %p198
    %s201 = sadd.s32 %s200, 1
    %p204 = scmp.eq.s32.totalorder %s19, 1
    %p205 = scmp.ne.s32.totalorder %s200, %s202
    %p206 = scmp.eq.s32.totalorder %s19, 0
    %p207 = por %p205, %p206
    %p208 = scmp.ne.s32.totalorder %s200, %s202
    %p209 = scmp.eq.s32.totalorder %s24, 1
    %p210 = por %p208, %p209
    %p211 = scmp.ne.s32.totalorder %s202, %s203
    %p212 = scmp.eq.s32.totalorder %s24, 0
    %p213 = por %p211, %p212
    %p214 = scmp.ne.s32.totalorder %s202, %s203
    %p215 = scmp.eq.s32.totalorder %s25, 1
    %p216 = por %p214, %p215
    %p218 = scmp.ne.s32.totalorder %s203, %s217
    %p219 = scmp.eq.s32.totalorder %s25, 0
    %p220 = por %p218, %p219
    %s222 = sadd.s32 %s221, 1
    %p225 = scmp.eq.s32.totalorder %s19, 1
    %p226 = scmp.ne.s32.totalorder %s221, %s223
    %p227 = scmp.eq.s32.totalorder %s19, 0
    %p228 = por %p226, %p227
    %p229 = scmp.ne.s32.totalorder %s221, %s223
    %p230 = scmp.eq.s32.totalorder %s24, 1
    %p231 = por %p229, %p230
    %p232 = scmp.ne.s32.totalorder %s223, %s224
    %p233 = scmp.eq.s32.totalorder %s24, 0
    %p234 = por %p232, %p233
    %p235 = scmp.ne.s32.totalorder %s223, %s224
    %p236 = scmp.eq.s32.totalorder %s25, 1
    %p237 = por %p235, %p236
    %p239 = scmp.ne.s32.totalorder %s224, %s238
    %p240 = scmp.eq.s32.totalorder %s25, 0
    %p241 = por %p239, %p240
    %s243 = sadd.s32 %s242, 1
    %p246 = scmp.eq.s32.totalorder %s19, 1
    %p247 = scmp.ne.s32.totalorder %s242, %s244
    %p248 = scmp.eq.s32.totalorder %s19, 0
    %p249 = por %p247, %p248
    %p250 = scmp.ne.s32.totalorder %s242, %s244
    %p251 = scmp.eq.s32.totalorder %s24, 1
    %p252 = por %p250, %p251
    %p253 = scmp.ne.s32.totalorder %s244, %s245
    %p254 = scmp.eq.s32.totalorder %s24, 0
    %p255 = por %p253, %p254
    %p256 = scmp.ne.s32.totalorder %s244, %s245
    %p257 = scmp.eq.s32.totalorder %s25, 1
    %p258 = por %p256, %p257
    %p260 = scmp.ne.s32.totalorder %s245, %s259
    %p261 = scmp.eq.s32.totalorder %s25, 0
    %p262 = por %p260, %p261
    %s264 = sadd.s32 %s263, 1
    %p267 = scmp.eq.s32.totalorder %s19, 1
    %p268 = scmp.ne.s32.totalorder %s263, %s265
    %p269 = scmp.eq.s32.totalorder %s19, 0
    %p270 = por %p268, %p269
    %p271 = scmp.ne.s32.totalorder %s263, %s265
    %p272 = scmp.eq.s32.totalorder %s24, 1
    %p273 = por %p271, %p272
    %p274 = scmp.ne.s32.totalorder %s265, %s266
    %p275 = scmp.eq.s32.totalorder %s24, 0
    %p276 = por %p274, %p275
    %p277 = scmp.ne.s32.totalorder %s265, %s266
    %p278 = scmp.eq.s32.totalorder %s25, 1
    %p279 = por %p277, %p278
    %p281 = scmp.ne.s32.totalorder %s266, %s280
    %p282 = scmp.eq.s32.totalorder %s25, 0
    %p283 = por %p281, %p282
    %s285 = sadd.s32 %s284, 1
    %p288 = scmp.eq.s32.totalorder %s19, 1
    %p289 = scmp.ne.s32.totalorder %s284, %s286
    %p290 = scmp.eq.s32.totalorder %s19, 0
    %p291 = por %p289, %p290
    %p292 = scmp.ne.s32.totalorder %s284, %s286
    %p293 = scmp.eq.s32.totalorder %s24, 1
    %p294 = por %p292, %p293
    %p295 = scmp.ne.s32.totalorder %s286, %s287
    %p296 = scmp.eq.s32.totalorder %s24, 0
    %p297 = por %p295, %p296
    %p298 = scmp.ne.s32.totalorder %s286, %s287
    %p299 = scmp.eq.s32.totalorder %s25, 1
    %p300 = por %p298, %p299
    %p302 = scmp.ne.s32.totalorder %s287, %s301
    %p303 = scmp.eq.s32.totalorder %s25, 0
    %p304 = por %p302, %p303
    %s305 = ssub.s32 %s19, %s26
    %p306 = scmp.eq.s32.totalorder %s305, 0
    %s308 = sadd.s32 %s307, 1
    %s309 = scalar_select %p306, %s307, %s308
    %p312 = pneg %p306
    %p313 = scmp.eq.s32.totalorder %s19, 1
    %p314 = por %p312, %p313
    %p315 = scmp.ne.s32.totalorder %s307, %s310
    %p316 = scmp.eq.s32.totalorder %s19, 0
    %p317 = por %p315, %p316
    %p318 = scmp.ne.s32.totalorder %s307, %s310
    %p319 = scmp.eq.s32.totalorder %s24, 1
    %p320 = por %p318, %p319
    %p321 = scmp.ne.s32.totalorder %s310, %s311
    %p322 = scmp.eq.s32.totalorder %s24, 0
    %p323 = por %p321, %p322
    %p324 = scmp.ne.s32.totalorder %s310, %s311
    %p325 = scmp.eq.s32.totalorder %s25, 1
    %p326 = por %p324, %p325
    %p328 = scmp.ne.s32.totalorder %s311, %s327
    %p329 = scmp.eq.s32.totalorder %s25, 0
    %p330 = por %p328, %p329
    %p331 = scmp.le.s32.totalorder 1, %s19
    %p332 = scmp.lt.s32.totalorder %s19, 3
    %p333 = pnand %p331, %p332
    %p334 = pneg %p333
    // Predicated region
    $region9: #{_lambda_.6} parent=5 // pred_check
      _
    $region10: #{_lambda_.6} parent=5 // pred_check_branch
      %336 = sbr.rel (%p333) target = $region12
    $region11: #{_lambda_.6} parent=5 // pred_region
      %s337 = ssub.s32 %s19, 1
      // Predicated region
      $region13: #{_lambda_.6} parent=11 // pred_check
        %p338 = pneg %p66
      $region14: #{_lambda_.6} parent=11 // pred_check_branch
        %340 = sbr.rel (%p338) target = $region16
      $region15: #{_lambda_.6} parent=11 // pred_region
        _
      $region16: #{_lambda_.6} parent=11 // pred_fallthru
        _
      // Predicated region
      $region17: #{_lambda_.6} parent=11 // pred_check
        %p341 = pneg %p87
      $region18: #{_lambda_.6} parent=11 // pred_check_branch
        %343 = sbr.rel (%p341) target = $region20
      $region19: #{_lambda_.6} parent=11 // pred_region
        _
      $region20: #{_lambda_.6} parent=11 // pred_fallthru
        _
      // Predicated region
      $region21: #{_lambda_.6} parent=11 // pred_check
        %p344 = pneg %p108
      $region22: #{_lambda_.6} parent=11 // pred_check_branch
        %346 = sbr.rel (%p344) target = $region24
      $region23: #{_lambda_.6} parent=11 // pred_region
        _
      $region24: #{_lambda_.6} parent=11 // pred_fallthru
        _
      // Predicated region
      $region25: #{_lambda_.6} parent=11 // pred_check
        %p347 = pneg %p129
      $region26: #{_lambda_.6} parent=11 // pred_check_branch
        %349 = sbr.rel (%p347) target = $region28
      $region27: #{_lambda_.6} parent=11 // pred_region
        _
      $region28: #{_lambda_.6} parent=11 // pred_fallthru
        _
      // Predicated region
      $region29: #{_lambda_.6} parent=11 // pred_check
        %p350 = pneg %p150
      $region30: #{_lambda_.6} parent=11 // pred_check_branch
        %352 = sbr.rel (%p350) target = $region32
      $region31: #{_lambda_.6} parent=11 // pred_region
        _
      $region32: #{_lambda_.6} parent=11 // pred_fallthru
        _
      // Predicated region
      $region33: #{_lambda_.6} parent=11 // pred_check
        %p353 = pneg %p171
      $region34: #{_lambda_.6} parent=11 // pred_check_branch
        %355 = sbr.rel (%p353) target = $region36
      $region35: #{_lambda_.6} parent=11 // pred_region
        _
      $region36: #{_lambda_.6} parent=11 // pred_fallthru
        _
      // Predicated region
      $region37: #{_lambda_.6} parent=11 // pred_check
        %p356 = pneg %p192
      $region38: #{_lambda_.6} parent=11 // pred_check_branch
        %358 = sbr.rel (%p356) target = $region40
      $region39: #{_lambda_.6} parent=11 // pred_region
        _
      $region40: #{_lambda_.6} parent=11 // pred_fallthru
        _
      // Predicated region
      $region41: #{_lambda_.6} parent=11 // pred_check
        %p359 = pneg %p213
      $region42: #{_lambda_.6} parent=11 // pred_check_branch
        %361 = sbr.rel (%p359) target = $region44
      $region43: #{_lambda_.6} parent=11 // pred_region
        _
      $region44: #{_lambda_.6} parent=11 // pred_fallthru
        _
      // Predicated region
      $region45: #{_lambda_.6} parent=11 // pred_check
        %p362 = pneg %p234
      $region46: #{_lambda_.6} parent=11 // pred_check_branch
        %364 = sbr.rel (%p362) target = $region48
      $region47: #{_lambda_.6} parent=11 // pred_region
        _
      $region48: #{_lambda_.6} parent=11 // pred_fallthru
        _
      // Predicated region
      $region49: #{_lambda_.6} parent=11 // pred_check
        %p365 = pneg %p255
      $region50: #{_lambda_.6} parent=11 // pred_check_branch
        %367 = sbr.rel (%p365) target = $region52
      $region51: #{_lambda_.6} parent=11 // pred_region
        _
      $region52: #{_lambda_.6} parent=11 // pred_fallthru
        _
      // Predicated region
      $region53: #{_lambda_.6} parent=11 // pred_check
        %p368 = pneg %p276
      $region54: #{_lambda_.6} parent=11 // pred_check_branch
        %370 = sbr.rel (%p368) target = $region56
      $region55: #{_lambda_.6} parent=11 // pred_region
        _
      $region56: #{_lambda_.6} parent=11 // pred_fallthru
        _
      // Predicated region
      $region57: #{_lambda_.6} parent=11 // pred_check
        %p371 = pneg %p297
      $region58: #{_lambda_.6} parent=11 // pred_check_branch
        %373 = sbr.rel (%p371) target = $region60
      $region59: #{_lambda_.6} parent=11 // pred_region
        _
      $region60: #{_lambda_.6} parent=11 // pred_fallthru
        _
    $region12: #{_lambda_.6} parent=5 // pred_fallthru
      _
    %p374 = scmp.lt.s32.totalorder %s19, 2
    // Predicated region
    $region61: #{_lambda_.6} parent=5 // pred_check
      %p375 = pneg %p374
    $region62: #{_lambda_.6} parent=5 // pred_check_branch
      %377 = sbr.rel (%p375) target = $region64
    $region63: #{_lambda_.6} parent=5 // pred_region
      // Predicated region
      $region65: #{_lambda_.6} parent=63 // pred_check
        %p378 = pneg %p39
      $region66: #{_lambda_.6} parent=63 // pred_check_branch
        %380 = sbr.rel (%p378) target = $region68
      $region67: #{_lambda_.6} parent=63 // pred_region
        %p381 = scmp.lt.s32.totalorder %s19, 1
        %s382 = scalar_select %p381, %s19, 1
        %s383 = smul.addr %s382, 4
        %s384 = smul.addr %s383, 4
        %s385 = scalar_lea.vmem %s0, %s384
      $region68: #{_lambda_.6} parent=63 // pred_fallthru
        _
    $region64: #{_lambda_.6} parent=5 // pred_fallthru
      _
    %p386 = scmp.le.s32.totalorder 1, %s19
    %p387 = scmp.lt.s32.totalorder %s19, 3
    %p388 = pnand %p386, %p387
    %p389 = pneg %p388
    // Predicated region
    $region69: #{_lambda_.6} parent=5 // pred_check
      _
    $region70: #{_lambda_.6} parent=5 // pred_check_branch
      %391 = sbr.rel (%p388) target = $region72
    $region71: #{_lambda_.6} parent=5 // pred_region
      %s392 = ssub.s32 %s19, 1
      %p393 = scmp.lt.s32.totalorder %s24, 1
      %s394 = scalar_select %p393, %s24, 1
      %s395 = smul.addr %s394, 4
      %s396 = smul.addr %s395, 4
      %s397 = scalar_lea.vmem %s0, %s396
      %p398 = pneg %p45
      %p399 = pneg %p42
      %p400 = pneg %p66
      %p401 = pneg %p63
      %p402 = pneg %p87
      %p403 = pneg %p84
      %p404 = pneg %p108
      %p405 = pneg %p105
      %p406 = pneg %p129
      %p407 = pneg %p126
      %p408 = pneg %p150
      %p409 = pneg %p147
      %p410 = pneg %p171
      %p411 = pneg %p168
      %p412 = pneg %p192
      %p413 = pneg %p189
      %p414 = pneg %p213
      %p415 = pneg %p210
      %p416 = pneg %p234
      %p417 = pneg %p231
      %p418 = pneg %p255
      %p419 = pneg %p252
      %p420 = pneg %p276
      %p421 = pneg %p273
      %p422 = pneg %p297
      %p423 = pneg %p294
      %p424 = pneg %p323
      %p425 = pneg %p320
      %p426 = scmp.lt.s32.totalorder %s24, 1
      %s427 = scalar_select %p426, %s24, 1
      %s428 = smul.addr %s427, 4
      %s429 = scalar_lea.vmem %s13, %s428
      %p430 = scmp.lt.s32.totalorder %s24, 1
      %s431 = scalar_select %p430, %s24, 1
      %s432 = smul.addr %s431, 4
      %s433 = smul.addr %s432, 4
      %s434 = scalar_lea.vmem %s0, %s433
      %p435 = scmp.lt.s32.totalorder %s24, 1
      %s436 = scalar_select %p435, %s24, 1
      %s437 = smul.addr %s436, 4
      %s438 = scalar_lea.vmem %s13, %s437
      %v440 = vld [vmem:[%s434] sm:$0xf]
      %v441 = vld [vmem:[%s1] sm:$0xf]
      %s442 = scalar_lea.vmem %s434, 8
      %v443 = vld [vmem:[%s442] sm:$0xf]
      %s444 = scalar_lea.vmem %s1, 4
      %v445 = vld [vmem:[%s444] sm:$0xf]
      %vm446 = vcmask 64512
      %v448 = vsel %vm446, %v443, 0
      %vm450 = vcmask 1043456
      %v452 = vsel %vm450, %v445, 0
      %454 = vmatpush.bf16.msra.mxu0 0
      %455 = vmatpush.bf16.msra.mxu0 0
      %456 = vmatpush.bf16.msra.mxu0 0
      %457 = vmatpush.bf16.msra.mxu0 0
      %458 = vmatpush.bf16.msra.mxu0 0
      %459 = vmatpush.bf16.msra.mxu0 0
      %460 = vmatpush.bf16.msra.mxu0 0
      %461 = vmatpush.bf16.msra.mxu0 %v452
      %462 = vmatmul.bf16.gmra.mxu0 %v448
      %v463 = vpop.f32.mrf.mxu0
      %v464 = vadd.f32 0.0, %v463
      %v465 = vpop.f32.mrf.mxu0
      %466 = vdwg.mxu0
      %v468 = vsel %vm446, %v440, 0
      %v471 = vsel %vm450, %v441, 0
      %473 = vmatpush.bf16.msra.mxu0 0
      %474 = vmatpush.bf16.msra.mxu0 0
      %475 = vmatpush.bf16.msra.mxu0 0
      %476 = vmatpush.bf16.msra.mxu0 0
      %477 = vmatpush.bf16.msra.mxu0 0
      %478 = vmatpush.bf16.msra.mxu0 0
      %479 = vmatpush.bf16.msra.mxu0 0
      %480 = vmatpush.bf16.msra.mxu0 %v471
      %481 = vmatmul.bf16.gmra.mxu0 %v468
      %v482 = vpop.f32.mrf.mxu0
      %v483 = vadd.f32 %v464, %v482
      %v484 = vpop.f32.mrf.mxu0
      %485 = vdwg.mxu0
      %v486 = vld [vmem:[%s434] sm:$0xf]
      %v487 = vld [vmem:[%s434 + $0x4] sm:$0x1]
      %s488 = scalar_lea.vmem %s1, 8
      %v489 = vld [vmem:[%s488] sm:$0xf]
      %v492 = vunpack.c.l.b16 %v486
      %v493 = vunpack.c.l.b16 %v487
      %v494 = vpack.c.b16 %v493, %v492
      %v496 = vshrl.u32 %v494, 16
      %v498 = vshll.u32 %v494, 16
      %v500 = vrot.slane %v498, 1
      %v501 = vor.u32 %v496, %v500
      %v503 = vsel %vm446, %v501, 0
      %v506 = vsel %vm450, %v489, 0
      %508 = vmatpush.bf16.msra.mxu0 0
      %509 = vmatpush.bf16.msra.mxu0 0
      %510 = vmatpush.bf16.msra.mxu0 0
      %511 = vmatpush.bf16.msra.mxu0 0
      %512 = vmatpush.bf16.msra.mxu0 0
      %513 = vmatpush.bf16.msra.mxu0 0
      %514 = vmatpush.bf16.msra.mxu0 0
      %515 = vmatpush.bf16.msra.mxu0 %v506
      %516 = vmatmul.bf16.gmra.mxu0 %v503
      %v517 = vpop.f32.mrf.mxu0
      %v518 = vadd.f32 0.0, %v517
      %v519 = vpop.f32.mrf.mxu0
      %520 = vdwg.mxu0
      %v521 = vadd.f32 %v483, %v518
      %v522 = vld [vmem:[%s442] sm:$0xf]
      %v523 = vld [vmem:[%s442 + $0x4] sm:$0x1]
      %s524 = scalar_lea.vmem %s1, 12
      %v525 = vld [vmem:[%s524] sm:$0xf]
      %v528 = vunpack.c.l.b16 %v522
      %v529 = vunpack.c.l.b16 %v523
      %v530 = vpack.c.b16 %v529, %v528
      %v532 = vshrl.u32 %v530, 16
      %v534 = vshll.u32 %v530, 16
      %v536 = vrot.slane %v534, 1
      %v537 = vor.u32 %v532, %v536
      %v539 = vsel %vm446, %v537, 0
      %v542 = vsel %vm450, %v525, 0
      %544 = vmatpush.bf16.msra.mxu0 0
      %545 = vmatpush.bf16.msra.mxu0 0
      %546 = vmatpush.bf16.msra.mxu0 0
      %547 = vmatpush.bf16.msra.mxu0 0
      %548 = vmatpush.bf16.msra.mxu0 0
      %549 = vmatpush.bf16.msra.mxu0 0
      %550 = vmatpush.bf16.msra.mxu0 0
      %551 = vmatpush.bf16.msra.mxu0 %v542
      %552 = vmatmul.bf16.gmra.mxu0 %v539
      %v553 = vpop.f32.mrf.mxu0
      %v554 = vadd.f32 0.0, %v553
      %v555 = vpop.f32.mrf.mxu0
      %556 = vdwg.mxu0
      %v557 = vadd.f32 %v521, %v554
      %v558 = vld [vmem:[%s2] sm:$0x1]
      %v560 = vperm.slane %v558, 0
      %v562 = vmul.f32 %v557, %v560
      %v563 = vld [vmem:[%s3] sm:$0x1]
      %v565 = vperm.slane %v563, 0
      %v567 = vadd.f32 %v562, %v565
      %vm568 = vcmp.ge.f32.partialorder %v567, 0.0
      %v569 = vmul.f32 %v567, 0.2
      %v570 = vsel %vm568, %v567, %v569
      %v571 = vpack.c.bf16 %v570, %v570
      %v572 = vld [vmem:[%s4] sm:$0xf]
      %v573 = vld [vmem:[%s4 + $0x4] sm:$0xf]
      %v576 = vunpack.c.l.b16 %v572
      %v577 = vunpack.c.l.b16 %v573
      %v578 = vpack.c.b16 %v577, %v576
      %vm580 = vcmask 130048
      %v582 = vsel %vm580, %v571, 0
      %584 = vmatpush.bf16.msra.mxu0 0
      %585 = vmatpush.bf16.msra.mxu0 0
      %586 = vmatpush.bf16.msra.mxu0 0
      %587 = vmatpush.bf16.msra.mxu0 0
      %588 = vmatpush.bf16.msra.mxu0 0
      %589 = vmatpush.bf16.msra.mxu0 0
      %590 = vmatpush.bf16.msra.mxu0 0
      %591 = vmatpush.bf16.msra.mxu0 %v578
      %592 = vmatmul.bf16.gmra.mxu0 %v582
      %v593 = vpop.f32.mrf.mxu0
      %v594 = vadd.f32 0.0, %v593
      %v595 = vpop.f32.mrf.mxu0
      %596 = vdwg.mxu0
      %v597 = vld [vmem:[%s5] sm:$0x1]
      %v599 = vperm.slane %v597, 0
      %v601 = vmul.f32 %v594, %v599
      %v602 = vld [vmem:[%s6] sm:$0x1]
      %v604 = vperm.slane %v602, 0
      %v606 = vadd.f32 %v601, %v604
      %vm607 = vcmp.ge.f32.partialorder %v606, 0.0
      %v608 = vmul.f32 %v606, 0.2
      %v609 = vsel %vm607, %v606, %v608
      %v611 = vrot.slane %v609, 4
      %v613 = vsel %vm450, 0.0, %v611
      %v614 = vsel %vm450, %v611, 0.0
      %v615 = vpack.c.bf16 0.0, 0.0
      %v616 = vld [vmem:[%s7] sm:$0x3]
      %v617 = vpack.c.bf16 %v613, %v613
      %s618 = scalar_lea.vmem %s7, 2
      %v619 = vld [vmem:[%s618] sm:$0x3]
      %vm620 = vcmask 31744
      %v622 = vsel %vm620, %v617, 0
      %vm624 = vcmask 1041408
      %v626 = vsel %vm624, %v619, 0
      %628 = vmatpush.bf16.msra.mxu0 0
      %629 = vmatpush.bf16.msra.mxu0 0
      %630 = vmatpush.bf16.msra.mxu0 0
      %631 = vmatpush.bf16.msra.mxu0 0
      %632 = vmatpush.bf16.msra.mxu0 0
      %633 = vmatpush.bf16.msra.mxu0 0
      %634 = vmatpush.bf16.msra.mxu0 0
      %635 = vmatpush.bf16.msra.mxu0 %v626
      %636 = vmatmul.bf16.gmra.mxu0 %v622
      %v637 = vpop.f32.mrf.mxu0
      %v638 = vadd.f32 0.0, %v637
      %v639 = vpop.f32.mrf.mxu0
      %640 = vdwg.mxu0
      %v642 = vsel %vm620, %v615, 0
      %v645 = vsel %vm624, %v616, 0
      %647 = vmatpush.bf16.msra.mxu0 0
      %648 = vmatpush.bf16.msra.mxu0 0
      %649 = vmatpush.bf16.msra.mxu0 0
      %650 = vmatpush.bf16.msra.mxu0 0
      %651 = vmatpush.bf16.msra.mxu0 0
      %652 = vmatpush.bf16.msra.mxu0 0
      %653 = vmatpush.bf16.msra.mxu0 0
      %654 = vmatpush.bf16.msra.mxu0 %v645
      %655 = vmatmul.bf16.gmra.mxu0 %v642
      %v656 = vpop.f32.mrf.mxu0
      %v657 = vadd.f32 %v638, %v656
      %v658 = vpop.f32.mrf.mxu0
      %659 = vdwg.mxu0
      %v660 = vpack.c.bf16 %v614, %v614
      %s661 = scalar_lea.vmem %s7, 4
      %v662 = vld [vmem:[%s661] sm:$0x3]
      %v664 = vsel %vm620, %v660, 0
      %v667 = vsel %vm624, %v662, 0
      %669 = vmatpush.bf16.msra.mxu0 0
      %670 = vmatpush.bf16.msra.mxu0 0
      %671 = vmatpush.bf16.msra.mxu0 0
      %672 = vmatpush.bf16.msra.mxu0 0
      %673 = vmatpush.bf16.msra.mxu0 0
      %674 = vmatpush.bf16.msra.mxu0 0
      %675 = vmatpush.bf16.msra.mxu0 0
      %676 = vmatpush.bf16.msra.mxu0 %v667
      %677 = vmatmul.bf16.gmra.mxu0 %v664
      %v678 = vpop.f32.mrf.mxu0
      %v679 = vadd.f32 0.0, %v678
      %v680 = vpop.f32.mrf.mxu0
      %681 = vdwg.mxu0
      %v682 = vadd.f32 %v657, %v679
      %s683 = scalar_lea.vmem %s7, 6
      %v684 = vld [vmem:[%s683] sm:$0x3]
      %v686 = vsel %vm624, %v684, 0
      %688 = vmatpush.bf16.msra.mxu0 0
      %689 = vmatpush.bf16.msra.mxu0 0
      %690 = vmatpush.bf16.msra.mxu0 0
      %691 = vmatpush.bf16.msra.mxu0 0
      %692 = vmatpush.bf16.msra.mxu0 0
      %693 = vmatpush.bf16.msra.mxu0 0
      %694 = vmatpush.bf16.msra.mxu0 0
      %695 = vmatpush.bf16.msra.mxu0 %v686
      %696 = vmatmul.bf16.gmra.mxu0 %v642
      %v697 = vpop.f32.mrf.mxu0
      %v698 = vadd.f32 0.0, %v697
      %v699 = vpop.f32.mrf.mxu0
      %700 = vdwg.mxu0
      %v701 = vadd.f32 %v682, %v698
      %v702 = vld [vmem:[%s8] sm:$0x1]
      %v704 = vperm.slane %v702, 0
      %v706 = vmul.f32 %v701, %v704
      %v707 = vld [vmem:[%s9] sm:$0x1]
      %v709 = vperm.slane %v707, 0
      %v711 = vadd.f32 %v706, %v709
      %s712 = scalar_lea.vmem %s4, 8
      %v713 = vld [vmem:[%s712] sm:$0xf]
      %v714 = vld [vmem:[%s712 + $0x4] sm:$0xf]
      %v717 = vunpack.c.l.b16 %v713
      %v718 = vunpack.c.l.b16 %v714
      %v719 = vpack.c.b16 %v718, %v717
      %721 = vmatpush.bf16.msra.mxu0 0
      %722 = vmatpush.bf16.msra.mxu0 0
      %723 = vmatpush.bf16.msra.mxu0 0
      %724 = vmatpush.bf16.msra.mxu0 0
      %725 = vmatpush.bf16.msra.mxu0 0
      %726 = vmatpush.bf16.msra.mxu0 0
      %727 = vmatpush.bf16.msra.mxu0 0
      %728 = vmatpush.bf16.msra.mxu0 %v719
      %729 = vmatmul.bf16.gmra.mxu0 %v582
      %v730 = vpop.f32.mrf.mxu0
      %v731 = vadd.f32 0.0, %v730
      %v732 = vpop.f32.mrf.mxu0
      %733 = vdwg.mxu0
      %s734 = scalar_lea.vmem %s5, 1
      %v735 = vld [vmem:[%s734] sm:$0x1]
      %v737 = vperm.slane %v735, 0
      %v739 = vmul.f32 %v731, %v737
      %s740 = scalar_lea.vmem %s6, 1
      %v741 = vld [vmem:[%s740] sm:$0x1]
      %v743 = vperm.slane %v741, 0
      %v745 = vadd.f32 %v739, %v743
      %vm746 = vcmp.ge.f32.partialorder %v745, 0.0
      %v747 = vmul.f32 %v745, 0.2
      %v748 = vsel %vm746, %v745, %v747
      %v750 = vrot.slane %v748, 2
      %vm752 = vcmask 1045504
      %v753 = vsel %vm752, 0.0, %v750
      %v754 = vsel %vm752, %v750, 0.0
      %v755 = vpack.c.bf16 %v753, %v753
      %s756 = scalar_lea.vmem %s7, 8
      %v757 = vld [vmem:[%s756] sm:$0x3]
      %v758 = vpack.c.bf16 %v754, %v753
      %s759 = scalar_lea.vmem %s7, 10
      %v760 = vld [vmem:[%s759] sm:$0x3]
      %v762 = vrot.slane %v758, 2
      %v764 = vsel %vm620, %v762, 0
      %v767 = vsel %vm624, %v760, 0
      %769 = vmatpush.bf16.msra.mxu0 0
      %770 = vmatpush.bf16.msra.mxu0 0
      %771 = vmatpush.bf16.msra.mxu0 0
      %772 = vmatpush.bf16.msra.mxu0 0
      %773 = vmatpush.bf16.msra.mxu0 0
      %774 = vmatpush.bf16.msra.mxu0 0
      %775 = vmatpush.bf16.msra.mxu0 0
      %776 = vmatpush.bf16.msra.mxu0 %v767
      %777 = vmatmul.bf16.gmra.mxu0 %v764
      %v778 = vpop.f32.mrf.mxu0
      %v779 = vadd.f32 0.0, %v778
      %v780 = vpop.f32.mrf.mxu0
      %781 = vdwg.mxu0
      %v783 = vsel %vm620, %v755, 0
      %v786 = vsel %vm624, %v757, 0
      %788 = vmatpush.bf16.msra.mxu0 0
      %789 = vmatpush.bf16.msra.mxu0 0
      %790 = vmatpush.bf16.msra.mxu0 0
      %791 = vmatpush.bf16.msra.mxu0 0
      %792 = vmatpush.bf16.msra.mxu0 0
      %793 = vmatpush.bf16.msra.mxu0 0
      %794 = vmatpush.bf16.msra.mxu0 0
      %795 = vmatpush.bf16.msra.mxu0 %v786
      %796 = vmatmul.bf16.gmra.mxu0 %v783
      %v797 = vpop.f32.mrf.mxu0
      %v798 = vadd.f32 %v779, %v797
      %v799 = vpop.f32.mrf.mxu0
      %800 = vdwg.mxu0
      %v801 = vpack.c.bf16 %v754, %v754
      %s802 = scalar_lea.vmem %s7, 12
      %v803 = vld [vmem:[%s802] sm:$0x3]
      %v805 = vsel %vm620, %v801, 0
      %v808 = vsel %vm624, %v803, 0
      %810 = vmatpush.bf16.msra.mxu0 0
      %811 = vmatpush.bf16.msra.mxu0 0
      %812 = vmatpush.bf16.msra.mxu0 0
      %813 = vmatpush.bf16.msra.mxu0 0
      %814 = vmatpush.bf16.msra.mxu0 0
      %815 = vmatpush.bf16.msra.mxu0 0
      %816 = vmatpush.bf16.msra.mxu0 0
      %817 = vmatpush.bf16.msra.mxu0 %v808
      %818 = vmatmul.bf16.gmra.mxu0 %v805
      %v819 = vpop.f32.mrf.mxu0
      %v820 = vadd.f32 0.0, %v819
      %v821 = vpop.f32.mrf.mxu0
      %822 = vdwg.mxu0
      %v823 = vadd.f32 %v798, %v820
      %v824 = vpack.c.bf16 0.0, %v754
      %s825 = scalar_lea.vmem %s7, 14
      %v826 = vld [vmem:[%s825] sm:$0x3]
      %v828 = vrot.slane %v824, 2
      %v830 = vsel %vm620, %v828, 0
      %v833 = vsel %vm624, %v826, 0
      %835 = vmatpush.bf16.msra.mxu0 0
      %836 = vmatpush.bf16.msra.mxu0 0
      %837 = vmatpush.bf16.msra.mxu0 0
      %838 = vmatpush.bf16.msra.mxu0 0
      %839 = vmatpush.bf16.msra.mxu0 0
      %840 = vmatpush.bf16.msra.mxu0 0
      %841 = vmatpush.bf16.msra.mxu0 0
      %842 = vmatpush.bf16.msra.mxu0 %v833
      %843 = vmatmul.bf16.gmra.mxu0 %v830
      %v844 = vpop.f32.mrf.mxu0
      %v845 = vadd.f32 0.0, %v844
      %v846 = vpop.f32.mrf.mxu0
      %847 = vdwg.mxu0
      %v848 = vadd.f32 %v823, %v845
      %s849 = scalar_lea.vmem %s8, 1
      %v850 = vld [vmem:[%s849] sm:$0x1]
      %v852 = vperm.slane %v850, 0
      %v854 = vmul.f32 %v848, %v852
      %s855 = scalar_lea.vmem %s9, 1
      %v856 = vld [vmem:[%s855] sm:$0x1]
      %v858 = vperm.slane %v856, 0
      %v860 = vadd.f32 %v854, %v858
      %s861 = scalar_lea.vmem %s4, 16
      %v862 = vld [vmem:[%s861] sm:$0xf]
      %v863 = vld [vmem:[%s861 + $0x4] sm:$0xf]
      %v866 = vunpack.c.l.b16 %v862
      %v867 = vunpack.c.l.b16 %v863
      %v868 = vpack.c.b16 %v867, %v866
      %870 = vmatpush.bf16.msra.mxu0 0
      %871 = vmatpush.bf16.msra.mxu0 0
      %872 = vmatpush.bf16.msra.mxu0 0
      %873 = vmatpush.bf16.msra.mxu0 0
      %874 = vmatpush.bf16.msra.mxu0 0
      %875 = vmatpush.bf16.msra.mxu0 0
      %876 = vmatpush.bf16.msra.mxu0 0
      %877 = vmatpush.bf16.msra.mxu0 %v868
      %878 = vmatmul.bf16.gmra.mxu0 %v582
      %v879 = vpop.f32.mrf.mxu0
      %v880 = vadd.f32 0.0, %v879
      %v881 = vpop.f32.mrf.mxu0
      %882 = vdwg.mxu0
      %s883 = scalar_lea.vmem %s5, 2
      %v884 = vld [vmem:[%s883] sm:$0x1]
      %v886 = vperm.slane %v884, 0
      %v888 = vmul.f32 %v880, %v886
      %s889 = scalar_lea.vmem %s6, 2
      %v890 = vld [vmem:[%s889] sm:$0x1]
      %v892 = vperm.slane %v890, 0
      %v894 = vadd.f32 %v888, %v892
      %vm895 = vcmp.ge.f32.partialorder %v894, 0.0
      %v896 = vmul.f32 %v894, 0.2
      %v897 = vsel %vm895, %v894, %v896
      %v899 = vrot.slane %v897, 5
      %vm901 = vcmask 1042432
      %v902 = vsel %vm901, 0.0, %v899
      %v903 = vsel %vm901, %v899, 0.0
      %v904 = vpack.c.bf16 %v902, %v902
      %s905 = scalar_lea.vmem %s7, 16
      %v906 = vld [vmem:[%s905] sm:$0x3]
      %v907 = vpack.c.bf16 %v903, %v902
      %s908 = scalar_lea.vmem %s7, 18
      %v909 = vld [vmem:[%s908] sm:$0x3]
      %v911 = vrot.slane %v907, 1
      %v913 = vsel %vm620, %v911, 0
      %v916 = vsel %vm624, %v909, 0
      %918 = vmatpush.bf16.msra.mxu0 0
      %919 = vmatpush.bf16.msra.mxu0 0
      %920 = vmatpush.bf16.msra.mxu0 0
      %921 = vmatpush.bf16.msra.mxu0 0
      %922 = vmatpush.bf16.msra.mxu0 0
      %923 = vmatpush.bf16.msra.mxu0 0
      %924 = vmatpush.bf16.msra.mxu0 0
      %925 = vmatpush.bf16.msra.mxu0 %v916
      %926 = vmatmul.bf16.gmra.mxu0 %v913
      %v927 = vpop.f32.mrf.mxu0
      %v928 = vadd.f32 0.0, %v927
      %v929 = vpop.f32.mrf.mxu0
      %930 = vdwg.mxu0
      %v932 = vsel %vm620, %v904, 0
      %v935 = vsel %vm624, %v906, 0
      %937 = vmatpush.bf16.msra.mxu0 0
      %938 = vmatpush.bf16.msra.mxu0 0
      %939 = vmatpush.bf16.msra.mxu0 0
      %940 = vmatpush.bf16.msra.mxu0 0
      %941 = vmatpush.bf16.msra.mxu0 0
      %942 = vmatpush.bf16.msra.mxu0 0
      %943 = vmatpush.bf16.msra.mxu0 0
      %944 = vmatpush.bf16.msra.mxu0 %v935
      %945 = vmatmul.bf16.gmra.mxu0 %v932
      %v946 = vpop.f32.mrf.mxu0
      %v947 = vadd.f32 %v928, %v946
      %v948 = vpop.f32.mrf.mxu0
      %949 = vdwg.mxu0
      %s950 = scalar_lea.vmem %s7, 20
      %v951 = vld [vmem:[%s950] sm:$0x3]
      %v952 = vrot.slane %v907, 2
      %v954 = vsel %vm620, %v952, 0
      %v957 = vsel %vm624, %v951, 0
      %959 = vmatpush.bf16.msra.mxu0 0
      %960 = vmatpush.bf16.msra.mxu0 0
      %961 = vmatpush.bf16.msra.mxu0 0
      %962 = vmatpush.bf16.msra.mxu0 0
      %963 = vmatpush.bf16.msra.mxu0 0
      %964 = vmatpush.bf16.msra.mxu0 0
      %965 = vmatpush.bf16.msra.mxu0 0
      %966 = vmatpush.bf16.msra.mxu0 %v957
      %967 = vmatmul.bf16.gmra.mxu0 %v954
      %v968 = vpop.f32.mrf.mxu0
      %v969 = vadd.f32 0.0, %v968
      %v970 = vpop.f32.mrf.mxu0
      %971 = vdwg.mxu0
      %v972 = vadd.f32 %v947, %v969
      %s973 = scalar_lea.vmem %s7, 22
      %v974 = vld [vmem:[%s973] sm:$0x3]
      %v975 = vrot.slane %v907, 3
      %v977 = vsel %vm620, %v975, 0
      %v980 = vsel %vm624, %v974, 0
      %982 = vmatpush.bf16.msra.mxu0 0
      %983 = vmatpush.bf16.msra.mxu0 0
      %984 = vmatpush.bf16.msra.mxu0 0
      %985 = vmatpush.bf16.msra.mxu0 0
      %986 = vmatpush.bf16.msra.mxu0 0
      %987 = vmatpush.bf16.msra.mxu0 0
      %988 = vmatpush.bf16.msra.mxu0 0
      %989 = vmatpush.bf16.msra.mxu0 %v980
      %990 = vmatmul.bf16.gmra.mxu0 %v977
      %v991 = vpop.f32.mrf.mxu0
      %v992 = vadd.f32 0.0, %v991
      %v993 = vpop.f32.mrf.mxu0
      %994 = vdwg.mxu0
      %v995 = vadd.f32 %v972, %v992
      %s996 = scalar_lea.vmem %s8, 2
      %v997 = vld [vmem:[%s996] sm:$0x1]
      %v999 = vperm.slane %v997, 0
      %v1001 = vmul.f32 %v995, %v999
      %s1002 = scalar_lea.vmem %s9, 2
      %v1003 = vld [vmem:[%s1002] sm:$0x1]
      %v1005 = vperm.slane %v1003, 0
      %v1007 = vadd.f32 %v1001, %v1005
      %v1008 = vld [vmem:[%s10] sm:$0xf]
      %v1009 = vld [vmem:[%s10 + $0x4] sm:$0xf]
      %v1012 = vunpack.c.l.b16 %v1008
      %v1013 = vunpack.c.l.b16 %v1009
      %v1014 = vpack.c.b16 %v1013, %v1012
      %1016 = vmatpush.bf16.msra.mxu0 0
      %1017 = vmatpush.bf16.msra.mxu0 0
      %1018 = vmatpush.bf16.msra.mxu0 0
      %1019 = vmatpush.bf16.msra.mxu0 0
      %1020 = vmatpush.bf16.msra.mxu0 0
      %1021 = vmatpush.bf16.msra.mxu0 0
      %1022 = vmatpush.bf16.msra.mxu0 0
      %1023 = vmatpush.bf16.msra.mxu0 %v1014
      %1024 = vmatmul.bf16.gmra.mxu0 %v582
      %v1025 = vpop.f32.mrf.mxu0
      %v1026 = vadd.f32 0.0, %v1025
      %v1027 = vpop.f32.mrf.mxu0
      %1028 = vdwg.mxu0
      %v1029 = vld [vmem:[%s11] sm:$0x1]
      %v1031 = vperm.slane %v1029, 0
      %v1033 = vmul.f32 %v1026, %v1031
      %v1034 = vld [vmem:[%s12] sm:$0x1]
      %v1036 = vperm.slane %v1034, 0
      %v1038 = vadd.f32 %v1033, %v1036
      %1040 = vrot.lane.b32.xlu0 %v860, 4
      %v1041 = vpop.permute.xlu0 %1040
      %1044 = vrot.lane.b32.xlu0 %v1007, 8
      %v1045 = vpop.permute.xlu0 %1044
      %1048 = vrot.lane.b32.xlu0 %v1038, 12
      %v1049 = vpop.permute.xlu0 %1048
      %v1051 = vsel %vm620, %v711, %v1041
      %v1052 = vsel %vm446, %v1051, %v1045
      %vm1053 = vcmask 97280
      %v1054 = vsel %vm1053, %v1052, %v1049
      %v1055 = vadd.f32 %v1054, %v570
      %vm1056 = vcmp.ge.f32.partialorder %v1055, 0.0
      %v1057 = vmul.f32 %v1055, 0.2
      %v1058 = vsel %vm1056, %v1055, %v1057
      %v1059 = vpack.c.bf16 %v1058, %v1058
      %vm1060 = vcmask 125952
      %1061 = vst.msk [vmem:[%s438] sm:$0xf] %vm1060, %v1059
      %p1062 = scmp.lt.s32.totalorder %s24, 1
      %s1063 = scalar_select %p1062, %s24, 1
      %s1064 = smul.addr %s1063, 4
      %s1065 = scalar_lea.vmem %s13, %s1064
      // Predicated region
      $region73: #{_lambda_.6} parent=71 // pred_check
        %p1066 = pneg %p320
      $region74: #{_lambda_.6} parent=71 // pred_check_branch
        %1068 = sbr.rel (%p1066) target = $region76
      $region75: #{_lambda_.6} parent=71 // pred_region
        _
      $region76: #{_lambda_.6} parent=71 // pred_fallthru
        _
    $region72: #{_lambda_.6} parent=5 // pred_fallthru
      _
    %p1069 = scmp.le.s32.totalorder 2, %s19
    // Predicated region
    $region77: #{_lambda_.6} parent=5 // pred_check
      %p1070 = pneg %p1069
    $region78: #{_lambda_.6} parent=5 // pred_check_branch
      %1072 = sbr.rel (%p1070) target = $region80
    $region79: #{_lambda_.6} parent=5 // pred_region
      %s1073 = ssub.s32 %s19, 2
      // Predicated region
      $region81: #{_lambda_.6} parent=79 // pred_check
        %p1074 = pneg %p326
      $region82: #{_lambda_.6} parent=79 // pred_check_branch
        %1076 = sbr.rel (%p1074) target = $region84
      $region83: #{_lambda_.6} parent=79 // pred_region
        %p1077 = scmp.lt.s32.totalorder %s25, 1
        %s1078 = scalar_select %p1077, %s25, 1
        %s1079 = smul.addr %s1078, 4
        %s1080 = scalar_lea.vmem %s13, %s1079
      $region84: #{_lambda_.6} parent=79 // pred_fallthru
        _
    $region80: #{_lambda_.6} parent=5 // pred_fallthru
      _
  $region6: #{_lambda_.6} parent=0 // loop_footer
    %s23 = sadd.s32 1, %s19
  $region7: #{_lambda_.6} parent=0 // loop_footer_branch
    %18 = sbr.rel target = $region3
  $region8: #{_lambda_.6} parent=0 // loop_exit
    _

// kernel: _lambda_.4
$region0: #{_lambda_.4}
  #allocation0 [shape = 'u32[]', space=smem, size = 0x4, offset = 0x4, fixed_abs, tag = 'smem constant byte address 0x4 - core index']
  #allocation1 [shape = 'u32[72,128]{1,0:T(1,128)}', space=vmem, size = 0x9000, scoped, tag = 'internal scratch']
  #allocation2 [shape = 'f32[1,1]{1,0:T(1,128)S(1)}', space=vmem, size = 0x200, scoped, tag = 'scoped memory for _lambda_.4']
  #allocation3 [shape = 'f32[1,1]{1,0:T(1,128)S(1)}', space=vmem, size = 0x200, scoped, tag = 'scoped memory for _lambda_.4']
  %s0 = inlined_call_operand.vmem [shape: bf16[2,1,36,1], index: 0, kind: input, shape index: {}]
  %s1 = inlined_call_operand.vmem [shape: bf16[5,1,4], index: 1, kind: input, shape index: {}]
  %s2 = inlined_call_operand.vmem [shape: f32[1,4], index: 2, kind: input, shape index: {}]
  %s3 = inlined_call_operand.vmem [shape: f32[1,4], index: 3, kind: input, shape index: {}]
  %s4 = inlined_call_operand.vmem [shape: bf16[3,4,1], index: 4, kind: input, shape index: {}]
  %s5 = inlined_call_operand.vmem [shape: f32[3,1,1], index: 5, kind: input, shape index: {}, may-alias: {5,8}]
  %s6 = inlined_call_operand.vmem [shape: f32[3,1,1], index: 6, kind: input, shape index: {}]
  %s7 = inlined_call_operand.vmem [shape: bf16[3,4,1,1], index: 7, kind: input, shape index: {}]
  %s8 = inlined_call_operand.vmem [shape: f32[3,1,1], index: 8, kind: input, shape index: {}, may-alias: {5,8}]
  %s9 = inlined_call_operand.vmem [shape: f32[3,1,1], index: 9, kind: input, shape index: {}]
  %s10 = inlined_call_operand.vmem [shape: bf16[4,1], index: 10, kind: input, shape index: {}]
  %s11 = inlined_call_operand.<no memory space> [shape: f32[1,1], index: 11, kind: input, shape index: {}]
  %s12 = inlined_call_operand.<no memory space> [shape: f32[1,1], index: 12, kind: input, shape index: {}]
  %s13 = inlined_call_operand.vmem [shape: bf16[2,32,4], index: 13, kind: output, shape index: {}]
  %s14 = sld [smem:[#allocation0]]
  $region85: #{_lambda_.4} parent=0
    _
  %s16 = ssub.s32 1, %s14
  %s17 = scalar_select 0, %s16, %s14
  %v18 = vstv %s11
  %19 = vst [vmem:[#allocation2] sm:$0x1] %v18
  %v20 = vstv %s12
  %21 = vst [vmem:[#allocation3] sm:$0x1] %v20
  loop: start=0, step=1, limit=4
  $region2: #{_lambda_.4} parent=0 // loop_pre_header
    _
  $region3: #{_lambda_.4} parent=0 // loop_header
    %s23 = sphi 0, %s27
    %p24 = scmp.ge.s32.totalorder %s23, 4
    %s33 = sphi 0, %s35
    %s36 = sphi 0, %s33
    %s37 = sphi 0, %s36
    %s53 = sphi 0, %s37
    %s57 = sphi 0, %s57
    %s59 = sphi 0, %s57
    %s60 = sphi 0, %s59
    %s74 = sphi 0, %s60
    %s78 = sphi 0, %s78
    %s80 = sphi 0, %s78
    %s81 = sphi 0, %s80
    %s95 = sphi 0, %s81
    %s99 = sphi 0, %s99
    %s101 = sphi 0, %s99
    %s102 = sphi 0, %s101
    %s116 = sphi 0, %s102
    %s120 = sphi 0, %s120
    %s122 = sphi 0, %s120
    %s123 = sphi 0, %s122
    %s137 = sphi 0, %s123
    %s141 = sphi 0, %s141
    %s143 = sphi 0, %s141
    %s144 = sphi 0, %s143
    %s158 = sphi 0, %s144
    %s162 = sphi 0, %s162
    %s164 = sphi 0, %s162
    %s165 = sphi 0, %s164
    %s179 = sphi 0, %s165
    %s183 = sphi 0, %s183
    %s185 = sphi 0, %s183
    %s186 = sphi 0, %s185
    %s200 = sphi 0, %s186
    %s204 = sphi 0, %s204
    %s206 = sphi 0, %s204
    %s207 = sphi 0, %s206
    %s221 = sphi 0, %s207
    %s225 = sphi 0, %s225
    %s227 = sphi 0, %s225
    %s228 = sphi 0, %s227
    %s242 = sphi 0, %s228
    %s246 = sphi 0, %s246
    %s248 = sphi 0, %s246
    %s249 = sphi 0, %s248
    %s263 = sphi 0, %s249
    %s267 = sphi 0, %s267
    %s269 = sphi 0, %s267
    %s270 = sphi 0, %s269
    %s284 = sphi 0, %s270
    %s288 = sphi 0, %s288
    %s290 = sphi 0, %s288
    %s291 = sphi 0, %s290
    %s305 = sphi 0, %s291
    %s311 = sphi 0, %s313
    %s314 = sphi 0, %s311
    %s315 = sphi 0, %s314
    %s331 = sphi 0, %s315
  $region4: #{_lambda_.4} parent=0 // loop_header_branch
    %26 = sbr.rel (%p24) target = $region8
  $region5: #{_lambda_.4} parent=0 // loop_body
    %s28 = ssub.s32 %s23, 1
    %s29 = ssub.s32 %s23, 2
    %s30 = sadd.s32 %s23, 1
    %s31 = ssub.s32 %s23, %s30
    %p32 = scmp.eq.s32.totalorder %s31, 0
    %s34 = sadd.s32 %s33, 1
    %s35 = scalar_select %p32, %s33, %s34
    %p38 = pneg %p32
    %p39 = scmp.eq.s32.totalorder %s23, 1
    %p40 = por %p38, %p39
    %p41 = scmp.ne.s32.totalorder %s33, %s36
    %p42 = scmp.eq.s32.totalorder %s23, 0
    %p43 = por %p41, %p42
    %p44 = scmp.ne.s32.totalorder %s33, %s36
    %p45 = scmp.eq.s32.totalorder %s28, 1
    %p46 = por %p44, %p45
    %p47 = scmp.ne.s32.totalorder %s36, %s37
    %p48 = scmp.eq.s32.totalorder %s28, 0
    %p49 = por %p47, %p48
    %p50 = scmp.ne.s32.totalorder %s36, %s37
    %p51 = scmp.eq.s32.totalorder %s29, 1
    %p52 = por %p50, %p51
    %p54 = scmp.ne.s32.totalorder %s37, %s53
    %p55 = scmp.eq.s32.totalorder %s29, 0
    %p56 = por %p54, %p55
    %s58 = sadd.s32 %s57, 1
    %p61 = scmp.eq.s32.totalorder %s23, 1
    %p62 = scmp.ne.s32.totalorder %s57, %s59
    %p63 = scmp.eq.s32.totalorder %s23, 0
    %p64 = por %p62, %p63
    %p65 = scmp.ne.s32.totalorder %s57, %s59
    %p66 = scmp.eq.s32.totalorder %s28, 1
    %p67 = por %p65, %p66
    %p68 = scmp.ne.s32.totalorder %s59, %s60
    %p69 = scmp.eq.s32.totalorder %s28, 0
    %p70 = por %p68, %p69
    %p71 = scmp.ne.s32.totalorder %s59, %s60
    %p72 = scmp.eq.s32.totalorder %s29, 1
    %p73 = por %p71, %p72
    %p75 = scmp.ne.s32.totalorder %s60, %s74
    %p76 = scmp.eq.s32.totalorder %s29, 0
    %p77 = por %p75, %p76
    %s79 = sadd.s32 %s78, 1
    %p82 = scmp.eq.s32.totalorder %s23, 1
    %p83 = scmp.ne.s32.totalorder %s78, %s80
    %p84 = scmp.eq.s32.totalorder %s23, 0
    %p85 = por %p83, %p84
    %p86 = scmp.ne.s32.totalorder %s78, %s80
    %p87 = scmp.eq.s32.totalorder %s28, 1
    %p88 = por %p86, %p87
    %p89 = scmp.ne.s32.totalorder %s80, %s81
    %p90 = scmp.eq.s32.totalorder %s28, 0
    %p91 = por %p89, %p90
    %p92 = scmp.ne.s32.totalorder %s80, %s81
    %p93 = scmp.eq.s32.totalorder %s29, 1
    %p94 = por %p92, %p93
    %p96 = scmp.ne.s32.totalorder %s81, %s95
    %p97 = scmp.eq.s32.totalorder %s29, 0
    %p98 = por %p96, %p97
    %s100 = sadd.s32 %s99, 1
    %p103 = scmp.eq.s32.totalorder %s23, 1
    %p104 = scmp.ne.s32.totalorder %s99, %s101
    %p105 = scmp.eq.s32.totalorder %s23, 0
    %p106 = por %p104, %p105
    %p107 = scmp.ne.s32.totalorder %s99, %s101
    %p108 = scmp.eq.s32.totalorder %s28, 1
    %p109 = por %p107, %p108
    %p110 = scmp.ne.s32.totalorder %s101, %s102
    %p111 = scmp.eq.s32.totalorder %s28, 0
    %p112 = por %p110, %p111
    %p113 = scmp.ne.s32.totalorder %s101, %s102
    %p114 = scmp.eq.s32.totalorder %s29, 1
    %p115 = por %p113, %p114
    %p117 = scmp.ne.s32.totalorder %s102, %s116
    %p118 = scmp.eq.s32.totalorder %s29, 0
    %p119 = por %p117, %p118
    %s121 = sadd.s32 %s120, 1
    %p124 = scmp.eq.s32.totalorder %s23, 1
    %p125 = scmp.ne.s32.totalorder %s120, %s122
    %p126 = scmp.eq.s32.totalorder %s23, 0
    %p127 = por %p125, %p126
    %p128 = scmp.ne.s32.totalorder %s120, %s122
    %p129 = scmp.eq.s32.totalorder %s28, 1
    %p130 = por %p128, %p129
    %p131 = scmp.ne.s32.totalorder %s122, %s123
    %p132 = scmp.eq.s32.totalorder %s28, 0
    %p133 = por %p131, %p132
    %p134 = scmp.ne.s32.totalorder %s122, %s123
    %p135 = scmp.eq.s32.totalorder %s29, 1
    %p136 = por %p134, %p135
    %p138 = scmp.ne.s32.totalorder %s123, %s137
    %p139 = scmp.eq.s32.totalorder %s29, 0
    %p140 = por %p138, %p139
    %s142 = sadd.s32 %s141, 1
    %p145 = scmp.eq.s32.totalorder %s23, 1
    %p146 = scmp.ne.s32.totalorder %s141, %s143
    %p147 = scmp.eq.s32.totalorder %s23, 0
    %p148 = por %p146, %p147
    %p149 = scmp.ne.s32.totalorder %s141, %s143
    %p150 = scmp.eq.s32.totalorder %s28, 1
    %p151 = por %p149, %p150
    %p152 = scmp.ne.s32.totalorder %s143, %s144
    %p153 = scmp.eq.s32.totalorder %s28, 0
    %p154 = por %p152, %p153
    %p155 = scmp.ne.s32.totalorder %s143, %s144
    %p156 = scmp.eq.s32.totalorder %s29, 1
    %p157 = por %p155, %p156
    %p159 = scmp.ne.s32.totalorder %s144, %s158
    %p160 = scmp.eq.s32.totalorder %s29, 0
    %p161 = por %p159, %p160
    %s163 = sadd.s32 %s162, 1
    %p166 = scmp.eq.s32.totalorder %s23, 1
    %p167 = scmp.ne.s32.totalorder %s162, %s164
    %p168 = scmp.eq.s32.totalorder %s23, 0
    %p169 = por %p167, %p168
    %p170 = scmp.ne.s32.totalorder %s162, %s164
    %p171 = scmp.eq.s32.totalorder %s28, 1
    %p172 = por %p170, %p171
    %p173 = scmp.ne.s32.totalorder %s164, %s165
    %p174 = scmp.eq.s32.totalorder %s28, 0
    %p175 = por %p173, %p174
    %p176 = scmp.ne.s32.totalorder %s164, %s165
    %p177 = scmp.eq.s32.totalorder %s29, 1
    %p178 = por %p176, %p177
    %p180 = scmp.ne.s32.totalorder %s165, %s179
    %p181 = scmp.eq.s32.totalorder %s29, 0
    %p182 = por %p180, %p181
    %s184 = sadd.s32 %s183, 1
    %p187 = scmp.eq.s32.totalorder %s23, 1
    %p188 = scmp.ne.s32.totalorder %s183, %s185
    %p189 = scmp.eq.s32.totalorder %s23, 0
    %p190 = por %p188, %p189
    %p191 = scmp.ne.s32.totalorder %s183, %s185
    %p192 = scmp.eq.s32.totalorder %s28, 1
    %p193 = por %p191, %p192
    %p194 = scmp.ne.s32.totalorder %s185, %s186
    %p195 = scmp.eq.s32.totalorder %s28, 0
    %p196 = por %p194, %p195
    %p197 = scmp.ne.s32.totalorder %s185, %s186
    %p198 = scmp.eq.s32.totalorder %s29, 1
    %p199 = por %p197, %p198
    %p201 = scmp.ne.s32.totalorder %s186, %s200
    %p202 = scmp.eq.s32.totalorder %s29, 0
    %p203 = por %p201, %p202
    %s205 = sadd.s32 %s204, 1
    %p208 = scmp.eq.s32.totalorder %s23, 1
    %p209 = scmp.ne.s32.totalorder %s204, %s206
    %p210 = scmp.eq.s32.totalorder %s23, 0
    %p211 = por %p209, %p210
    %p212 = scmp.ne.s32.totalorder %s204, %s206
    %p213 = scmp.eq.s32.totalorder %s28, 1
    %p214 = por %p212, %p213
    %p215 = scmp.ne.s32.totalorder %s206, %s207
    %p216 = scmp.eq.s32.totalorder %s28, 0
    %p217 = por %p215, %p216
    %p218 = scmp.ne.s32.totalorder %s206, %s207
    %p219 = scmp.eq.s32.totalorder %s29, 1
    %p220 = por %p218, %p219
    %p222 = scmp.ne.s32.totalorder %s207, %s221
    %p223 = scmp.eq.s32.totalorder %s29, 0
    %p224 = por %p222, %p223
    %s226 = sadd.s32 %s225, 1
    %p229 = scmp.eq.s32.totalorder %s23, 1
    %p230 = scmp.ne.s32.totalorder %s225, %s227
    %p231 = scmp.eq.s32.totalorder %s23, 0
    %p232 = por %p230, %p231
    %p233 = scmp.ne.s32.totalorder %s225, %s227
    %p234 = scmp.eq.s32.totalorder %s28, 1
    %p235 = por %p233, %p234
    %p236 = scmp.ne.s32.totalorder %s227, %s228
    %p237 = scmp.eq.s32.totalorder %s28, 0
    %p238 = por %p236, %p237
    %p239 = scmp.ne.s32.totalorder %s227, %s228
    %p240 = scmp.eq.s32.totalorder %s29, 1
    %p241 = por %p239, %p240
    %p243 = scmp.ne.s32.totalorder %s228, %s242
    %p244 = scmp.eq.s32.totalorder %s29, 0
    %p245 = por %p243, %p244
    %s247 = sadd.s32 %s246, 1
    %p250 = scmp.eq.s32.totalorder %s23, 1
    %p251 = scmp.ne.s32.totalorder %s246, %s248
    %p252 = scmp.eq.s32.totalorder %s23, 0
    %p253 = por %p251, %p252
    %p254 = scmp.ne.s32.totalorder %s246, %s248
    %p255 = scmp.eq.s32.totalorder %s28, 1
    %p256 = por %p254, %p255
    %p257 = scmp.ne.s32.totalorder %s248, %s249
    %p258 = scmp.eq.s32.totalorder %s28, 0
    %p259 = por %p257, %p258
    %p260 = scmp.ne.s32.totalorder %s248, %s249
    %p261 = scmp.eq.s32.totalorder %s29, 1
    %p262 = por %p260, %p261
    %p264 = scmp.ne.s32.totalorder %s249, %s263
    %p265 = scmp.eq.s32.totalorder %s29, 0
    %p266 = por %p264, %p265
    %s268 = sadd.s32 %s267, 1
    %p271 = scmp.eq.s32.totalorder %s23, 1
    %p272 = scmp.ne.s32.totalorder %s267, %s269
    %p273 = scmp.eq.s32.totalorder %s23, 0
    %p274 = por %p272, %p273
    %p275 = scmp.ne.s32.totalorder %s267, %s269
    %p276 = scmp.eq.s32.totalorder %s28, 1
    %p277 = por %p275, %p276
    %p278 = scmp.ne.s32.totalorder %s269, %s270
    %p279 = scmp.eq.s32.totalorder %s28, 0
    %p280 = por %p278, %p279
    %p281 = scmp.ne.s32.totalorder %s269, %s270
    %p282 = scmp.eq.s32.totalorder %s29, 1
    %p283 = por %p281, %p282
    %p285 = scmp.ne.s32.totalorder %s270, %s284
    %p286 = scmp.eq.s32.totalorder %s29, 0
    %p287 = por %p285, %p286
    %s289 = sadd.s32 %s288, 1
    %p292 = scmp.eq.s32.totalorder %s23, 1
    %p293 = scmp.ne.s32.totalorder %s288, %s290
    %p294 = scmp.eq.s32.totalorder %s23, 0
    %p295 = por %p293, %p294
    %p296 = scmp.ne.s32.totalorder %s288, %s290
    %p297 = scmp.eq.s32.totalorder %s28, 1
    %p298 = por %p296, %p297
    %p299 = scmp.ne.s32.totalorder %s290, %s291
    %p300 = scmp.eq.s32.totalorder %s28, 0
    %p301 = por %p299, %p300
    %p302 = scmp.ne.s32.totalorder %s290, %s291
    %p303 = scmp.eq.s32.totalorder %s29, 1
    %p304 = por %p302, %p303
    %p306 = scmp.ne.s32.totalorder %s291, %s305
    %p307 = scmp.eq.s32.totalorder %s29, 0
    %p308 = por %p306, %p307
    %s309 = ssub.s32 %s23, %s30
    %p310 = scmp.eq.s32.totalorder %s309, 0
    %s312 = sadd.s32 %s311, 1
    %s313 = scalar_select %p310, %s311, %s312
    %p316 = pneg %p310
    %p317 = scmp.eq.s32.totalorder %s23, 1
    %p318 = por %p316, %p317
    %p319 = scmp.ne.s32.totalorder %s311, %s314
    %p320 = scmp.eq.s32.totalorder %s23, 0
    %p321 = por %p319, %p320
    %p322 = scmp.ne.s32.totalorder %s311, %s314
    %p323 = scmp.eq.s32.totalorder %s28, 1
    %p324 = por %p322, %p323
    %p325 = scmp.ne.s32.totalorder %s314, %s315
    %p326 = scmp.eq.s32.totalorder %s28, 0
    %p327 = por %p325, %p326
    %p328 = scmp.ne.s32.totalorder %s314, %s315
    %p329 = scmp.eq.s32.totalorder %s29, 1
    %p330 = por %p328, %p329
    %p332 = scmp.ne.s32.totalorder %s315, %s331
    %p333 = scmp.eq.s32.totalorder %s29, 0
    %p334 = por %p332, %p333
    %p335 = scmp.le.s32.totalorder 1, %s23
    %p336 = scmp.lt.s32.totalorder %s23, 3
    %p337 = pnand %p335, %p336
    %p338 = pneg %p337
    // Predicated region
    $region9: #{_lambda_.4} parent=5 // pred_check
      _
    $region10: #{_lambda_.4} parent=5 // pred_check_branch
      %340 = sbr.rel (%p337) target = $region12
    $region11: #{_lambda_.4} parent=5 // pred_region
      %s341 = ssub.s32 %s23, 1
      // Predicated region
      $region13: #{_lambda_.4} parent=11 // pred_check
        %p342 = pneg %p70
      $region14: #{_lambda_.4} parent=11 // pred_check_branch
        %344 = sbr.rel (%p342) target = $region16
      $region15: #{_lambda_.4} parent=11 // pred_region
        _
      $region16: #{_lambda_.4} parent=11 // pred_fallthru
        _
      // Predicated region
      $region17: #{_lambda_.4} parent=11 // pred_check
        %p345 = pneg %p91
      $region18: #{_lambda_.4} parent=11 // pred_check_branch
        %347 = sbr.rel (%p345) target = $region20
      $region19: #{_lambda_.4} parent=11 // pred_region
        _
      $region20: #{_lambda_.4} parent=11 // pred_fallthru
        _
      // Predicated region
      $region21: #{_lambda_.4} parent=11 // pred_check
        %p348 = pneg %p112
      $region22: #{_lambda_.4} parent=11 // pred_check_branch
        %350 = sbr.rel (%p348) target = $region24
      $region23: #{_lambda_.4} parent=11 // pred_region
        _
      $region24: #{_lambda_.4} parent=11 // pred_fallthru
        _
      // Predicated region
      $region25: #{_lambda_.4} parent=11 // pred_check
        %p351 = pneg %p133
      $region26: #{_lambda_.4} parent=11 // pred_check_branch
        %353 = sbr.rel (%p351) target = $region28
      $region27: #{_lambda_.4} parent=11 // pred_region
        _
      $region28: #{_lambda_.4} parent=11 // pred_fallthru
        _
      // Predicated region
      $region29: #{_lambda_.4} parent=11 // pred_check
        %p354 = pneg %p154
      $region30: #{_lambda_.4} parent=11 // pred_check_branch
        %356 = sbr.rel (%p354) target = $region32
      $region31: #{_lambda_.4} parent=11 // pred_region
        _
      $region32: #{_lambda_.4} parent=11 // pred_fallthru
        _
      // Predicated region
      $region33: #{_lambda_.4} parent=11 // pred_check
        %p357 = pneg %p175
      $region34: #{_lambda_.4} parent=11 // pred_check_branch
        %359 = sbr.rel (%p357) target = $region36
      $region35: #{_lambda_.4} parent=11 // pred_region
        _
      $region36: #{_lambda_.4} parent=11 // pred_fallthru
        _
      // Predicated region
      $region37: #{_lambda_.4} parent=11 // pred_check
        %p360 = pneg %p196
      $region38: #{_lambda_.4} parent=11 // pred_check_branch
        %362 = sbr.rel (%p360) target = $region40
      $region39: #{_lambda_.4} parent=11 // pred_region
        _
      $region40: #{_lambda_.4} parent=11 // pred_fallthru
        _
      // Predicated region
      $region41: #{_lambda_.4} parent=11 // pred_check
        %p363 = pneg %p217
      $region42: #{_lambda_.4} parent=11 // pred_check_branch
        %365 = sbr.rel (%p363) target = $region44
      $region43: #{_lambda_.4} parent=11 // pred_region
        _
      $region44: #{_lambda_.4} parent=11 // pred_fallthru
        _
      // Predicated region
      $region45: #{_lambda_.4} parent=11 // pred_check
        %p366 = pneg %p238
      $region46: #{_lambda_.4} parent=11 // pred_check_branch
        %368 = sbr.rel (%p366) target = $region48
      $region47: #{_lambda_.4} parent=11 // pred_region
        _
      $region48: #{_lambda_.4} parent=11 // pred_fallthru
        _
      // Predicated region
      $region49: #{_lambda_.4} parent=11 // pred_check
        %p369 = pneg %p259
      $region50: #{_lambda_.4} parent=11 // pred_check_branch
        %371 = sbr.rel (%p369) target = $region52
      $region51: #{_lambda_.4} parent=11 // pred_region
        _
      $region52: #{_lambda_.4} parent=11 // pred_fallthru
        _
      // Predicated region
      $region53: #{_lambda_.4} parent=11 // pred_check
        %p372 = pneg %p280
      $region54: #{_lambda_.4} parent=11 // pred_check_branch
        %374 = sbr.rel (%p372) target = $region56
      $region55: #{_lambda_.4} parent=11 // pred_region
        _
      $region56: #{_lambda_.4} parent=11 // pred_fallthru
        _
      // Predicated region
      $region57: #{_lambda_.4} parent=11 // pred_check
        %p375 = pneg %p301
      $region58: #{_lambda_.4} parent=11 // pred_check_branch
        %377 = sbr.rel (%p375) target = $region60
      $region59: #{_lambda_.4} parent=11 // pred_region
        _
      $region60: #{_lambda_.4} parent=11 // pred_fallthru
        _
    $region12: #{_lambda_.4} parent=5 // pred_fallthru
      _
    %p378 = scmp.lt.s32.totalorder %s23, 2
    // Predicated region
    $region61: #{_lambda_.4} parent=5 // pred_check
      %p379 = pneg %p378
    $region62: #{_lambda_.4} parent=5 // pred_check_branch
      %381 = sbr.rel (%p379) target = $region64
    $region63: #{_lambda_.4} parent=5 // pred_region
      // Predicated region
      $region65: #{_lambda_.4} parent=63 // pred_check
        %p382 = pneg %p43
      $region66: #{_lambda_.4} parent=63 // pred_check_branch
        %384 = sbr.rel (%p382) target = $region68
      $region67: #{_lambda_.4} parent=63 // pred_region
        %p385 = scmp.lt.s32.totalorder %s23, 1
        %s386 = scalar_select %p385, %s23, 1
        %s387 = smul.addr %s386, 5
        %s388 = smul.addr %s387, 4
        %s389 = scalar_lea.vmem %s0, %s388
      $region68: #{_lambda_.4} parent=63 // pred_fallthru
        _
    $region64: #{_lambda_.4} parent=5 // pred_fallthru
      _
    %p390 = scmp.le.s32.totalorder 1, %s23
    %p391 = scmp.lt.s32.totalorder %s23, 3
    %p392 = pnand %p390, %p391
    %p393 = pneg %p392
    // Predicated region
    $region69: #{_lambda_.4} parent=5 // pred_check
      _
    $region70: #{_lambda_.4} parent=5 // pred_check_branch
      %395 = sbr.rel (%p392) target = $region72
    $region71: #{_lambda_.4} parent=5 // pred_region
      %s396 = ssub.s32 %s23, 1
      %p397 = scmp.lt.s32.totalorder %s28, 1
      %s398 = scalar_select %p397, %s28, 1
      %s399 = smul.addr %s398, 5
      %s400 = smul.addr %s399, 4
      %s401 = scalar_lea.vmem %s0, %s400
      %p402 = pneg %p49
      %p403 = pneg %p46
      %p404 = pneg %p70
      %p405 = pneg %p67
      %p406 = pneg %p91
      %p407 = pneg %p88
      %p408 = pneg %p112
      %p409 = pneg %p109
      %p410 = pneg %p133
      %p411 = pneg %p130
      %p412 = pneg %p154
      %p413 = pneg %p151
      %p414 = pneg %p175
      %p415 = pneg %p172
      %p416 = pneg %p196
      %p417 = pneg %p193
      %p418 = pneg %p217
      %p419 = pneg %p214
      %p420 = pneg %p238
      %p421 = pneg %p235
      %p422 = pneg %p259
      %p423 = pneg %p256
      %p424 = pneg %p280
      %p425 = pneg %p277
      %p426 = pneg %p301
      %p427 = pneg %p298
      %p428 = pneg %p327
      %p429 = pneg %p324
      %p430 = scmp.lt.s32.totalorder %s28, 1
      %s431 = scalar_select %p430, %s28, 1
      %s432 = smul.addr %s431, 4
      %s433 = smul.addr %s432, 4
      %s434 = scalar_lea.vmem %s13, %s433
      %p435 = scmp.lt.s32.totalorder %s28, 1
      %s436 = scalar_select %p435, %s28, 1
      %s437 = smul.addr %s436, 5
      %s438 = smul.addr %s437, 4
      %s439 = scalar_lea.vmem %s0, %s438
      %p440 = scmp.lt.s32.totalorder %s28, 1
      %s441 = scalar_select %p440, %s28, 1
      %s442 = smul.addr %s441, 4
      %s443 = smul.addr %s442, 4
      %s444 = scalar_lea.vmem %s13, %s443
      %v446 = vld [vmem:[%s439] sm:$0xf]
      %v447 = vld [vmem:[%s439 + $0x4] sm:$0xf]
      %v448 = vld [vmem:[%s439 + $0x8] sm:$0xf]
      %v449 = vld [vmem:[%s439 + $0xc] sm:$0xf]
      %v450 = vld [vmem:[%s1] sm:$0x1]
      %v451 = vld [vmem:[%s439 + $0x10] sm:$0x1]
      %s452 = scalar_lea.vmem %s1, 1
      %v453 = vld [vmem:[%s452] sm:$0x1]
      %v459 = vunpack.c.l.b16 %v446
      %v460 = vunpack.c.l.b16 %v447
      %v461 = vunpack.c.l.b16 %v448
      %v462 = vunpack.c.l.b16 %v449
      %v463 = vunpack.c.l.b16 %v451
      %v464 = vpack.c.b16 %v460, %v459
      %v465 = vpack.c.b16 %v462, %v461
      %v466 = vpack.c.b16 %v463, %v463
      %vm467 = vsmask.f32 7424
      %v469 = vshrl.u32 %v464, 16
      %v471 = vshll.u32 %v464, 16
      %v473 = vrot.slane %v471, 1
      %v474 = vor.u32 %v469, %v473
      %v476 = vshll.u32 %v465, 16
      %v478 = vrot.slane %v476, 1
      %v479 = vsel %vm467, %v474, %v478
      %v480 = vshrl.u32 %v465, 16
      %v482 = vor.u32 %v480, %v478
      %v484 = vshll.u32 %v466, 16
      %v486 = vrot.slane %v484, 1
      %v487 = vsel %vm467, %v482, %v486
      %vm488 = vcmask 7168
      %v490 = vsel %vm488, %v479, 0
      %v493 = vsel %vm488, %v487, 0
      %vm495 = vcmask 1040384
      %v496 = vsel 0, 4294967295, 65535
      %v497 = vsel %vm495, %v496, 0
      %v499 = vand.u32 %v453, %v497
      %501 = vmatpush.bf16.msra.mxu0 0
      %502 = vmatpush.bf16.msra.mxu0 0
      %503 = vmatpush.bf16.msra.mxu0 0
      %504 = vmatpush.bf16.msra.mxu0 0
      %505 = vmatpush.bf16.msra.mxu0 0
      %506 = vmatpush.bf16.msra.mxu0 0
      %507 = vmatpush.bf16.msra.mxu0 0
      %508 = vmatpush.bf16.msra.mxu0 %v499
      %509 = vmatmul.bf16.gmra.mxu0 %v490
      %v510 = vpop.f32.mrf.mxu0
      %v511 = vadd.f32 0.0, %v510
      %v512 = vpop.f32.mrf.mxu0
      %v513 = vadd.f32 0.0, %v512
      %514 = vmatmul.bf16.gmra.mxu0 %v493
      %v515 = vpop.f32.mrf.mxu0
      %v516 = vadd.f32 0.0, %v515
      %v517 = vpop.f32.mrf.mxu0
      %v518 = vadd.f32 0.0, %v517
      %519 = vdwg.mxu0
      %v520 = vsel %vm488, %v464, 0
      %v522 = vsel %vm488, %v465, 0
      %v525 = vand.u32 %v450, %v497
      %527 = vmatpush.bf16.msra.mxu0 0
      %528 = vmatpush.bf16.msra.mxu0 0
      %529 = vmatpush.bf16.msra.mxu0 0
      %530 = vmatpush.bf16.msra.mxu0 0
      %531 = vmatpush.bf16.msra.mxu0 0
      %532 = vmatpush.bf16.msra.mxu0 0
      %533 = vmatpush.bf16.msra.mxu0 0
      %534 = vmatpush.bf16.msra.mxu0 %v525
      %535 = vmatmul.bf16.gmra.mxu0 %v520
      %v536 = vpop.f32.mrf.mxu0
      %v537 = vadd.f32 %v511, %v536
      %v538 = vpop.f32.mrf.mxu0
      %v539 = vadd.f32 %v513, %v538
      %540 = vmatmul.bf16.gmra.mxu0 %v522
      %v541 = vpop.f32.mrf.mxu0
      %v542 = vadd.f32 %v516, %v541
      %v543 = vpop.f32.mrf.mxu0
      %v544 = vadd.f32 %v518, %v543
      %545 = vdwg.mxu0
      %v546 = vld [vmem:[%s439] sm:$0xe]
      %s547 = scalar_lea.vmem %s1, 2
      %v548 = vld [vmem:[%s547] sm:$0x1]
      %v550 = vunpack.c.l.b16 %v546
      %v551 = vpack.c.b16 %v460, %v550
      %vm552 = vcmask 1046528
      %v553 = vrot.slane %v551, 1
      %v554 = vrot.slane %v465, 1
      %v555 = vsel %vm552, %v553, %v554
      %v556 = vrot.slane %v466, 1
      %v557 = vsel %vm552, %v554, %v556
      %v559 = vsel %vm488, %v555, 0
      %v562 = vsel %vm488, %v557, 0
      %v565 = vand.u32 %v548, %v497
      %567 = vmatpush.bf16.msra.mxu0 0
      %568 = vmatpush.bf16.msra.mxu0 0
      %569 = vmatpush.bf16.msra.mxu0 0
      %570 = vmatpush.bf16.msra.mxu0 0
      %571 = vmatpush.bf16.msra.mxu0 0
      %572 = vmatpush.bf16.msra.mxu0 0
      %573 = vmatpush.bf16.msra.mxu0 0
      %574 = vmatpush.bf16.msra.mxu0 %v565
      %575 = vmatmul.bf16.gmra.mxu0 %v559
      %v576 = vpop.f32.mrf.mxu0
      %v577 = vadd.f32 0.0, %v576
      %v578 = vpop.f32.mrf.mxu0
      %v579 = vadd.f32 0.0, %v578
      %580 = vmatmul.bf16.gmra.mxu0 %v562
      %v581 = vpop.f32.mrf.mxu0
      %v582 = vadd.f32 0.0, %v581
      %v583 = vpop.f32.mrf.mxu0
      %v584 = vadd.f32 0.0, %v583
      %585 = vdwg.mxu0
      %v586 = vadd.f32 %v537, %v577
      %v587 = vadd.f32 %v539, %v579
      %v588 = vadd.f32 %v542, %v582
      %v589 = vadd.f32 %v544, %v584
      %v590 = vld [vmem:[%s439 + $0x10] sm:$0x3]
      %s591 = scalar_lea.vmem %s1, 3
      %v592 = vld [vmem:[%s591] sm:$0x1]
      %v594 = vunpack.c.l.b16 %v590
      %v595 = vpack.c.b16 %v594, %v594
      %vm596 = vsmask.f32 6400
      %v598 = vshrl.u32 %v551, 16
      %v600 = vrot.slane %v598, 1
      %v601 = vshll.u32 %v551, 16
      %v603 = vrot.slane %v601, 2
      %v604 = vor.u32 %v600, %v603
      %v605 = vrot.slane %v480, 1
      %v606 = vrot.slane %v476, 2
      %v607 = vor.u32 %v605, %v606
      %v608 = vsel %vm596, %v604, %v607
      %v610 = vshrl.u32 %v595, 16
      %v612 = vrot.slane %v610, 1
      %v613 = vshll.u32 %v595, 16
      %v615 = vrot.slane %v613, 2
      %v616 = vor.u32 %v612, %v615
      %v617 = vsel %vm596, %v607, %v616
      %v619 = vsel %vm488, %v608, 0
      %v622 = vsel %vm488, %v617, 0
      %v625 = vand.u32 %v592, %v497
      %627 = vmatpush.bf16.msra.mxu0 0
      %628 = vmatpush.bf16.msra.mxu0 0
      %629 = vmatpush.bf16.msra.mxu0 0
      %630 = vmatpush.bf16.msra.mxu0 0
      %631 = vmatpush.bf16.msra.mxu0 0
      %632 = vmatpush.bf16.msra.mxu0 0
      %633 = vmatpush.bf16.msra.mxu0 0
      %634 = vmatpush.bf16.msra.mxu0 %v625
      %635 = vmatmul.bf16.gmra.mxu0 %v619
      %v636 = vpop.f32.mrf.mxu0
      %v637 = vadd.f32 0.0, %v636
      %v638 = vpop.f32.mrf.mxu0
      %v639 = vadd.f32 0.0, %v638
      %640 = vmatmul.bf16.gmra.mxu0 %v622
      %v641 = vpop.f32.mrf.mxu0
      %v642 = vadd.f32 0.0, %v641
      %v643 = vpop.f32.mrf.mxu0
      %v644 = vadd.f32 0.0, %v643
      %645 = vdwg.mxu0
      %v646 = vadd.f32 %v586, %v637
      %v647 = vadd.f32 %v587, %v639
      %v648 = vadd.f32 %v588, %v642
      %v649 = vadd.f32 %v589, %v644
      %v650 = vld [vmem:[%s439] sm:$0xc]
      %s651 = scalar_lea.vmem %s1, 4
      %v652 = vld [vmem:[%s651] sm:$0x1]
      %v654 = vunpack.c.l.b16 %v650
      %v655 = vpack.c.b16 %v460, %v654
      %vm656 = vcmask 1045504
      %v657 = vrot.slane %v655, 2
      %v658 = vrot.slane %v465, 2
      %v659 = vsel %vm656, %v657, %v658
      %v660 = vrot.slane %v595, 2
      %v661 = vsel %vm656, %v658, %v660
      %v663 = vsel %vm488, %v659, 0
      %v666 = vsel %vm488, %v661, 0
      %v669 = vand.u32 %v652, %v497
      %671 = vmatpush.bf16.msra.mxu0 0
      %672 = vmatpush.bf16.msra.mxu0 0
      %673 = vmatpush.bf16.msra.mxu0 0
      %674 = vmatpush.bf16.msra.mxu0 0
      %675 = vmatpush.bf16.msra.mxu0 0
      %676 = vmatpush.bf16.msra.mxu0 0
      %677 = vmatpush.bf16.msra.mxu0 0
      %678 = vmatpush.bf16.msra.mxu0 %v669
      %679 = vmatmul.bf16.gmra.mxu0 %v663
      %v680 = vpop.f32.mrf.mxu0
      %v681 = vadd.f32 0.0, %v680
      %v682 = vpop.f32.mrf.mxu0
      %v683 = vadd.f32 0.0, %v682
      %684 = vmatmul.bf16.gmra.mxu0 %v666
      %v685 = vpop.f32.mrf.mxu0
      %v686 = vadd.f32 0.0, %v685
      %v687 = vpop.f32.mrf.mxu0
      %v688 = vadd.f32 0.0, %v687
      %689 = vdwg.mxu0
      %v690 = vadd.f32 %v646, %v681
      %v691 = vadd.f32 %v647, %v683
      %v692 = vadd.f32 %v648, %v686
      %v693 = vadd.f32 %v649, %v688
      %v694 = vld [vmem:[%s2] sm:$0x1]
      %v696 = vperm.slane %v694, 0
      %v698 = vmul.f32 %v690, %v696
      %v699 = vmul.f32 %v691, %v696
      %v700 = vmul.f32 %v692, %v696
      %v701 = vmul.f32 %v693, %v696
      %v702 = vld [vmem:[%s3] sm:$0x1]
      %v704 = vperm.slane %v702, 0
      %v706 = vadd.f32 %v698, %v704
      %v707 = vadd.f32 %v699, %v704
      %v708 = vadd.f32 %v700, %v704
      %v709 = vadd.f32 %v701, %v704
      %vm710 = vcmp.ge.f32.partialorder %v706, 0.0
      %vm711 = vcmp.ge.f32.partialorder %v707, 0.0
      %vm712 = vcmp.ge.f32.partialorder %v708, 0.0
      %vm713 = vcmp.ge.f32.partialorder %v709, 0.0
      %v714 = vmul.f32 %v706, 0.2
      %v715 = vmul.f32 %v707, 0.2
      %v716 = vmul.f32 %v708, 0.2
      %v717 = vmul.f32 %v709, 0.2
      %v718 = vsel %vm710, %v706, %v714
      %v719 = vsel %vm711, %v707, %v715
      %v720 = vsel %vm712, %v708, %v716
      %v721 = vsel %vm713, %v709, %v717
      %v722 = vpack.c.bf16 %v719, %v718
      %v723 = vpack.c.bf16 %v721, %v720
      %v724 = vld [vmem:[%s4] sm:$0x3]
      %vm725 = vcmask 31744
      %v727 = vsel %vm725, %v722, 0
      %v730 = vsel %vm725, %v723, 0
      %vm732 = vcmask 1041408
      %v734 = vsel %vm732, %v724, 0
      %736 = vmatpush.bf16.msra.mxu0 0
      %737 = vmatpush.bf16.msra.mxu0 0
      %738 = vmatpush.bf16.msra.mxu0 0
      %739 = vmatpush.bf16.msra.mxu0 0
      %740 = vmatpush.bf16.msra.mxu0 0
      %741 = vmatpush.bf16.msra.mxu0 0
      %742 = vmatpush.bf16.msra.mxu0 0
      %743 = vmatpush.bf16.msra.mxu0 %v734
      %744 = vmatmul.bf16.gmra.mxu0 %v727
      %v745 = vpop.f32.mrf.mxu0
      %v746 = vadd.f32 0.0, %v745
      %v747 = vpop.f32.mrf.mxu0
      %v748 = vadd.f32 0.0, %v747
      %749 = vmatmul.bf16.gmra.mxu0 %v730
      %v750 = vpop.f32.mrf.mxu0
      %v751 = vadd.f32 0.0, %v750
      %v752 = vpop.f32.mrf.mxu0
      %v753 = vadd.f32 0.0, %v752
      %754 = vdwg.mxu0
      %v755 = vld [vmem:[%s5] sm:$0x1]
      %v757 = vperm.slane %v755, 0
      %v759 = vmul.f32 %v746, %v757
      %v760 = vmul.f32 %v748, %v757
      %v761 = vmul.f32 %v751, %v757
      %v762 = vmul.f32 %v753, %v757
      %v763 = vld [vmem:[%s6] sm:$0x1]
      %v765 = vperm.slane %v763, 0
      %v767 = vadd.f32 %v759, %v765
      %v768 = vadd.f32 %v760, %v765
      %v769 = vadd.f32 %v761, %v765
      %v770 = vadd.f32 %v762, %v765
      %vm771 = vcmp.ge.f32.partialorder %v767, 0.0
      %vm772 = vcmp.ge.f32.partialorder %v768, 0.0
      %vm773 = vcmp.ge.f32.partialorder %v769, 0.0
      %vm774 = vcmp.ge.f32.partialorder %v770, 0.0
      %v775 = vmul.f32 %v767, 0.2
      %v776 = vmul.f32 %v768, 0.2
      %v777 = vmul.f32 %v769, 0.2
      %v778 = vmul.f32 %v770, 0.2
      %v779 = vsel %vm771, %v767, %v775
      %v780 = vsel %vm772, %v768, %v776
      %v781 = vsel %vm773, %v769, %v777
      %v782 = vsel %vm774, %v770, %v778
      %vm787 = vcmask 1043456
      %v788 = vrot.slane %v779, 4
      %v789 = vrot.slane %v780, 4
      %v790 = vsel %vm787, %v788, %v789
      %v791 = vrot.slane %v781, 4
      %v792 = vsel %vm787, %v789, %v791
      %v793 = vrot.slane %v782, 4
      %v794 = vsel %vm787, %v791, %v793
      %v800 = vsel %vm787, 0.0, %v788
      %v801 = vsel %vm787, %v793, 0.0
      %v802 = vpack.c.bf16 %v800, 0.0
      %v803 = vpack.c.bf16 %v792, %v790
      %v804 = vld [vmem:[%s7] sm:$0x1]
      %v805 = vpack.c.bf16 %v790, %v800
      %v806 = vpack.c.bf16 %v794, %v792
      %s807 = scalar_lea.vmem %s7, 1
      %v808 = vld [vmem:[%s807] sm:$0x1]
      %v810 = vsel %vm488, %v805, 0
      %v813 = vsel %vm488, %v806, 0
      %v816 = vand.u32 %v808, %v497
      %818 = vmatpush.bf16.msra.mxu0 0
      %819 = vmatpush.bf16.msra.mxu0 0
      %820 = vmatpush.bf16.msra.mxu0 0
      %821 = vmatpush.bf16.msra.mxu0 0
      %822 = vmatpush.bf16.msra.mxu0 0
      %823 = vmatpush.bf16.msra.mxu0 0
      %824 = vmatpush.bf16.msra.mxu0 0
      %825 = vmatpush.bf16.msra.mxu0 %v816
      %826 = vmatmul.bf16.gmra.mxu0 %v810
      %v827 = vpop.f32.mrf.mxu0
      %v828 = vadd.f32 0.0, %v827
      %v829 = vpop.f32.mrf.mxu0
      %v830 = vadd.f32 0.0, %v829
      %831 = vmatmul.bf16.gmra.mxu0 %v813
      %v832 = vpop.f32.mrf.mxu0
      %v833 = vadd.f32 0.0, %v832
      %v834 = vpop.f32.mrf.mxu0
      %v835 = vadd.f32 0.0, %v834
      %836 = vdwg.mxu0
      %v838 = vsel %vm488, %v802, 0
      %v841 = vsel %vm488, %v803, 0
      %v844 = vand.u32 %v804, %v497
      %846 = vmatpush.bf16.msra.mxu0 0
      %847 = vmatpush.bf16.msra.mxu0 0
      %848 = vmatpush.bf16.msra.mxu0 0
      %849 = vmatpush.bf16.msra.mxu0 0
      %850 = vmatpush.bf16.msra.mxu0 0
      %851 = vmatpush.bf16.msra.mxu0 0
      %852 = vmatpush.bf16.msra.mxu0 0
      %853 = vmatpush.bf16.msra.mxu0 %v844
      %854 = vmatmul.bf16.gmra.mxu0 %v838
      %v855 = vpop.f32.mrf.mxu0
      %v856 = vadd.f32 %v828, %v855
      %v857 = vpop.f32.mrf.mxu0
      %v858 = vadd.f32 %v830, %v857
      %859 = vmatmul.bf16.gmra.mxu0 %v841
      %v860 = vpop.f32.mrf.mxu0
      %v861 = vadd.f32 %v833, %v860
      %v862 = vpop.f32.mrf.mxu0
      %v863 = vadd.f32 %v835, %v862
      %864 = vdwg.mxu0
      %v865 = vpack.c.bf16 %v801, %v794
      %s866 = scalar_lea.vmem %s7, 2
      %v867 = vld [vmem:[%s866] sm:$0x1]
      %v869 = vsel %vm488, %v865, 0
      %v872 = vand.u32 %v867, %v497
      %874 = vmatpush.bf16.msra.mxu0 0
      %875 = vmatpush.bf16.msra.mxu0 0
      %876 = vmatpush.bf16.msra.mxu0 0
      %877 = vmatpush.bf16.msra.mxu0 0
      %878 = vmatpush.bf16.msra.mxu0 0
      %879 = vmatpush.bf16.msra.mxu0 0
      %880 = vmatpush.bf16.msra.mxu0 0
      %881 = vmatpush.bf16.msra.mxu0 %v872
      %882 = vmatmul.bf16.gmra.mxu0 %v841
      %v883 = vpop.f32.mrf.mxu0
      %v884 = vadd.f32 0.0, %v883
      %v885 = vpop.f32.mrf.mxu0
      %v886 = vadd.f32 0.0, %v885
      %887 = vmatmul.bf16.gmra.mxu0 %v869
      %v888 = vpop.f32.mrf.mxu0
      %v889 = vadd.f32 0.0, %v888
      %v890 = vpop.f32.mrf.mxu0
      %v891 = vadd.f32 0.0, %v890
      %892 = vdwg.mxu0
      %v893 = vadd.f32 %v856, %v884
      %v894 = vadd.f32 %v858, %v886
      %v895 = vadd.f32 %v861, %v889
      %v896 = vadd.f32 %v863, %v891
      %v897 = vpack.c.bf16 0.0, %v801
      %s898 = scalar_lea.vmem %s7, 3
      %v899 = vld [vmem:[%s898] sm:$0x1]
      %v901 = vsel %vm488, %v897, 0
      %v904 = vand.u32 %v899, %v497
      %906 = vmatpush.bf16.msra.mxu0 0
      %907 = vmatpush.bf16.msra.mxu0 0
      %908 = vmatpush.bf16.msra.mxu0 0
      %909 = vmatpush.bf16.msra.mxu0 0
      %910 = vmatpush.bf16.msra.mxu0 0
      %911 = vmatpush.bf16.msra.mxu0 0
      %912 = vmatpush.bf16.msra.mxu0 0
      %913 = vmatpush.bf16.msra.mxu0 %v904
      %914 = vmatmul.bf16.gmra.mxu0 %v813
      %v915 = vpop.f32.mrf.mxu0
      %v916 = vadd.f32 0.0, %v915
      %v917 = vpop.f32.mrf.mxu0
      %v918 = vadd.f32 0.0, %v917
      %919 = vmatmul.bf16.gmra.mxu0 %v901
      %v920 = vpop.f32.mrf.mxu0
      %v921 = vadd.f32 0.0, %v920
      %v922 = vpop.f32.mrf.mxu0
      %v923 = vadd.f32 0.0, %v922
      %924 = vdwg.mxu0
      %v925 = vadd.f32 %v893, %v916
      %v926 = vadd.f32 %v894, %v918
      %v927 = vadd.f32 %v895, %v921
      %v928 = vadd.f32 %v896, %v923
      %v929 = vld [vmem:[%s8] sm:$0x1]
      %v931 = vperm.slane %v929, 0
      %v933 = vmul.f32 %v925, %v931
      %v934 = vmul.f32 %v926, %v931
      %v935 = vmul.f32 %v927, %v931
      %v936 = vmul.f32 %v928, %v931
      %v937 = vld [vmem:[%s9] sm:$0x1]
      %v939 = vperm.slane %v937, 0
      %v941 = vadd.f32 %v933, %v939
      %v942 = vadd.f32 %v934, %v939
      %v943 = vadd.f32 %v935, %v939
      %v944 = vadd.f32 %v936, %v939
      %s945 = scalar_lea.vmem %s4, 2
      %v946 = vld [vmem:[%s945] sm:$0x3]
      %v948 = vsel %vm732, %v946, 0
      %950 = vmatpush.bf16.msra.mxu0 0
      %951 = vmatpush.bf16.msra.mxu0 0
      %952 = vmatpush.bf16.msra.mxu0 0
      %953 = vmatpush.bf16.msra.mxu0 0
      %954 = vmatpush.bf16.msra.mxu0 0
      %955 = vmatpush.bf16.msra.mxu0 0
      %956 = vmatpush.bf16.msra.mxu0 0
      %957 = vmatpush.bf16.msra.mxu0 %v948
      %958 = vmatmul.bf16.gmra.mxu0 %v727
      %v959 = vpop.f32.mrf.mxu0
      %v960 = vadd.f32 0.0, %v959
      %v961 = vpop.f32.mrf.mxu0
      %v962 = vadd.f32 0.0, %v961
      %963 = vmatmul.bf16.gmra.mxu0 %v730
      %v964 = vpop.f32.mrf.mxu0
      %v965 = vadd.f32 0.0, %v964
      %v966 = vpop.f32.mrf.mxu0
      %v967 = vadd.f32 0.0, %v966
      %968 = vdwg.mxu0
      %s969 = scalar_lea.vmem %s5, 1
      %v970 = vld [vmem:[%s969] sm:$0x1]
      %v972 = vperm.slane %v970, 0
      %v974 = vmul.f32 %v960, %v972
      %v975 = vmul.f32 %v962, %v972
      %v976 = vmul.f32 %v965, %v972
      %v977 = vmul.f32 %v967, %v972
      %s978 = scalar_lea.vmem %s6, 1
      %v979 = vld [vmem:[%s978] sm:$0x1]
      %v981 = vperm.slane %v979, 0
      %v983 = vadd.f32 %v974, %v981
      %v984 = vadd.f32 %v975, %v981
      %v985 = vadd.f32 %v976, %v981
      %v986 = vadd.f32 %v977, %v981
      %vm987 = vcmp.ge.f32.partialorder %v983, 0.0
      %vm988 = vcmp.ge.f32.partialorder %v984, 0.0
      %vm989 = vcmp.ge.f32.partialorder %v985, 0.0
      %vm990 = vcmp.ge.f32.partialorder %v986, 0.0
      %v991 = vmul.f32 %v983, 0.2
      %v992 = vmul.f32 %v984, 0.2
      %v993 = vmul.f32 %v985, 0.2
      %v994 = vmul.f32 %v986, 0.2
      %v995 = vsel %vm987, %v983, %v991
      %v996 = vsel %vm988, %v984, %v992
      %v997 = vsel %vm989, %v985, %v993
      %v998 = vsel %vm990, %v986, %v994
      %vm1003 = vcmask 1045504
      %v1004 = vrot.slane %v995, 2
      %v1005 = vrot.slane %v996, 2
      %v1006 = vsel %vm1003, %v1004, %v1005
      %v1007 = vrot.slane %v997, 2
      %v1008 = vsel %vm1003, %v1005, %v1007
      %v1009 = vrot.slane %v998, 2
      %v1010 = vsel %vm1003, %v1007, %v1009
      %v1016 = vsel %vm1003, 0.0, %v1004
      %v1017 = vsel %vm1003, %v1009, 0.0
      %v1018 = vpack.c.bf16 %v1006, %v1016
      %v1019 = vpack.c.bf16 %v1010, %v1008
      %s1020 = scalar_lea.vmem %s7, 4
      %v1021 = vld [vmem:[%s1020] sm:$0x1]
      %v1022 = vpack.c.bf16 %v1017, %v1017
      %s1023 = scalar_lea.vmem %s7, 5
      %v1024 = vld [vmem:[%s1023] sm:$0x1]
      %v1028 = vrot.slane %v1018, 2
      %v1029 = vrot.slane %v1019, 2
      %v1030 = vsel %vm656, %v1028, %v1029
      %v1031 = vrot.slane %v1022, 2
      %v1032 = vsel %vm656, %v1029, %v1031
      %v1034 = vsel %vm488, %v1030, 0
      %v1037 = vsel %vm488, %v1032, 0
      %v1040 = vand.u32 %v1024, %v497
      %1042 = vmatpush.bf16.msra.mxu0 0
      %1043 = vmatpush.bf16.msra.mxu0 0
      %1044 = vmatpush.bf16.msra.mxu0 0
      %1045 = vmatpush.bf16.msra.mxu0 0
      %1046 = vmatpush.bf16.msra.mxu0 0
      %1047 = vmatpush.bf16.msra.mxu0 0
      %1048 = vmatpush.bf16.msra.mxu0 0
      %1049 = vmatpush.bf16.msra.mxu0 %v1040
      %1050 = vmatmul.bf16.gmra.mxu0 %v1034
      %v1051 = vpop.f32.mrf.mxu0
      %v1052 = vadd.f32 0.0, %v1051
      %v1053 = vpop.f32.mrf.mxu0
      %v1054 = vadd.f32 0.0, %v1053
      %1055 = vmatmul.bf16.gmra.mxu0 %v1037
      %v1056 = vpop.f32.mrf.mxu0
      %v1057 = vadd.f32 0.0, %v1056
      %v1058 = vpop.f32.mrf.mxu0
      %v1059 = vadd.f32 0.0, %v1058
      %1060 = vdwg.mxu0
      %v1062 = vsel %vm488, %v1018, 0
      %v1065 = vsel %vm488, %v1019, 0
      %v1068 = vand.u32 %v1021, %v497
      %1070 = vmatpush.bf16.msra.mxu0 0
      %1071 = vmatpush.bf16.msra.mxu0 0
      %1072 = vmatpush.bf16.msra.mxu0 0
      %1073 = vmatpush.bf16.msra.mxu0 0
      %1074 = vmatpush.bf16.msra.mxu0 0
      %1075 = vmatpush.bf16.msra.mxu0 0
      %1076 = vmatpush.bf16.msra.mxu0 0
      %1077 = vmatpush.bf16.msra.mxu0 %v1068
      %1078 = vmatmul.bf16.gmra.mxu0 %v1062
      %v1079 = vpop.f32.mrf.mxu0
      %v1080 = vadd.f32 %v1052, %v1079
      %v1081 = vpop.f32.mrf.mxu0
      %v1082 = vadd.f32 %v1054, %v1081
      %1083 = vmatmul.bf16.gmra.mxu0 %v1065
      %v1084 = vpop.f32.mrf.mxu0
      %v1085 = vadd.f32 %v1057, %v1084
      %v1086 = vpop.f32.mrf.mxu0
      %v1087 = vadd.f32 %v1059, %v1086
      %1088 = vdwg.mxu0
      %v1089 = vpack.c.bf16 %v1008, %v1006
      %v1090 = vpack.c.bf16 %v1017, %v1010
      %s1091 = scalar_lea.vmem %s7, 6
      %v1092 = vld [vmem:[%s1091] sm:$0x1]
      %v1094 = vsel %vm488, %v1089, 0
      %v1097 = vsel %vm488, %v1090, 0
      %v1100 = vand.u32 %v1092, %v497
      %1102 = vmatpush.bf16.msra.mxu0 0
      %1103 = vmatpush.bf16.msra.mxu0 0
      %1104 = vmatpush.bf16.msra.mxu0 0
      %1105 = vmatpush.bf16.msra.mxu0 0
      %1106 = vmatpush.bf16.msra.mxu0 0
      %1107 = vmatpush.bf16.msra.mxu0 0
      %1108 = vmatpush.bf16.msra.mxu0 0
      %1109 = vmatpush.bf16.msra.mxu0 %v1100
      %1110 = vmatmul.bf16.gmra.mxu0 %v1094
      %v1111 = vpop.f32.mrf.mxu0
      %v1112 = vadd.f32 0.0, %v1111
      %v1113 = vpop.f32.mrf.mxu0
      %v1114 = vadd.f32 0.0, %v1113
      %1115 = vmatmul.bf16.gmra.mxu0 %v1097
      %v1116 = vpop.f32.mrf.mxu0
      %v1117 = vadd.f32 0.0, %v1116
      %v1118 = vpop.f32.mrf.mxu0
      %v1119 = vadd.f32 0.0, %v1118
      %1120 = vdwg.mxu0
      %v1121 = vadd.f32 %v1080, %v1112
      %v1122 = vadd.f32 %v1082, %v1114
      %v1123 = vadd.f32 %v1085, %v1117
      %v1124 = vadd.f32 %v1087, %v1119
      %v1125 = vpack.c.bf16 0.0, 0.0
      %s1126 = scalar_lea.vmem %s7, 7
      %v1127 = vld [vmem:[%s1126] sm:$0x1]
      %v1131 = vrot.slane %v1089, 2
      %v1132 = vrot.slane %v1090, 2
      %v1133 = vsel %vm656, %v1131, %v1132
      %v1134 = vrot.slane %v1125, 2
      %v1135 = vsel %vm656, %v1132, %v1134
      %v1137 = vsel %vm488, %v1133, 0
      %v1140 = vsel %vm488, %v1135, 0
      %v1143 = vand.u32 %v1127, %v497
      %1145 = vmatpush.bf16.msra.mxu0 0
      %1146 = vmatpush.bf16.msra.mxu0 0
      %1147 = vmatpush.bf16.msra.mxu0 0
      %1148 = vmatpush.bf16.msra.mxu0 0
      %1149 = vmatpush.bf16.msra.mxu0 0
      %1150 = vmatpush.bf16.msra.mxu0 0
      %1151 = vmatpush.bf16.msra.mxu0 0
      %1152 = vmatpush.bf16.msra.mxu0 %v1143
      %1153 = vmatmul.bf16.gmra.mxu0 %v1137
      %v1154 = vpop.f32.mrf.mxu0
      %v1155 = vadd.f32 0.0, %v1154
      %v1156 = vpop.f32.mrf.mxu0
      %v1157 = vadd.f32 0.0, %v1156
      %1158 = vmatmul.bf16.gmra.mxu0 %v1140
      %v1159 = vpop.f32.mrf.mxu0
      %v1160 = vadd.f32 0.0, %v1159
      %v1161 = vpop.f32.mrf.mxu0
      %v1162 = vadd.f32 0.0, %v1161
      %1163 = vdwg.mxu0
      %v1164 = vadd.f32 %v1121, %v1155
      %v1165 = vadd.f32 %v1122, %v1157
      %v1166 = vadd.f32 %v1123, %v1160
      %v1167 = vadd.f32 %v1124, %v1162
      %s1168 = scalar_lea.vmem %s8, 1
      %v1169 = vld [vmem:[%s1168] sm:$0x1]
      %v1171 = vperm.slane %v1169, 0
      %v1173 = vmul.f32 %v1164, %v1171
      %v1174 = vmul.f32 %v1165, %v1171
      %v1175 = vmul.f32 %v1166, %v1171
      %v1176 = vmul.f32 %v1167, %v1171
      %s1177 = scalar_lea.vmem %s9, 1
      %v1178 = vld [vmem:[%s1177] sm:$0x1]
      %v1180 = vperm.slane %v1178, 0
      %v1182 = vadd.f32 %v1173, %v1180
      %v1183 = vadd.f32 %v1174, %v1180
      %v1184 = vadd.f32 %v1175, %v1180
      %v1185 = vadd.f32 %v1176, %v1180
      %s1186 = scalar_lea.vmem %s4, 4
      %v1187 = vld [vmem:[%s1186] sm:$0x3]
      %v1189 = vsel %vm732, %v1187, 0
      %1191 = vmatpush.bf16.msra.mxu0 0
      %1192 = vmatpush.bf16.msra.mxu0 0
      %1193 = vmatpush.bf16.msra.mxu0 0
      %1194 = vmatpush.bf16.msra.mxu0 0
      %1195 = vmatpush.bf16.msra.mxu0 0
      %1196 = vmatpush.bf16.msra.mxu0 0
      %1197 = vmatpush.bf16.msra.mxu0 0
      %1198 = vmatpush.bf16.msra.mxu0 %v1189
      %1199 = vmatmul.bf16.gmra.mxu0 %v727
      %v1200 = vpop.f32.mrf.mxu0
      %v1201 = vadd.f32 0.0, %v1200
      %v1202 = vpop.f32.mrf.mxu0
      %v1203 = vadd.f32 0.0, %v1202
      %1204 = vmatmul.bf16.gmra.mxu0 %v730
      %v1205 = vpop.f32.mrf.mxu0
      %v1206 = vadd.f32 0.0, %v1205
      %v1207 = vpop.f32.mrf.mxu0
      %v1208 = vadd.f32 0.0, %v1207
      %1209 = vdwg.mxu0
      %s1210 = scalar_lea.vmem %s5, 2
      %v1211 = vld [vmem:[%s1210] sm:$0x1]
      %v1213 = vperm.slane %v1211, 0
      %v1215 = vmul.f32 %v1201, %v1213
      %v1216 = vmul.f32 %v1203, %v1213
      %v1217 = vmul.f32 %v1206, %v1213
      %v1218 = vmul.f32 %v1208, %v1213
      %s1219 = scalar_lea.vmem %s6, 2
      %v1220 = vld [vmem:[%s1219] sm:$0x1]
      %v1222 = vperm.slane %v1220, 0
      %v1224 = vadd.f32 %v1215, %v1222
      %v1225 = vadd.f32 %v1216, %v1222
      %v1226 = vadd.f32 %v1217, %v1222
      %v1227 = vadd.f32 %v1218, %v1222
      %vm1228 = vcmp.ge.f32.partialorder %v1224, 0.0
      %vm1229 = vcmp.ge.f32.partialorder %v1225, 0.0
      %vm1230 = vcmp.ge.f32.partialorder %v1226, 0.0
      %vm1231 = vcmp.ge.f32.partialorder %v1227, 0.0
      %v1232 = vmul.f32 %v1224, 0.2
      %v1233 = vmul.f32 %v1225, 0.2
      %v1234 = vmul.f32 %v1226, 0.2
      %v1235 = vmul.f32 %v1227, 0.2
      %v1236 = vsel %vm1228, %v1224, %v1232
      %v1237 = vsel %vm1229, %v1225, %v1233
      %v1238 = vsel %vm1230, %v1226, %v1234
      %v1239 = vsel %vm1231, %v1227, %v1235
      %vm1244 = vcmask 1042432
      %v1245 = vrot.slane %v1236, 5
      %v1246 = vrot.slane %v1237, 5
      %v1247 = vsel %vm1244, %v1245, %v1246
      %v1248 = vrot.slane %v1238, 5
      %v1249 = vsel %vm1244, %v1246, %v1248
      %v1250 = vrot.slane %v1239, 5
      %v1251 = vsel %vm1244, %v1248, %v1250
      %v1257 = vsel %vm1244, 0.0, %v1245
      %v1258 = vsel %vm1244, %v1250, 0.0
      %v1259 = vpack.c.bf16 %v1247, %v1257
      %v1260 = vpack.c.bf16 %v1251, %v1249
      %s1261 = scalar_lea.vmem %s7, 8
      %v1262 = vld [vmem:[%s1261] sm:$0x1]
      %v1263 = vpack.c.bf16 %v1258, %v1258
      %s1264 = scalar_lea.vmem %s7, 9
      %v1265 = vld [vmem:[%s1264] sm:$0x1]
      %v1269 = vrot.slane %v1259, 1
      %v1270 = vrot.slane %v1260, 1
      %v1271 = vsel %vm552, %v1269, %v1270
      %v1272 = vrot.slane %v1263, 1
      %v1273 = vsel %vm552, %v1270, %v1272
      %v1275 = vsel %vm488, %v1271, 0
      %v1278 = vsel %vm488, %v1273, 0
      %v1281 = vand.u32 %v1265, %v497
      %1283 = vmatpush.bf16.msra.mxu0 0
      %1284 = vmatpush.bf16.msra.mxu0 0
      %1285 = vmatpush.bf16.msra.mxu0 0
      %1286 = vmatpush.bf16.msra.mxu0 0
      %1287 = vmatpush.bf16.msra.mxu0 0
      %1288 = vmatpush.bf16.msra.mxu0 0
      %1289 = vmatpush.bf16.msra.mxu0 0
      %1290 = vmatpush.bf16.msra.mxu0 %v1281
      %1291 = vmatmul.bf16.gmra.mxu0 %v1275
      %v1292 = vpop.f32.mrf.mxu0
      %v1293 = vadd.f32 0.0, %v1292
      %v1294 = vpop.f32.mrf.mxu0
      %v1295 = vadd.f32 0.0, %v1294
      %1296 = vmatmul.bf16.gmra.mxu0 %v1278
      %v1297 = vpop.f32.mrf.mxu0
      %v1298 = vadd.f32 0.0, %v1297
      %v1299 = vpop.f32.mrf.mxu0
      %v1300 = vadd.f32 0.0, %v1299
      %1301 = vdwg.mxu0
      %v1303 = vsel %vm488, %v1259, 0
      %v1306 = vsel %vm488, %v1260, 0
      %v1309 = vand.u32 %v1262, %v497
      %1311 = vmatpush.bf16.msra.mxu0 0
      %1312 = vmatpush.bf16.msra.mxu0 0
      %1313 = vmatpush.bf16.msra.mxu0 0
      %1314 = vmatpush.bf16.msra.mxu0 0
      %1315 = vmatpush.bf16.msra.mxu0 0
      %1316 = vmatpush.bf16.msra.mxu0 0
      %1317 = vmatpush.bf16.msra.mxu0 0
      %1318 = vmatpush.bf16.msra.mxu0 %v1309
      %1319 = vmatmul.bf16.gmra.mxu0 %v1303
      %v1320 = vpop.f32.mrf.mxu0
      %v1321 = vadd.f32 %v1293, %v1320
      %v1322 = vpop.f32.mrf.mxu0
      %v1323 = vadd.f32 %v1295, %v1322
      %1324 = vmatmul.bf16.gmra.mxu0 %v1306
      %v1325 = vpop.f32.mrf.mxu0
      %v1326 = vadd.f32 %v1298, %v1325
      %v1327 = vpop.f32.mrf.mxu0
      %v1328 = vadd.f32 %v1300, %v1327
      %1329 = vdwg.mxu0
      %s1330 = scalar_lea.vmem %s7, 10
      %v1331 = vld [vmem:[%s1330] sm:$0x1]
      %v1332 = vrot.slane %v1259, 2
      %v1333 = vrot.slane %v1260, 2
      %v1334 = vsel %vm656, %v1332, %v1333
      %v1335 = vrot.slane %v1263, 2
      %v1336 = vsel %vm656, %v1333, %v1335
      %v1338 = vsel %vm488, %v1334, 0
      %v1341 = vsel %vm488, %v1336, 0
      %v1344 = vand.u32 %v1331, %v497
      %1346 = vmatpush.bf16.msra.mxu0 0
      %1347 = vmatpush.bf16.msra.mxu0 0
      %1348 = vmatpush.bf16.msra.mxu0 0
      %1349 = vmatpush.bf16.msra.mxu0 0
      %1350 = vmatpush.bf16.msra.mxu0 0
      %1351 = vmatpush.bf16.msra.mxu0 0
      %1352 = vmatpush.bf16.msra.mxu0 0
      %1353 = vmatpush.bf16.msra.mxu0 %v1344
      %1354 = vmatmul.bf16.gmra.mxu0 %v1338
      %v1355 = vpop.f32.mrf.mxu0
      %v1356 = vadd.f32 0.0, %v1355
      %v1357 = vpop.f32.mrf.mxu0
      %v1358 = vadd.f32 0.0, %v1357
      %1359 = vmatmul.bf16.gmra.mxu0 %v1341
      %v1360 = vpop.f32.mrf.mxu0
      %v1361 = vadd.f32 0.0, %v1360
      %v1362 = vpop.f32.mrf.mxu0
      %v1363 = vadd.f32 0.0, %v1362
      %1364 = vdwg.mxu0
      %v1365 = vadd.f32 %v1321, %v1356
      %v1366 = vadd.f32 %v1323, %v1358
      %v1367 = vadd.f32 %v1326, %v1361
      %v1368 = vadd.f32 %v1328, %v1363
      %s1369 = scalar_lea.vmem %s7, 11
      %v1370 = vld [vmem:[%s1369] sm:$0x1]
      %vm1371 = vcmask 1044480
      %v1372 = vrot.slane %v1259, 3
      %v1373 = vrot.slane %v1260, 3
      %v1374 = vsel %vm1371, %v1372, %v1373
      %v1375 = vrot.slane %v1263, 3
      %v1376 = vsel %vm1371, %v1373, %v1375
      %v1378 = vsel %vm488, %v1374, 0
      %v1381 = vsel %vm488, %v1376, 0
      %v1384 = vand.u32 %v1370, %v497
      %1386 = vmatpush.bf16.msra.mxu0 0
      %1387 = vmatpush.bf16.msra.mxu0 0
      %1388 = vmatpush.bf16.msra.mxu0 0
      %1389 = vmatpush.bf16.msra.mxu0 0
      %1390 = vmatpush.bf16.msra.mxu0 0
      %1391 = vmatpush.bf16.msra.mxu0 0
      %1392 = vmatpush.bf16.msra.mxu0 0
      %1393 = vmatpush.bf16.msra.mxu0 %v1384
      %1394 = vmatmul.bf16.gmra.mxu0 %v1378
      %v1395 = vpop.f32.mrf.mxu0
      %v1396 = vadd.f32 0.0, %v1395
      %v1397 = vpop.f32.mrf.mxu0
      %v1398 = vadd.f32 0.0, %v1397
      %1399 = vmatmul.bf16.gmra.mxu0 %v1381
      %v1400 = vpop.f32.mrf.mxu0
      %v1401 = vadd.f32 0.0, %v1400
      %v1402 = vpop.f32.mrf.mxu0
      %v1403 = vadd.f32 0.0, %v1402
      %1404 = vdwg.mxu0
      %v1405 = vadd.f32 %v1365, %v1396
      %v1406 = vadd.f32 %v1366, %v1398
      %v1407 = vadd.f32 %v1367, %v1401
      %v1408 = vadd.f32 %v1368, %v1403
      %s1409 = scalar_lea.vmem %s8, 2
      %v1410 = vld [vmem:[%s1409] sm:$0x1]
      %v1412 = vperm.slane %v1410, 0
      %v1414 = vmul.f32 %v1405, %v1412
      %v1415 = vmul.f32 %v1406, %v1412
      %v1416 = vmul.f32 %v1407, %v1412
      %v1417 = vmul.f32 %v1408, %v1412
      %s1418 = scalar_lea.vmem %s9, 2
      %v1419 = vld [vmem:[%s1418] sm:$0x1]
      %v1421 = vperm.slane %v1419, 0
      %v1423 = vadd.f32 %v1414, %v1421
      %v1424 = vadd.f32 %v1415, %v1421
      %v1425 = vadd.f32 %v1416, %v1421
      %v1426 = vadd.f32 %v1417, %v1421
      %v1427 = vld [vmem:[%s10] sm:$0x3]
      %v1429 = vsel %vm732, %v1427, 0
      %1431 = vmatpush.bf16.msra.mxu0 0
      %1432 = vmatpush.bf16.msra.mxu0 0
      %1433 = vmatpush.bf16.msra.mxu0 0
      %1434 = vmatpush.bf16.msra.mxu0 0
      %1435 = vmatpush.bf16.msra.mxu0 0
      %1436 = vmatpush.bf16.msra.mxu0 0
      %1437 = vmatpush.bf16.msra.mxu0 0
      %1438 = vmatpush.bf16.msra.mxu0 %v1429
      %1439 = vmatmul.bf16.gmra.mxu0 %v727
      %v1440 = vpop.f32.mrf.mxu0
      %v1441 = vadd.f32 0.0, %v1440
      %v1442 = vpop.f32.mrf.mxu0
      %v1443 = vadd.f32 0.0, %v1442
      %1444 = vmatmul.bf16.gmra.mxu0 %v730
      %v1445 = vpop.f32.mrf.mxu0
      %v1446 = vadd.f32 0.0, %v1445
      %v1447 = vpop.f32.mrf.mxu0
      %v1448 = vadd.f32 0.0, %v1447
      %1449 = vdwg.mxu0
      %v1450 = vld [vmem:[#allocation2] sm:$0x1]
      %v1452 = vperm.slane %v1450, 0
      %v1454 = vmul.f32 %v1441, %v1452
      %v1455 = vmul.f32 %v1443, %v1452
      %v1456 = vmul.f32 %v1446, %v1452
      %v1457 = vmul.f32 %v1448, %v1452
      %v1458 = vld [vmem:[#allocation3] sm:$0x1]
      %v1460 = vperm.slane %v1458, 0
      %v1462 = vadd.f32 %v1454, %v1460
      %v1463 = vadd.f32 %v1455, %v1460
      %v1464 = vadd.f32 %v1456, %v1460
      %v1465 = vadd.f32 %v1457, %v1460
      %1470 = vrot.lane.b32.xlu0 %v1182, 1
      %v1471 = vpop.permute.xlu0 %1470
      %1472 = vrot.lane.b32.xlu0 %v1183, 1
      %v1473 = vpop.permute.xlu0 %1472
      %1474 = vrot.lane.b32.xlu0 %v1184, 1
      %v1475 = vpop.permute.xlu0 %1474
      %1476 = vrot.lane.b32.xlu0 %v1185, 1
      %v1477 = vpop.permute.xlu0 %1476
      %1486 = vrot.lane.b32.xlu0 %v1423, 2
      %v1487 = vpop.permute.xlu0 %1486
      %1488 = vrot.lane.b32.xlu0 %v1424, 2
      %v1489 = vpop.permute.xlu0 %1488
      %1490 = vrot.lane.b32.xlu0 %v1425, 2
      %v1491 = vpop.permute.xlu0 %1490
      %1492 = vrot.lane.b32.xlu0 %v1426, 2
      %v1493 = vpop.permute.xlu0 %1492
      %1502 = vrot.lane.b32.xlu0 %v1462, 3
      %v1503 = vpop.permute.xlu0 %1502
      %1504 = vrot.lane.b32.xlu0 %v1463, 3
      %v1505 = vpop.permute.xlu0 %1504
      %1506 = vrot.lane.b32.xlu0 %v1464, 3
      %v1507 = vpop.permute.xlu0 %1506
      %1508 = vrot.lane.b32.xlu0 %v1465, 3
      %v1509 = vpop.permute.xlu0 %1508
      %v1514 = vsel %vm488, %v941, %v1471
      %v1515 = vsel %vm488, %v942, %v1473
      %v1516 = vsel %vm488, %v943, %v1475
      %v1517 = vsel %vm488, %v944, %v1477
      %vm1518 = vcmask 15360
      %v1519 = vsel %vm1518, %v1514, %v1487
      %v1520 = vsel %vm1518, %v1515, %v1489
      %v1521 = vsel %vm1518, %v1516, %v1491
      %v1522 = vsel %vm1518, %v1517, %v1493
      %vm1523 = vcmask 23552
      %v1524 = vsel %vm1523, %v1519, %v1503
      %v1525 = vsel %vm1523, %v1520, %v1505
      %v1526 = vsel %vm1523, %v1521, %v1507
      %v1527 = vsel %vm1523, %v1522, %v1509
      %v1528 = vadd.f32 %v1524, %v718
      %v1529 = vadd.f32 %v1525, %v719
      %v1530 = vadd.f32 %v1526, %v720
      %v1531 = vadd.f32 %v1527, %v721
      %vm1532 = vcmp.ge.f32.partialorder %v1528, 0.0
      %vm1533 = vcmp.ge.f32.partialorder %v1529, 0.0
      %vm1534 = vcmp.ge.f32.partialorder %v1530, 0.0
      %vm1535 = vcmp.ge.f32.partialorder %v1531, 0.0
      %v1536 = vmul.f32 %v1528, 0.2
      %v1537 = vmul.f32 %v1529, 0.2
      %v1538 = vmul.f32 %v1530, 0.2
      %v1539 = vmul.f32 %v1531, 0.2
      %v1540 = vsel %vm1532, %v1528, %v1536
      %v1541 = vsel %vm1533, %v1529, %v1537
      %v1542 = vsel %vm1534, %v1530, %v1538
      %v1543 = vsel %vm1535, %v1531, %v1539
      %v1544 = vpack.c.bf16 %v1540, %v1540
      %v1545 = vpack.c.bf16 %v1541, %v1541
      %v1546 = vpack.c.bf16 %v1542, %v1542
      %v1547 = vpack.c.bf16 %v1543, %v1543
      %vm1548 = vcmask 27648
      %1549 = vst.msk [vmem:[%s444] sm:$0xf] %vm1548, %v1544
      %1550 = vst.msk [vmem:[%s444 + $0x4] sm:$0xf] %vm1548, %v1545
      %1551 = vst.msk [vmem:[%s444 + $0x8] sm:$0xf] %vm1548, %v1546
      %1552 = vst.msk [vmem:[%s444 + $0xc] sm:$0xf] %vm1548, %v1547
      %p1553 = scmp.lt.s32.totalorder %s28, 1
      %s1554 = scalar_select %p1553, %s28, 1
      %s1555 = smul.addr %s1554, 4
      %s1556 = smul.addr %s1555, 4
      %s1557 = scalar_lea.vmem %s13, %s1556
      // Predicated region
      $region73: #{_lambda_.4} parent=71 // pred_check
        %p1558 = pneg %p324
      $region74: #{_lambda_.4} parent=71 // pred_check_branch
        %1560 = sbr.rel (%p1558) target = $region76
      $region75: #{_lambda_.4} parent=71 // pred_region
        _
      $region76: #{_lambda_.4} parent=71 // pred_fallthru
        _
    $region72: #{_lambda_.4} parent=5 // pred_fallthru
      _
    %p1561 = scmp.le.s32.totalorder 2, %s23
    // Predicated region
    $region77: #{_lambda_.4} parent=5 // pred_check
      %p1562 = pneg %p1561
    $region78: #{_lambda_.4} parent=5 // pred_check_branch
      %1564 = sbr.rel (%p1562) target = $region80
    $region79: #{_lambda_.4} parent=5 // pred_region
      %s1565 = ssub.s32 %s23, 2
      // Predicated region
      $region81: #{_lambda_.4} parent=79 // pred_check
        %p1566 = pneg %p330
      $region82: #{_lambda_.4} parent=79 // pred_check_branch
        %1568 = sbr.rel (%p1566) target = $region84
      $region83: #{_lambda_.4} parent=79 // pred_region
        %p1569 = scmp.lt.s32.totalorder %s29, 1
        %s1570 = scalar_select %p1569, %s29, 1
        %s1571 = smul.addr %s1570, 4
        %s1572 = smul.addr %s1571, 4
        %s1573 = scalar_lea.vmem %s13, %s1572
      $region84: #{_lambda_.4} parent=79 // pred_fallthru
        _
    $region80: #{_lambda_.4} parent=5 // pred_fallthru
      _
  $region6: #{_lambda_.4} parent=0 // loop_footer
    %s27 = sadd.s32 1, %s23
  $region7: #{_lambda_.4} parent=0 // loop_footer_branch
    %22 = sbr.rel target = $region3
  $region8: #{_lambda_.4} parent=0 // loop_exit
    _

</llo_original>
